<compile_context>
chip_gen: v6e
topology: v6e:2x2x1
jax: 0.10.0
libtpu: 0.0.40
codegen_flags: <defaults>
</compile_context>

<pallas_src>
import functools
import math

import jax
import jax.numpy as jnp
from jax import lax
from jax.experimental import pallas as pl
from jax.experimental.pallas import tpu as pltpu


def _leaky_relu(x, slope=0.2):
    return jnp.where(x >= 0, x, slope * x)


def _layer_compute(nf, ef, S, Dm, prefs, H, Dh):
    """One HGNNLayer forward on values already resident in VMEM.

    All matmuls use bf16 operands with f32 accumulation.  NOTE: the softmax exponentials and
    weighted messages are truncated to bf16 by the incidence contractions (~1e-3 rel. error vs
    the f32 PyTorch reference); keep them f32 if bit-level agreement is required.
    """
    (w_n2n_r, w_e2n_r, attn_pair_r, w_un_pair_r, w_gru_pair_r,
     w_n2e_r, w_e2e_r, w_ue_pair_r, head_bias_r, gru_bias_r, edge_bias_r) = prefs
    f32, bf16 = jnp.float32, jnp.bfloat16
    HD = H * Dh

    def bdot(a, b):  # bf16 operands, f32 accumulation (native MXU bf16 path)
        return jnp.dot(a.astype(bf16), b.astype(bf16), preferred_element_type=f32)

    def scat(x):     # destination scatter-sum: contract Dm's edge axis (no transposed copy)
        return lax.dot_general(Dm, x.astype(bf16),
                               dimension_numbers=(((0,), (0,)), ((), ())),
                               preferred_element_type=f32)

    # ----- unpack packed parameter slabs (static ref slices: zero runtime cost) -----
    w_n2n = w_n2n_r[...]
    w_e2n = w_e2n_r[...]
    attn_n2n_blk = attn_pair_r[0:HD, :]          # (HD, HD) attention-vec * head->lane broadcast
    attn_e2n_blk = attn_pair_r[HD:2 * HD, :]
    w_un_a = w_un_pair_r[0:HD, :]                # (HD, HD) block-diag replicated update_node
    w_un_b = w_un_pair_r[HD:2 * HD, :]
    w_ih = w_gru_pair_r[0:Dh, :]                 # (Dh, 3Dh) GRU input weights  (r|z|n)
    w_hh = w_gru_pair_r[Dh:2 * Dh, :]            # (Dh, 3Dh) GRU hidden weights (r|z|n)
    w_n2e = w_n2e_r[...]
    w_e2e = w_e2e_r[...]
    w_ue_a = w_ue_pair_r[0:Dh, :]
    w_ue_b = w_ue_pair_r[Dh:2 * Dh, :]
    b_n2n = head_bias_r[0:1, :]                  # (1, HD)
    b_e2n = head_bias_r[1:2, :]
    b_un = head_bias_r[2:3, :]
    b_ih = gru_bias_r[0:1, :]                    # (1, 3Dh)
    b_hh = gru_bias_r[1:2, :]
    b_n2e = edge_bias_r[0:1, :]                  # (1, Dh)
    b_e2e = edge_bias_r[1:2, :]
    b_ue = edge_bias_r[2:3, :]

    # ----- shared projections (feat_dropout p=0 -> identity) -----
    feat_src = bdot(nf, w_n2n) + b_n2n           # (N, HD)
    feat_e = bdot(ef, w_e2n) + b_e2n             # (E, HD)

    # ----- gather node projections onto edges once for all heads -----
    src_all = bdot(S, feat_src)                  # (E, HD)  Wh of src node per edge
    dst_all = bdot(Dm, feat_src)                 # (E, HD)  Wh of dst node per edge

    def gat_branch(pre, attn_blk, values):
        # Per-head logits already broadcast over each head's Dh lanes: one lane-dense matmul.
        logits = _leaky_relu(bdot(pre, attn_blk))                   # (E, HD)
        # per-column global max subtraction: exact for per-destination softmax, avoids exp overflow
        logits = logits - jnp.max(logits, axis=0, keepdims=True)
        e_exp = jnp.exp(logits)                                     # (E, HD)
        denom = bdot(Dm, scat(e_exp))                               # (E, HD) sum over edges -> dst
        alpha = e_exp * pl.reciprocal(jnp.maximum(denom, 1e-30), approx=True)
        return scat(values * alpha)                                 # (N, HD)

    agg_n = gat_branch(src_all + dst_all, attn_n2n_blk, src_all)    # node_gat
    agg_e = gat_branch(src_all + feat_e, attn_e2n_blk, feat_e)      # edge_gat

    # ----- residual + relu, then update_node (two lane-dense block matmuls, no 2HD concat) -----
    node_node = jnp.maximum(agg_n + feat_src, 0.0)
    edge_node = jnp.maximum(agg_e + feat_src, 0.0)
    upd = jnp.maximum(bdot(node_node, w_un_a) + bdot(edge_node, w_un_b) + b_un, 0.0)  # (N, HD)

    # ----- mpnn: per-head mean on the VPU, then one GRU step (seq_len=1, batch=N) -----
    def head_mean(v):
        acc = v[:, 0:Dh]
        for h in range(1, H):
            acc = acc + v[:, h * Dh:(h + 1) * Dh]
        return acc * (1.0 / H)

    x = head_mean(upd)                            # (N, Dh)  GRU input
    h0 = head_mean(feat_src)                      # (N, Dh)  GRU initial hidden
    gi = bdot(x, w_ih) + b_ih                     # (N, 3Dh) input gates  r|z|n
    gh = bdot(h0, w_hh) + b_hh                    # (N, 3Dh) hidden gates r|z|n
    r = jax.nn.sigmoid(gi[:, 0:Dh] + gh[:, 0:Dh])
    z = jax.nn.sigmoid(gi[:, Dh:2 * Dh] + gh[:, Dh:2 * Dh])
    n = jnp.tanh(gi[:, 2 * Dh:3 * Dh] + r * gh[:, 2 * Dh:3 * Dh])
    node_out = (1.0 - z) * n + z * h0             # (N, Dh)

    # ----- weave: edge update (u_add_v as two gathers; S + Dm never materialized) -----
    h_n2e = jnp.maximum(bdot(nf, w_n2e) + b_n2e, 0.0)              # (N, hid)
    node_edge = bdot(S, h_n2e) + bdot(Dm, h_n2e)                   # (E, hid) h_n2e[src]+h_n2e[dst]
    edge_edge = jnp.maximum(bdot(ef, w_e2e) + b_e2e, 0.0)
    edge_out = jnp.maximum(
        bdot(node_edge, w_ue_a) + bdot(edge_edge, w_ue_b) + b_ue, 0.0)   # (E, hid)
    return node_out, edge_out


def hgnn_stack_kernel(*refs, n_layers, n_heads, hidden, n_per_layer):
    nf_ref, ef_ref, s_ref, d_ref = refs[:4]
    node_out_ref, edge_out_ref = refs[-2:]
    param_refs = refs[4:-2]

    S = s_ref[...]            # (E, N) bf16 src one-hot
    Dm = d_ref[...]           # (E, N) bf16 dst one-hot

    nf = nf_ref[...]
    ef = ef_ref[...]
    for l in range(n_layers):   # static unroll; layer intermediates never leave VMEM
        prefs = param_refs[l * n_per_layer:(l + 1) * n_per_layer]
        nf, ef = _layer_compute(nf, ef, S, Dm, prefs, n_heads, hidden)
    node_out_ref[...] = nf
    edge_out_ref[...] = ef


def _vmem_capacity_bytes():
    # generation-aware budget (v5e/v6e: 128 MiB, v7x: 64 MiB per TensorCore)
    try:
        return int(pltpu.get_tpu_info().vmem_capacity_bytes)
    except Exception:
        return 64 * 2 ** 20


def _pick_vmem_limit(args, out_shapes, N, E, HD):
    arg_bytes = sum(int(a.size) * a.dtype.itemsize for a in args)
    out_bytes = sum(math.prod(o.shape) * 4 for o in out_shapes)
    # peak live f32 intermediates per layer: ~10 edge-sized + ~8 node-sized HD-wide tensors
    inter_bytes = (10 * E + 8 * N) * HD * 4
    want = 2 * (arg_bytes + out_bytes + inter_bytes)
    cap = _vmem_capacity_bytes()
    return int(min(int(cap * 3 // 4), max(32 * 2 ** 20, want)))


def hgnn_forward(node_feats, edge_feats, src_oh, dst_oh, layer_params, *, n_heads, hidden):
    """Run the full HGNNLayer stack in one pallas_call."""
    N, E = node_feats.shape[0], edge_feats.shape[0]
    HD = n_heads * hidden

    flat = []
    for p in layer_params:
        flat.extend(p)
    n_per_layer = len(layer_params[0])
    args = (node_feats.astype(jnp.float32), edge_feats.astype(jnp.float32),
            src_oh.astype(jnp.bfloat16), dst_oh.astype(jnp.bfloat16)) + tuple(flat)

    out_shape = (jax.ShapeDtypeStruct((N, hidden), jnp.float32),
                 jax.ShapeDtypeStruct((E, hidden), jnp.float32))
    vmem_limit = _pick_vmem_limit(args, out_shape, N, E, HD)

    vmem = pl.BlockSpec(memory_space=pltpu.MemorySpace.VMEM)
    kernel = functools.partial(hgnn_stack_kernel, n_layers=len(layer_params),
                               n_heads=n_heads, hidden=hidden, n_per_layer=n_per_layer)
    return pl.pallas_call(
        kernel,
        out_shape=out_shape,
        in_specs=[vmem] * len(args),
        out_specs=(vmem, vmem),
        compiler_params=pltpu.CompilerParams(vmem_limit_bytes=vmem_limit),
    )(*args)


# -------------------- deterministic parameter construction (synthetic) --------------------

def _init_linear(key, n_in, n_out):
    # mimics nn.Linear default init (uniform +-1/sqrt(fan_in)); weight passed transposed (in, out)
    kw, kb = jax.random.split(key)
    bound = 1.0 / (n_in ** 0.5)
    w = jax.random.uniform(kw, (n_in, n_out), jnp.float32, -bound, bound)
    b = jax.random.uniform(kb, (1, n_out), jnp.float32, -bound, bound)
    return w, b


def init_layer_params(key, n_node_feats, n_edge_feats, n_heads, hid):
    """Module-style parameters (same layout as the PyTorch HGNNLayer, transposed weights)."""
    ks = jax.random.split(key, 9)
    H = n_heads
    w_n2n, b_n2n = _init_linear(ks[0], n_node_feats, H * hid)
    gain = 2.0 ** 0.5
    std_attn = gain * (2.0 / (H * hid + hid)) ** 0.5          # xavier_normal on (1, H, hid)
    attn_n2n = std_attn * jax.random.normal(ks[1], (H, hid), jnp.float32)
    w_e2n, b_e2n = _init_linear(ks[2], n_edge_feats, H * hid)
    attn_e2n = std_attn * jax.random.normal(ks[3], (H, hid), jnp.float32)

    w_un, b_un = _init_linear(ks[4], 2 * hid, hid)            # update_node

    gb = 1.0 / (hid ** 0.5)                                   # GRU(hid -> hid), gate order r|z|n
    kih, khh, kbi, kbh = jax.random.split(ks[5], 4)
    w_ih = jax.random.uniform(kih, (hid, 3 * hid), jnp.float32, -gb, gb)
    w_hh = jax.random.uniform(khh, (hid, 3 * hid), jnp.float32, -gb, gb)
    b_ih = jax.random.uniform(kbi, (1, 3 * hid), jnp.float32, -gb, gb)
    b_hh = jax.random.uniform(kbh, (1, 3 * hid), jnp.float32, -gb, gb)

    w_n2e, b_n2e = _init_linear(ks[6], n_node_feats, hid)     # node_to_edge
    w_e2e, b_e2e = _init_linear(ks[7], n_edge_feats, hid)     # edge_to_edge
    w_ue, b_ue = _init_linear(ks[8], 2 * hid, hid)            # update_edge

    return (w_n2n, b_n2n, attn_n2n, w_e2n, b_e2n, attn_e2n, w_un, b_un,
            w_ih, w_hh, b_ih, b_hh, w_n2e, b_n2e, w_e2e, b_e2e, w_ue, b_ue)


def pack_layer_params(raw, n_heads, hid):
    """Repack module parameters into 11 lane-dense slabs per layer (weights pre-cast to bf16)."""
    (w_n2n, b_n2n, attn_n2n, w_e2n, b_e2n, attn_e2n, w_un, b_un,
     w_ih, w_hh, b_ih, b_hh, w_n2e, b_n2e, w_e2e, b_e2e, w_ue, b_ue) = raw
    H, Dh = n_heads, hid
    HD = H * Dh
    bf16 = jnp.bfloat16

    def attn_broadcast_block(attn):
        # (H, Dh) -> (HD, HD): folds attention dot-product AND head->lane broadcast into one matmul
        blk = jnp.zeros((HD, HD), jnp.float32)
        for h in range(H):
            blk = blk.at[h * Dh:(h + 1) * Dh, h * Dh:(h + 1) * Dh].set(
                jnp.broadcast_to(attn[h][:, None], (Dh, Dh)))
        return blk

    def replicate_block(w):
        # (Dh, Dh) shared-per-head linear -> block-diagonal (HD, HD)
        blk = jnp.zeros((HD, HD), jnp.float32)
        for h in range(H):
            blk = blk.at[h * Dh:(h + 1) * Dh, h * Dh:(h + 1) * Dh].set(w)
        return blk

    attn_pair = jnp.concatenate([attn_broadcast_block(attn_n2n),
                                 attn_broadcast_block(attn_e2n)], axis=0)     # (2HD, HD)
    w_un_pair = jnp.concatenate([replicate_block(w_un[:hid]),
                                 replicate_block(w_un[hid:])], axis=0)        # (2HD, HD)
    w_gru_pair = jnp.concatenate([w_ih, w_hh], axis=0)                        # (2hid, 3hid)
    w_ue_pair = jnp.concatenate([w_ue[:hid], w_ue[hid:]], axis=0)             # (2hid, hid)

    head_bias = jnp.concatenate([b_n2n, b_e2n, jnp.tile(b_un, (1, H))], axis=0)   # (3, HD) f32
    gru_bias = jnp.concatenate([b_ih, b_hh], axis=0)                              # (2, 3hid) f32
    edge_bias = jnp.concatenate([b_n2e, b_e2e, b_ue], axis=0)                     # (3, hid) f32

    weights = tuple(w.astype(bf16) for w in
                    (w_n2n, w_e2n, attn_pair, w_un_pair, w_gru_pair, w_n2e, w_e2e, w_ue_pair))
    return weights + (head_bias, gru_bias, edge_bias)


if __name__ == "__main__":
    key = jax.random.PRNGKey(0)
    N, E = 8, 16            # nodes, edges
    FN, FE = 4, 4           # input node / edge feature dims
    H, HID = 2, 32          # heads, n_hidden_feats
    NUM_LAYERS = 2

    k_graph, k_nf, k_ef, k_p1, k_p2 = jax.random.split(key, 5)
    k_src, k_dst = jax.random.split(k_graph)
    src = jax.random.randint(k_src, (E,), 0, N)
    dst = jax.random.randint(k_dst, (E,), 0, N)
    src_oh = jax.nn.one_hot(src, N, dtype=jnp.float32)   # (E, N)
    dst_oh = jax.nn.one_hot(dst, N, dtype=jnp.float32)   # (E, N)

    node_feats = jax.random.normal(k_nf, (N, FN), jnp.float32)
    edge_feats = jax.random.normal(k_ef, (E, FE), jnp.float32)

    raw_params = [init_layer_params(k_p1, FN, FE, H, HID),
                  init_layer_params(k_p2, HID, HID, H, HID)]
    layer_params = [pack_layer_params(p, H, HID) for p in raw_params]

    # TODO(synk): feat/attn dropout (p=0.0 in the module) is an identity and is omitted.
    nf, ef = hgnn_forward(node_feats, edge_feats, src_oh, dst_oh, layer_params,
                          n_heads=H, hidden=HID)
    nf, ef = jax.block_until_ready((nf, ef))
    assert nf.shape == (N, HID) and ef.shape == (E, HID)
    assert bool(jnp.all(jnp.isfinite(nf))) and bool(jnp.all(jnp.isfinite(ef)))
    print("KERNEL_OK")
</pallas_src>

<mosaic_0001>
module attributes {stable_mosaic.version = 11 : i64} {
  func.func @hgnn_stack_kernel(%arg0: memref<8x4xf32, #tpu.memory_space<vmem>>, %arg1: memref<16x4xf32, #tpu.memory_space<vmem>>, %arg2: memref<16x8xbf16, #tpu.memory_space<vmem>>, %arg3: memref<16x8xbf16, #tpu.memory_space<vmem>>, %arg4: memref<4x64xbf16, #tpu.memory_space<vmem>>, %arg5: memref<4x64xbf16, #tpu.memory_space<vmem>>, %arg6: memref<128x64xbf16, #tpu.memory_space<vmem>>, %arg7: memref<128x64xbf16, #tpu.memory_space<vmem>>, %arg8: memref<64x96xbf16, #tpu.memory_space<vmem>>, %arg9: memref<4x32xbf16, #tpu.memory_space<vmem>>, %arg10: memref<4x32xbf16, #tpu.memory_space<vmem>>, %arg11: memref<64x32xbf16, #tpu.memory_space<vmem>>, %arg12: memref<3x64xf32, #tpu.memory_space<vmem>>, %arg13: memref<2x96xf32, #tpu.memory_space<vmem>>, %arg14: memref<3x32xf32, #tpu.memory_space<vmem>>, %arg15: memref<32x64xbf16, #tpu.memory_space<vmem>>, %arg16: memref<32x64xbf16, #tpu.memory_space<vmem>>, %arg17: memref<128x64xbf16, #tpu.memory_space<vmem>>, %arg18: memref<128x64xbf16, #tpu.memory_space<vmem>>, %arg19: memref<64x96xbf16, #tpu.memory_space<vmem>>, %arg20: memref<32x32xbf16, #tpu.memory_space<vmem>>, %arg21: memref<32x32xbf16, #tpu.memory_space<vmem>>, %arg22: memref<64x32xbf16, #tpu.memory_space<vmem>>, %arg23: memref<3x64xf32, #tpu.memory_space<vmem>>, %arg24: memref<2x96xf32, #tpu.memory_space<vmem>>, %arg25: memref<3x32xf32, #tpu.memory_space<vmem>>, %arg26: memref<8x32xf32, #tpu.memory_space<vmem>>, %arg27: memref<16x32xf32, #tpu.memory_space<vmem>>) attributes {dimension_semantics = [], scalar_prefetch = 0 : i64, scratch_operands = 0 : i64, tpu.core_type = #tpu.core_type<tc>} {
    %c0 = arith.constant 0 : index
    %c0_0 = arith.constant 0 : index
    %0 = vector.load %arg2[%c0, %c0_0] : memref<16x8xbf16, #tpu.memory_space<vmem>>, vector<16x8xbf16>
    %c0_1 = arith.constant 0 : index
    %c0_2 = arith.constant 0 : index
    %1 = vector.load %arg3[%c0_1, %c0_2] : memref<16x8xbf16, #tpu.memory_space<vmem>>, vector<16x8xbf16>
    %c0_3 = arith.constant 0 : index
    %c0_4 = arith.constant 0 : index
    %2 = vector.load %arg0[%c0_3, %c0_4] : memref<8x4xf32, #tpu.memory_space<vmem>>, vector<8x4xf32>
    %c0_5 = arith.constant 0 : index
    %c0_6 = arith.constant 0 : index
    %3 = vector.load %arg1[%c0_5, %c0_6] : memref<16x4xf32, #tpu.memory_space<vmem>>, vector<16x4xf32>
    %c0_7 = arith.constant 0 : index
    %c0_8 = arith.constant 0 : index
    %4 = vector.load %arg4[%c0_7, %c0_8] : memref<4x64xbf16, #tpu.memory_space<vmem>>, vector<4x64xbf16>
    %c0_9 = arith.constant 0 : index
    %c0_10 = arith.constant 0 : index
    %5 = vector.load %arg5[%c0_9, %c0_10] : memref<4x64xbf16, #tpu.memory_space<vmem>>, vector<4x64xbf16>
    %c0_11 = arith.constant 0 : index
    %c0_12 = arith.constant 0 : index
    %6 = vector.load %arg6[%c0_11, %c0_12] : memref<128x64xbf16, #tpu.memory_space<vmem>>, vector<64x64xbf16>
    %c64 = arith.constant 64 : index
    %c0_13 = arith.constant 0 : index
    %7 = vector.load %arg6[%c64, %c0_13] : memref<128x64xbf16, #tpu.memory_space<vmem>>, vector<64x64xbf16>
    %c0_14 = arith.constant 0 : index
    %c0_15 = arith.constant 0 : index
    %8 = vector.load %arg7[%c0_14, %c0_15] : memref<128x64xbf16, #tpu.memory_space<vmem>>, vector<64x64xbf16>
    %c64_16 = arith.constant 64 : index
    %c0_17 = arith.constant 0 : index
    %9 = vector.load %arg7[%c64_16, %c0_17] : memref<128x64xbf16, #tpu.memory_space<vmem>>, vector<64x64xbf16>
    %c0_18 = arith.constant 0 : index
    %c0_19 = arith.constant 0 : index
    %10 = vector.load %arg8[%c0_18, %c0_19] : memref<64x96xbf16, #tpu.memory_space<vmem>>, vector<32x96xbf16>
    %c32 = arith.constant 32 : index
    %c0_20 = arith.constant 0 : index
    %11 = vector.load %arg8[%c32, %c0_20] : memref<64x96xbf16, #tpu.memory_space<vmem>>, vector<32x96xbf16>
    %c0_21 = arith.constant 0 : index
    %c0_22 = arith.constant 0 : index
    %12 = vector.load %arg9[%c0_21, %c0_22] : memref<4x32xbf16, #tpu.memory_space<vmem>>, vector<4x32xbf16>
    %c0_23 = arith.constant 0 : index
    %c0_24 = arith.constant 0 : index
    %13 = vector.load %arg10[%c0_23, %c0_24] : memref<4x32xbf16, #tpu.memory_space<vmem>>, vector<4x32xbf16>
    %c0_25 = arith.constant 0 : index
    %c0_26 = arith.constant 0 : index
    %14 = vector.load %arg11[%c0_25, %c0_26] : memref<64x32xbf16, #tpu.memory_space<vmem>>, vector<32x32xbf16>
    %c32_27 = arith.constant 32 : index
    %c0_28 = arith.constant 0 : index
    %15 = vector.load %arg11[%c32_27, %c0_28] : memref<64x32xbf16, #tpu.memory_space<vmem>>, vector<32x32xbf16>
    %c0_29 = arith.constant 0 : index
    %c0_30 = arith.constant 0 : index
    %16 = vector.load %arg12[%c0_29, %c0_30] : memref<3x64xf32, #tpu.memory_space<vmem>>, vector<1x64xf32>
    %c1 = arith.constant 1 : index
    %c0_31 = arith.constant 0 : index
    %17 = vector.load %arg12[%c1, %c0_31] : memref<3x64xf32, #tpu.memory_space<vmem>>, vector<1x64xf32>
    %c2 = arith.constant 2 : index
    %c0_32 = arith.constant 0 : index
    %18 = vector.load %arg12[%c2, %c0_32] : memref<3x64xf32, #tpu.memory_space<vmem>>, vector<1x64xf32>
    %c0_33 = arith.constant 0 : index
    %c0_34 = arith.constant 0 : index
    %19 = vector.load %arg13[%c0_33, %c0_34] : memref<2x96xf32, #tpu.memory_space<vmem>>, vector<1x96xf32>
    %c1_35 = arith.constant 1 : index
    %c0_36 = arith.constant 0 : index
    %20 = vector.load %arg13[%c1_35, %c0_36] : memref<2x96xf32, #tpu.memory_space<vmem>>, vector<1x96xf32>
    %c0_37 = arith.constant 0 : index
    %c0_38 = arith.constant 0 : index
    %21 = vector.load %arg14[%c0_37, %c0_38] : memref<3x32xf32, #tpu.memory_space<vmem>>, vector<1x32xf32>
    %c1_39 = arith.constant 1 : index
    %c0_40 = arith.constant 0 : index
    %22 = vector.load %arg14[%c1_39, %c0_40] : memref<3x32xf32, #tpu.memory_space<vmem>>, vector<1x32xf32>
    %c2_41 = arith.constant 2 : index
    %c0_42 = arith.constant 0 : index
    %23 = vector.load %arg14[%c2_41, %c0_42] : memref<3x32xf32, #tpu.memory_space<vmem>>, vector<1x32xf32>
    %24 = arith.truncf %2 : vector<8x4xf32> to vector<8x4xbf16>
    %cst = arith.constant dense<0.000000e+00> : vector<8x64xf32>
    %25 = tpu.matmul %24, %4, %cst {dimension_numbers = #tpu.dot_dimension_numbers<[1], [0], [0], [1], [0, 0, 1, 1], [], []>} : vector<8x4xbf16>, vector<4x64xbf16>, vector<8x64xf32> -> vector<8x64xf32>
    %26 = vector.broadcast %16 : vector<1x64xf32> to vector<8x64xf32>
    %27 = arith.addf %25, %26 : vector<8x64xf32>
    %28 = arith.truncf %3 : vector<16x4xf32> to vector<16x4xbf16>
    %cst_43 = arith.constant dense<0.000000e+00> : vector<16x64xf32>
    %29 = tpu.matmul %28, %5, %cst_43 {dimension_numbers = #tpu.dot_dimension_numbers<[1], [0], [0], [1], [0, 0, 1, 1], [], []>} : vector<16x4xbf16>, vector<4x64xbf16>, vector<16x64xf32> -> vector<16x64xf32>
    %30 = vector.broadcast %17 : vector<1x64xf32> to vector<16x64xf32>
    %31 = arith.addf %29, %30 : vector<16x64xf32>
    %32 = arith.truncf %27 : vector<8x64xf32> to vector<8x64xbf16>
    %cst_44 = arith.constant dense<0.000000e+00> : vector<16x64xf32>
    %33 = tpu.matmul %0, %32, %cst_44 {dimension_numbers = #tpu.dot_dimension_numbers<[1], [0], [0], [1], [0, 0, 1, 1], [], []>} : vector<16x8xbf16>, vector<8x64xbf16>, vector<16x64xf32> -> vector<16x64xf32>
    %34 = arith.truncf %27 : vector<8x64xf32> to vector<8x64xbf16>
    %cst_45 = arith.constant dense<0.000000e+00> : vector<16x64xf32>
    %35 = tpu.matmul %1, %34, %cst_45 {dimension_numbers = #tpu.dot_dimension_numbers<[1], [0], [0], [1], [0, 0, 1, 1], [], []>} : vector<16x8xbf16>, vector<8x64xbf16>, vector<16x64xf32> -> vector<16x64xf32>
    %36 = arith.addf %33, %35 : vector<16x64xf32>
    %37 = arith.truncf %36 : vector<16x64xf32> to vector<16x64xbf16>
    %cst_46 = arith.constant dense<0.000000e+00> : vector<16x64xf32>
    %38 = tpu.matmul %37, %6, %cst_46 {dimension_numbers = #tpu.dot_dimension_numbers<[1], [0], [0], [1], [0, 0, 1, 1], [], []>} : vector<16x64xbf16>, vector<64x64xbf16>, vector<16x64xf32> -> vector<16x64xf32>
    %cst_47 = arith.constant 0.000000e+00 : f32
    %39 = vector.broadcast %cst_47 : f32 to vector<16x64xf32>
    %40 = arith.cmpf oge, %38, %39 : vector<16x64xf32>
    %cst_48 = arith.constant 2.000000e-01 : f32
    %41 = vector.broadcast %cst_48 : f32 to vector<16x64xf32>
    %42 = arith.mulf %41, %38 : vector<16x64xf32>
    %43 = arith.select %40, %38, %42 : vector<16x64xi1>, vector<16x64xf32>
    %cst_49 = arith.constant dense<0xFF800000> : vector<64xf32>
    %44 = vector.multi_reduction <maximumf>, %43, %cst_49 [0] : vector<16x64xf32> to vector<64xf32>
    %45 = vector.shape_cast %44 : vector<64xf32> to vector<1x64xf32>
    %46 = vector.broadcast %45 : vector<1x64xf32> to vector<16x64xf32>
    %47 = arith.subf %43, %46 : vector<16x64xf32>
    %48 = math.exp %47 : vector<16x64xf32>
    %49 = arith.truncf %48 : vector<16x64xf32> to vector<16x64xbf16>
    %cst_50 = arith.constant dense<0.000000e+00> : vector<8x64xf32>
    %50 = tpu.matmul %1, %49, %cst_50 {dimension_numbers = #tpu.dot_dimension_numbers<[0], [0], [1], [1], [0, 1, 1, 1], [], []>} : vector<16x8xbf16>, vector<16x64xbf16>, vector<8x64xf32> -> vector<8x64xf32>
    %51 = arith.truncf %50 : vector<8x64xf32> to vector<8x64xbf16>
    %cst_51 = arith.constant dense<0.000000e+00> : vector<16x64xf32>
    %52 = tpu.matmul %1, %51, %cst_51 {dimension_numbers = #tpu.dot_dimension_numbers<[1], [0], [0], [1], [0, 0, 1, 1], [], []>} : vector<16x8xbf16>, vector<8x64xbf16>, vector<16x64xf32> -> vector<16x64xf32>
    %cst_52 = arith.constant 1.000000e-30 : f32
    %53 = vector.broadcast %cst_52 : f32 to vector<16x64xf32>
    %54 = arith.maximumf %52, %53 : vector<16x64xf32>
    %55 = tpu.reciprocal %54 {approx = true} : vector<16x64xf32> -> vector<16x64xf32>
    %56 = arith.mulf %48, %55 : vector<16x64xf32>
    %57 = arith.mulf %33, %56 : vector<16x64xf32>
    %58 = arith.truncf %57 : vector<16x64xf32> to vector<16x64xbf16>
    %cst_53 = arith.constant dense<0.000000e+00> : vector<8x64xf32>
    %59 = tpu.matmul %1, %58, %cst_53 {dimension_numbers = #tpu.dot_dimension_numbers<[0], [0], [1], [1], [0, 1, 1, 1], [], []>} : vector<16x8xbf16>, vector<16x64xbf16>, vector<8x64xf32> -> vector<8x64xf32>
    %60 = arith.addf %33, %31 : vector<16x64xf32>
    %61 = arith.truncf %60 : vector<16x64xf32> to vector<16x64xbf16>
    %cst_54 = arith.constant dense<0.000000e+00> : vector<16x64xf32>
    %62 = tpu.matmul %61, %7, %cst_54 {dimension_numbers = #tpu.dot_dimension_numbers<[1], [0], [0], [1], [0, 0, 1, 1], [], []>} : vector<16x64xbf16>, vector<64x64xbf16>, vector<16x64xf32> -> vector<16x64xf32>
    %cst_55 = arith.constant 0.000000e+00 : f32
    %63 = vector.broadcast %cst_55 : f32 to vector<16x64xf32>
    %64 = arith.cmpf oge, %62, %63 : vector<16x64xf32>
    %cst_56 = arith.constant 2.000000e-01 : f32
    %65 = vector.broadcast %cst_56 : f32 to vector<16x64xf32>
    %66 = arith.mulf %65, %62 : vector<16x64xf32>
    %67 = arith.select %64, %62, %66 : vector<16x64xi1>, vector<16x64xf32>
    %cst_57 = arith.constant dense<0xFF800000> : vector<64xf32>
    %68 = vector.multi_reduction <maximumf>, %67, %cst_57 [0] : vector<16x64xf32> to vector<64xf32>
    %69 = vector.shape_cast %68 : vector<64xf32> to vector<1x64xf32>
    %70 = vector.broadcast %69 : vector<1x64xf32> to vector<16x64xf32>
    %71 = arith.subf %67, %70 : vector<16x64xf32>
    %72 = math.exp %71 : vector<16x64xf32>
    %73 = arith.truncf %72 : vector<16x64xf32> to vector<16x64xbf16>
    %cst_58 = arith.constant dense<0.000000e+00> : vector<8x64xf32>
    %74 = tpu.matmul %1, %73, %cst_58 {dimension_numbers = #tpu.dot_dimension_numbers<[0], [0], [1], [1], [0, 1, 1, 1], [], []>} : vector<16x8xbf16>, vector<16x64xbf16>, vector<8x64xf32> -> vector<8x64xf32>
    %75 = arith.truncf %74 : vector<8x64xf32> to vector<8x64xbf16>
    %cst_59 = arith.constant dense<0.000000e+00> : vector<16x64xf32>
    %76 = tpu.matmul %1, %75, %cst_59 {dimension_numbers = #tpu.dot_dimension_numbers<[1], [0], [0], [1], [0, 0, 1, 1], [], []>} : vector<16x8xbf16>, vector<8x64xbf16>, vector<16x64xf32> -> vector<16x64xf32>
    %cst_60 = arith.constant 1.000000e-30 : f32
    %77 = vector.broadcast %cst_60 : f32 to vector<16x64xf32>
    %78 = arith.maximumf %76, %77 : vector<16x64xf32>
    %79 = tpu.reciprocal %78 {approx = true} : vector<16x64xf32> -> vector<16x64xf32>
    %80 = arith.mulf %72, %79 : vector<16x64xf32>
    %81 = arith.mulf %31, %80 : vector<16x64xf32>
    %82 = arith.truncf %81 : vector<16x64xf32> to vector<16x64xbf16>
    %cst_61 = arith.constant dense<0.000000e+00> : vector<8x64xf32>
    %83 = tpu.matmul %1, %82, %cst_61 {dimension_numbers = #tpu.dot_dimension_numbers<[0], [0], [1], [1], [0, 1, 1, 1], [], []>} : vector<16x8xbf16>, vector<16x64xbf16>, vector<8x64xf32> -> vector<8x64xf32>
    %84 = arith.addf %59, %27 : vector<8x64xf32>
    %cst_62 = arith.constant 0.000000e+00 : f32
    %85 = vector.broadcast %cst_62 : f32 to vector<8x64xf32>
    %86 = arith.maximumf %84, %85 : vector<8x64xf32>
    %87 = arith.addf %83, %27 : vector<8x64xf32>
    %cst_63 = arith.constant 0.000000e+00 : f32
    %88 = vector.broadcast %cst_63 : f32 to vector<8x64xf32>
    %89 = arith.maximumf %87, %88 : vector<8x64xf32>
    %90 = arith.truncf %86 : vector<8x64xf32> to vector<8x64xbf16>
    %cst_64 = arith.constant dense<0.000000e+00> : vector<8x64xf32>
    %91 = tpu.matmul %90, %8, %cst_64 {dimension_numbers = #tpu.dot_dimension_numbers<[1], [0], [0], [1], [0, 0, 1, 1], [], []>} : vector<8x64xbf16>, vector<64x64xbf16>, vector<8x64xf32> -> vector<8x64xf32>
    %92 = arith.truncf %89 : vector<8x64xf32> to vector<8x64xbf16>
    %cst_65 = arith.constant dense<0.000000e+00> : vector<8x64xf32>
    %93 = tpu.matmul %92, %9, %cst_65 {dimension_numbers = #tpu.dot_dimension_numbers<[1], [0], [0], [1], [0, 0, 1, 1], [], []>} : vector<8x64xbf16>, vector<64x64xbf16>, vector<8x64xf32> -> vector<8x64xf32>
    %94 = arith.addf %91, %93 : vector<8x64xf32>
    %95 = vector.broadcast %18 : vector<1x64xf32> to vector<8x64xf32>
    %96 = arith.addf %94, %95 : vector<8x64xf32>
    %cst_66 = arith.constant 0.000000e+00 : f32
    %97 = vector.broadcast %cst_66 : f32 to vector<8x64xf32>
    %98 = arith.maximumf %96, %97 : vector<8x64xf32>
    %99 = vector.extract_strided_slice %98 {offsets = [0, 0], sizes = [8, 32], strides = [1, 1]} : vector<8x64xf32> to vector<8x32xf32>
    %100 = vector.extract_strided_slice %98 {offsets = [0, 32], sizes = [8, 32], strides = [1, 1]} : vector<8x64xf32> to vector<8x32xf32>
    %101 = arith.addf %99, %100 : vector<8x32xf32>
    %cst_67 = arith.constant 5.000000e-01 : f32
    %102 = vector.broadcast %cst_67 : f32 to vector<8x32xf32>
    %103 = arith.mulf %101, %102 : vector<8x32xf32>
    %104 = vector.extract_strided_slice %27 {offsets = [0, 0], sizes = [8, 32], strides = [1, 1]} : vector<8x64xf32> to vector<8x32xf32>
    %105 = vector.extract_strided_slice %27 {offsets = [0, 32], sizes = [8, 32], strides = [1, 1]} : vector<8x64xf32> to vector<8x32xf32>
    %106 = arith.addf %104, %105 : vector<8x32xf32>
    %cst_68 = arith.constant 5.000000e-01 : f32
    %107 = vector.broadcast %cst_68 : f32 to vector<8x32xf32>
    %108 = arith.mulf %106, %107 : vector<8x32xf32>
    %109 = arith.truncf %103 : vector<8x32xf32> to vector<8x32xbf16>
    %cst_69 = arith.constant dense<0.000000e+00> : vector<8x96xf32>
    %110 = tpu.matmul %109, %10, %cst_69 {dimension_numbers = #tpu.dot_dimension_numbers<[1], [0], [0], [1], [0, 0, 1, 1], [], []>} : vector<8x32xbf16>, vector<32x96xbf16>, vector<8x96xf32> -> vector<8x96xf32>
    %111 = vector.broadcast %19 : vector<1x96xf32> to vector<8x96xf32>
    %112 = arith.addf %110, %111 : vector<8x96xf32>
    %113 = arith.truncf %108 : vector<8x32xf32> to vector<8x32xbf16>
    %cst_70 = arith.constant dense<0.000000e+00> : vector<8x96xf32>
    %114 = tpu.matmul %113, %11, %cst_70 {dimension_numbers = #tpu.dot_dimension_numbers<[1], [0], [0], [1], [0, 0, 1, 1], [], []>} : vector<8x32xbf16>, vector<32x96xbf16>, vector<8x96xf32> -> vector<8x96xf32>
    %115 = vector.broadcast %20 : vector<1x96xf32> to vector<8x96xf32>
    %116 = arith.addf %114, %115 : vector<8x96xf32>
    %117 = vector.extract_strided_slice %112 {offsets = [0, 0], sizes = [8, 32], strides = [1, 1]} : vector<8x96xf32> to vector<8x32xf32>
    %118 = vector.extract_strided_slice %116 {offsets = [0, 0], sizes = [8, 32], strides = [1, 1]} : vector<8x96xf32> to vector<8x32xf32>
    %119 = arith.addf %117, %118 : vector<8x32xf32>
    %120 = arith.negf %119 : vector<8x32xf32>
    %121 = math.exp %120 : vector<8x32xf32>
    %cst_71 = arith.constant 1.000000e+00 : f32
    %122 = vector.broadcast %cst_71 : f32 to vector<8x32xf32>
    %123 = arith.addf %122, %121 : vector<8x32xf32>
    %124 = arith.divf %122, %123 : vector<8x32xf32>
    %125 = vector.extract_strided_slice %112 {offsets = [0, 32], sizes = [8, 32], strides = [1, 1]} : vector<8x96xf32> to vector<8x32xf32>
    %126 = vector.extract_strided_slice %116 {offsets = [0, 32], sizes = [8, 32], strides = [1, 1]} : vector<8x96xf32> to vector<8x32xf32>
    %127 = arith.addf %125, %126 : vector<8x32xf32>
    %128 = arith.negf %127 : vector<8x32xf32>
    %129 = math.exp %128 : vector<8x32xf32>
    %cst_72 = arith.constant 1.000000e+00 : f32
    %130 = vector.broadcast %cst_72 : f32 to vector<8x32xf32>
    %131 = arith.addf %130, %129 : vector<8x32xf32>
    %132 = arith.divf %130, %131 : vector<8x32xf32>
    %133 = vector.extract_strided_slice %112 {offsets = [0, 64], sizes = [8, 32], strides = [1, 1]} : vector<8x96xf32> to vector<8x32xf32>
    %134 = vector.extract_strided_slice %116 {offsets = [0, 64], sizes = [8, 32], strides = [1, 1]} : vector<8x96xf32> to vector<8x32xf32>
    %135 = arith.mulf %124, %134 : vector<8x32xf32>
    %136 = arith.addf %133, %135 : vector<8x32xf32>
    %137 = math.tanh %136 : vector<8x32xf32>
    %cst_73 = arith.constant 1.000000e+00 : f32
    %138 = vector.broadcast %cst_73 : f32 to vector<8x32xf32>
    %139 = arith.subf %138, %132 : vector<8x32xf32>
    %140 = arith.mulf %139, %137 : vector<8x32xf32>
    %141 = arith.mulf %132, %108 : vector<8x32xf32>
    %142 = arith.addf %140, %141 : vector<8x32xf32>
    %143 = arith.truncf %2 : vector<8x4xf32> to vector<8x4xbf16>
    %cst_74 = arith.constant dense<0.000000e+00> : vector<8x32xf32>
    %144 = tpu.matmul %143, %12, %cst_74 {dimension_numbers = #tpu.dot_dimension_numbers<[1], [0], [0], [1], [0, 0, 1, 1], [], []>} : vector<8x4xbf16>, vector<4x32xbf16>, vector<8x32xf32> -> vector<8x32xf32>
    %145 = vector.broadcast %21 : vector<1x32xf32> to vector<8x32xf32>
    %146 = arith.addf %144, %145 : vector<8x32xf32>
    %cst_75 = arith.constant 0.000000e+00 : f32
    %147 = vector.broadcast %cst_75 : f32 to vector<8x32xf32>
    %148 = arith.maximumf %146, %147 : vector<8x32xf32>
    %149 = arith.truncf %148 : vector<8x32xf32> to vector<8x32xbf16>
    %cst_76 = arith.constant dense<0.000000e+00> : vector<16x32xf32>
    %150 = tpu.matmul %0, %149, %cst_76 {dimension_numbers = #tpu.dot_dimension_numbers<[1], [0], [0], [1], [0, 0, 1, 1], [], []>} : vector<16x8xbf16>, vector<8x32xbf16>, vector<16x32xf32> -> vector<16x32xf32>
    %151 = arith.truncf %148 : vector<8x32xf32> to vector<8x32xbf16>
    %cst_77 = arith.constant dense<0.000000e+00> : vector<16x32xf32>
    %152 = tpu.matmul %1, %151, %cst_77 {dimension_numbers = #tpu.dot_dimension_numbers<[1], [0], [0], [1], [0, 0, 1, 1], [], []>} : vector<16x8xbf16>, vector<8x32xbf16>, vector<16x32xf32> -> vector<16x32xf32>
    %153 = arith.addf %150, %152 : vector<16x32xf32>
    %154 = arith.truncf %3 : vector<16x4xf32> to vector<16x4xbf16>
    %cst_78 = arith.constant dense<0.000000e+00> : vector<16x32xf32>
    %155 = tpu.matmul %154, %13, %cst_78 {dimension_numbers = #tpu.dot_dimension_numbers<[1], [0], [0], [1], [0, 0, 1, 1], [], []>} : vector<16x4xbf16>, vector<4x32xbf16>, vector<16x32xf32> -> vector<16x32xf32>
    %156 = vector.broadcast %22 : vector<1x32xf32> to vector<16x32xf32>
    %157 = arith.addf %155, %156 : vector<16x32xf32>
    %cst_79 = arith.constant 0.000000e+00 : f32
    %158 = vector.broadcast %cst_79 : f32 to vector<16x32xf32>
    %159 = arith.maximumf %157, %158 : vector<16x32xf32>
    %160 = arith.truncf %153 : vector<16x32xf32> to vector<16x32xbf16>
    %cst_80 = arith.constant dense<0.000000e+00> : vector<16x32xf32>
    %161 = tpu.matmul %160, %14, %cst_80 {dimension_numbers = #tpu.dot_dimension_numbers<[1], [0], [0], [1], [0, 0, 1, 1], [], []>} : vector<16x32xbf16>, vector<32x32xbf16>, vector<16x32xf32> -> vector<16x32xf32>
    %162 = arith.truncf %159 : vector<16x32xf32> to vector<16x32xbf16>
    %cst_81 = arith.constant dense<0.000000e+00> : vector<16x32xf32>
    %163 = tpu.matmul %162, %15, %cst_81 {dimension_numbers = #tpu.dot_dimension_numbers<[1], [0], [0], [1], [0, 0, 1, 1], [], []>} : vector<16x32xbf16>, vector<32x32xbf16>, vector<16x32xf32> -> vector<16x32xf32>
    %164 = arith.addf %161, %163 : vector<16x32xf32>
    %165 = vector.broadcast %23 : vector<1x32xf32> to vector<16x32xf32>
    %166 = arith.addf %164, %165 : vector<16x32xf32>
    %cst_82 = arith.constant 0.000000e+00 : f32
    %167 = vector.broadcast %cst_82 : f32 to vector<16x32xf32>
    %168 = arith.maximumf %166, %167 : vector<16x32xf32>
    %c0_83 = arith.constant 0 : index
    %c0_84 = arith.constant 0 : index
    %169 = vector.load %arg15[%c0_83, %c0_84] : memref<32x64xbf16, #tpu.memory_space<vmem>>, vector<32x64xbf16>
    %c0_85 = arith.constant 0 : index
    %c0_86 = arith.constant 0 : index
    %170 = vector.load %arg16[%c0_85, %c0_86] : memref<32x64xbf16, #tpu.memory_space<vmem>>, vector<32x64xbf16>
    %c0_87 = arith.constant 0 : index
    %c0_88 = arith.constant 0 : index
    %171 = vector.load %arg17[%c0_87, %c0_88] : memref<128x64xbf16, #tpu.memory_space<vmem>>, vector<64x64xbf16>
    %c64_89 = arith.constant 64 : index
    %c0_90 = arith.constant 0 : index
    %172 = vector.load %arg17[%c64_89, %c0_90] : memref<128x64xbf16, #tpu.memory_space<vmem>>, vector<64x64xbf16>
    %c0_91 = arith.constant 0 : index
    %c0_92 = arith.constant 0 : index
    %173 = vector.load %arg18[%c0_91, %c0_92] : memref<128x64xbf16, #tpu.memory_space<vmem>>, vector<64x64xbf16>
    %c64_93 = arith.constant 64 : index
    %c0_94 = arith.constant 0 : index
    %174 = vector.load %arg18[%c64_93, %c0_94] : memref<128x64xbf16, #tpu.memory_space<vmem>>, vector<64x64xbf16>
    %c0_95 = arith.constant 0 : index
    %c0_96 = arith.constant 0 : index
    %175 = vector.load %arg19[%c0_95, %c0_96] : memref<64x96xbf16, #tpu.memory_space<vmem>>, vector<32x96xbf16>
    %c32_97 = arith.constant 32 : index
    %c0_98 = arith.constant 0 : index
    %176 = vector.load %arg19[%c32_97, %c0_98] : memref<64x96xbf16, #tpu.memory_space<vmem>>, vector<32x96xbf16>
    %c0_99 = arith.constant 0 : index
    %c0_100 = arith.constant 0 : index
    %177 = vector.load %arg20[%c0_99, %c0_100] : memref<32x32xbf16, #tpu.memory_space<vmem>>, vector<32x32xbf16>
    %c0_101 = arith.constant 0 : index
    %c0_102 = arith.constant 0 : index
    %178 = vector.load %arg21[%c0_101, %c0_102] : memref<32x32xbf16, #tpu.memory_space<vmem>>, vector<32x32xbf16>
    %c0_103 = arith.constant 0 : index
    %c0_104 = arith.constant 0 : index
    %179 = vector.load %arg22[%c0_103, %c0_104] : memref<64x32xbf16, #tpu.memory_space<vmem>>, vector<32x32xbf16>
    %c32_105 = arith.constant 32 : index
    %c0_106 = arith.constant 0 : index
    %180 = vector.load %arg22[%c32_105, %c0_106] : memref<64x32xbf16, #tpu.memory_space<vmem>>, vector<32x32xbf16>
    %c0_107 = arith.constant 0 : index
    %c0_108 = arith.constant 0 : index
    %181 = vector.load %arg23[%c0_107, %c0_108] : memref<3x64xf32, #tpu.memory_space<vmem>>, vector<1x64xf32>
    %c1_109 = arith.constant 1 : index
    %c0_110 = arith.constant 0 : index
    %182 = vector.load %arg23[%c1_109, %c0_110] : memref<3x64xf32, #tpu.memory_space<vmem>>, vector<1x64xf32>
    %c2_111 = arith.constant 2 : index
    %c0_112 = arith.constant 0 : index
    %183 = vector.load %arg23[%c2_111, %c0_112] : memref<3x64xf32, #tpu.memory_space<vmem>>, vector<1x64xf32>
    %c0_113 = arith.constant 0 : index
    %c0_114 = arith.constant 0 : index
    %184 = vector.load %arg24[%c0_113, %c0_114] : memref<2x96xf32, #tpu.memory_space<vmem>>, vector<1x96xf32>
    %c1_115 = arith.constant 1 : index
    %c0_116 = arith.constant 0 : index
    %185 = vector.load %arg24[%c1_115, %c0_116] : memref<2x96xf32, #tpu.memory_space<vmem>>, vector<1x96xf32>
    %c0_117 = arith.constant 0 : index
    %c0_118 = arith.constant 0 : index
    %186 = vector.load %arg25[%c0_117, %c0_118] : memref<3x32xf32, #tpu.memory_space<vmem>>, vector<1x32xf32>
    %c1_119 = arith.constant 1 : index
    %c0_120 = arith.constant 0 : index
    %187 = vector.load %arg25[%c1_119, %c0_120] : memref<3x32xf32, #tpu.memory_space<vmem>>, vector<1x32xf32>
    %c2_121 = arith.constant 2 : index
    %c0_122 = arith.constant 0 : index
    %188 = vector.load %arg25[%c2_121, %c0_122] : memref<3x32xf32, #tpu.memory_space<vmem>>, vector<1x32xf32>
    %189 = arith.truncf %142 : vector<8x32xf32> to vector<8x32xbf16>
    %cst_123 = arith.constant dense<0.000000e+00> : vector<8x64xf32>
    %190 = tpu.matmul %189, %169, %cst_123 {dimension_numbers = #tpu.dot_dimension_numbers<[1], [0], [0], [1], [0, 0, 1, 1], [], []>} : vector<8x32xbf16>, vector<32x64xbf16>, vector<8x64xf32> -> vector<8x64xf32>
    %191 = vector.broadcast %181 : vector<1x64xf32> to vector<8x64xf32>
    %192 = arith.addf %190, %191 : vector<8x64xf32>
    %193 = arith.truncf %168 : vector<16x32xf32> to vector<16x32xbf16>
    %cst_124 = arith.constant dense<0.000000e+00> : vector<16x64xf32>
    %194 = tpu.matmul %193, %170, %cst_124 {dimension_numbers = #tpu.dot_dimension_numbers<[1], [0], [0], [1], [0, 0, 1, 1], [], []>} : vector<16x32xbf16>, vector<32x64xbf16>, vector<16x64xf32> -> vector<16x64xf32>
    %195 = vector.broadcast %182 : vector<1x64xf32> to vector<16x64xf32>
    %196 = arith.addf %194, %195 : vector<16x64xf32>
    %197 = arith.truncf %192 : vector<8x64xf32> to vector<8x64xbf16>
    %cst_125 = arith.constant dense<0.000000e+00> : vector<16x64xf32>
    %198 = tpu.matmul %0, %197, %cst_125 {dimension_numbers = #tpu.dot_dimension_numbers<[1], [0], [0], [1], [0, 0, 1, 1], [], []>} : vector<16x8xbf16>, vector<8x64xbf16>, vector<16x64xf32> -> vector<16x64xf32>
    %199 = arith.truncf %192 : vector<8x64xf32> to vector<8x64xbf16>
    %cst_126 = arith.constant dense<0.000000e+00> : vector<16x64xf32>
    %200 = tpu.matmul %1, %199, %cst_126 {dimension_numbers = #tpu.dot_dimension_numbers<[1], [0], [0], [1], [0, 0, 1, 1], [], []>} : vector<16x8xbf16>, vector<8x64xbf16>, vector<16x64xf32> -> vector<16x64xf32>
    %201 = arith.addf %198, %200 : vector<16x64xf32>
    %202 = arith.truncf %201 : vector<16x64xf32> to vector<16x64xbf16>
    %cst_127 = arith.constant dense<0.000000e+00> : vector<16x64xf32>
    %203 = tpu.matmul %202, %171, %cst_127 {dimension_numbers = #tpu.dot_dimension_numbers<[1], [0], [0], [1], [0, 0, 1, 1], [], []>} : vector<16x64xbf16>, vector<64x64xbf16>, vector<16x64xf32> -> vector<16x64xf32>
    %cst_128 = arith.constant 0.000000e+00 : f32
    %204 = vector.broadcast %cst_128 : f32 to vector<16x64xf32>
    %205 = arith.cmpf oge, %203, %204 : vector<16x64xf32>
    %cst_129 = arith.constant 2.000000e-01 : f32
    %206 = vector.broadcast %cst_129 : f32 to vector<16x64xf32>
    %207 = arith.mulf %206, %203 : vector<16x64xf32>
    %208 = arith.select %205, %203, %207 : vector<16x64xi1>, vector<16x64xf32>
    %cst_130 = arith.constant dense<0xFF800000> : vector<64xf32>
    %209 = vector.multi_reduction <maximumf>, %208, %cst_130 [0] : vector<16x64xf32> to vector<64xf32>
    %210 = vector.shape_cast %209 : vector<64xf32> to vector<1x64xf32>
    %211 = vector.broadcast %210 : vector<1x64xf32> to vector<16x64xf32>
    %212 = arith.subf %208, %211 : vector<16x64xf32>
    %213 = math.exp %212 : vector<16x64xf32>
    %214 = arith.truncf %213 : vector<16x64xf32> to vector<16x64xbf16>
    %cst_131 = arith.constant dense<0.000000e+00> : vector<8x64xf32>
    %215 = tpu.matmul %1, %214, %cst_131 {dimension_numbers = #tpu.dot_dimension_numbers<[0], [0], [1], [1], [0, 1, 1, 1], [], []>} : vector<16x8xbf16>, vector<16x64xbf16>, vector<8x64xf32> -> vector<8x64xf32>
    %216 = arith.truncf %215 : vector<8x64xf32> to vector<8x64xbf16>
    %cst_132 = arith.constant dense<0.000000e+00> : vector<16x64xf32>
    %217 = tpu.matmul %1, %216, %cst_132 {dimension_numbers = #tpu.dot_dimension_numbers<[1], [0], [0], [1], [0, 0, 1, 1], [], []>} : vector<16x8xbf16>, vector<8x64xbf16>, vector<16x64xf32> -> vector<16x64xf32>
    %cst_133 = arith.constant 1.000000e-30 : f32
    %218 = vector.broadcast %cst_133 : f32 to vector<16x64xf32>
    %219 = arith.maximumf %217, %218 : vector<16x64xf32>
    %220 = tpu.reciprocal %219 {approx = true} : vector<16x64xf32> -> vector<16x64xf32>
    %221 = arith.mulf %213, %220 : vector<16x64xf32>
    %222 = arith.mulf %198, %221 : vector<16x64xf32>
    %223 = arith.truncf %222 : vector<16x64xf32> to vector<16x64xbf16>
    %cst_134 = arith.constant dense<0.000000e+00> : vector<8x64xf32>
    %224 = tpu.matmul %1, %223, %cst_134 {dimension_numbers = #tpu.dot_dimension_numbers<[0], [0], [1], [1], [0, 1, 1, 1], [], []>} : vector<16x8xbf16>, vector<16x64xbf16>, vector<8x64xf32> -> vector<8x64xf32>
    %225 = arith.addf %198, %196 : vector<16x64xf32>
    %226 = arith.truncf %225 : vector<16x64xf32> to vector<16x64xbf16>
    %cst_135 = arith.constant dense<0.000000e+00> : vector<16x64xf32>
    %227 = tpu.matmul %226, %172, %cst_135 {dimension_numbers = #tpu.dot_dimension_numbers<[1], [0], [0], [1], [0, 0, 1, 1], [], []>} : vector<16x64xbf16>, vector<64x64xbf16>, vector<16x64xf32> -> vector<16x64xf32>
    %cst_136 = arith.constant 0.000000e+00 : f32
    %228 = vector.broadcast %cst_136 : f32 to vector<16x64xf32>
    %229 = arith.cmpf oge, %227, %228 : vector<16x64xf32>
    %cst_137 = arith.constant 2.000000e-01 : f32
    %230 = vector.broadcast %cst_137 : f32 to vector<16x64xf32>
    %231 = arith.mulf %230, %227 : vector<16x64xf32>
    %232 = arith.select %229, %227, %231 : vector<16x64xi1>, vector<16x64xf32>
    %cst_138 = arith.constant dense<0xFF800000> : vector<64xf32>
    %233 = vector.multi_reduction <maximumf>, %232, %cst_138 [0] : vector<16x64xf32> to vector<64xf32>
    %234 = vector.shape_cast %233 : vector<64xf32> to vector<1x64xf32>
    %235 = vector.broadcast %234 : vector<1x64xf32> to vector<16x64xf32>
    %236 = arith.subf %232, %235 : vector<16x64xf32>
    %237 = math.exp %236 : vector<16x64xf32>
    %238 = arith.truncf %237 : vector<16x64xf32> to vector<16x64xbf16>
    %cst_139 = arith.constant dense<0.000000e+00> : vector<8x64xf32>
    %239 = tpu.matmul %1, %238, %cst_139 {dimension_numbers = #tpu.dot_dimension_numbers<[0], [0], [1], [1], [0, 1, 1, 1], [], []>} : vector<16x8xbf16>, vector<16x64xbf16>, vector<8x64xf32> -> vector<8x64xf32>
    %240 = arith.truncf %239 : vector<8x64xf32> to vector<8x64xbf16>
    %cst_140 = arith.constant dense<0.000000e+00> : vector<16x64xf32>
    %241 = tpu.matmul %1, %240, %cst_140 {dimension_numbers = #tpu.dot_dimension_numbers<[1], [0], [0], [1], [0, 0, 1, 1], [], []>} : vector<16x8xbf16>, vector<8x64xbf16>, vector<16x64xf32> -> vector<16x64xf32>
    %cst_141 = arith.constant 1.000000e-30 : f32
    %242 = vector.broadcast %cst_141 : f32 to vector<16x64xf32>
    %243 = arith.maximumf %241, %242 : vector<16x64xf32>
    %244 = tpu.reciprocal %243 {approx = true} : vector<16x64xf32> -> vector<16x64xf32>
    %245 = arith.mulf %237, %244 : vector<16x64xf32>
    %246 = arith.mulf %196, %245 : vector<16x64xf32>
    %247 = arith.truncf %246 : vector<16x64xf32> to vector<16x64xbf16>
    %cst_142 = arith.constant dense<0.000000e+00> : vector<8x64xf32>
    %248 = tpu.matmul %1, %247, %cst_142 {dimension_numbers = #tpu.dot_dimension_numbers<[0], [0], [1], [1], [0, 1, 1, 1], [], []>} : vector<16x8xbf16>, vector<16x64xbf16>, vector<8x64xf32> -> vector<8x64xf32>
    %249 = arith.addf %224, %192 : vector<8x64xf32>
    %cst_143 = arith.constant 0.000000e+00 : f32
    %250 = vector.broadcast %cst_143 : f32 to vector<8x64xf32>
    %251 = arith.maximumf %249, %250 : vector<8x64xf32>
    %252 = arith.addf %248, %192 : vector<8x64xf32>
    %cst_144 = arith.constant 0.000000e+00 : f32
    %253 = vector.broadcast %cst_144 : f32 to vector<8x64xf32>
    %254 = arith.maximumf %252, %253 : vector<8x64xf32>
    %255 = arith.truncf %251 : vector<8x64xf32> to vector<8x64xbf16>
    %cst_145 = arith.constant dense<0.000000e+00> : vector<8x64xf32>
    %256 = tpu.matmul %255, %173, %cst_145 {dimension_numbers = #tpu.dot_dimension_numbers<[1], [0], [0], [1], [0, 0, 1, 1], [], []>} : vector<8x64xbf16>, vector<64x64xbf16>, vector<8x64xf32> -> vector<8x64xf32>
    %257 = arith.truncf %254 : vector<8x64xf32> to vector<8x64xbf16>
    %cst_146 = arith.constant dense<0.000000e+00> : vector<8x64xf32>
    %258 = tpu.matmul %257, %174, %cst_146 {dimension_numbers = #tpu.dot_dimension_numbers<[1], [0], [0], [1], [0, 0, 1, 1], [], []>} : vector<8x64xbf16>, vector<64x64xbf16>, vector<8x64xf32> -> vector<8x64xf32>
    %259 = arith.addf %256, %258 : vector<8x64xf32>
    %260 = vector.broadcast %183 : vector<1x64xf32> to vector<8x64xf32>
    %261 = arith.addf %259, %260 : vector<8x64xf32>
    %cst_147 = arith.constant 0.000000e+00 : f32
    %262 = vector.broadcast %cst_147 : f32 to vector<8x64xf32>
    %263 = arith.maximumf %261, %262 : vector<8x64xf32>
    %264 = vector.extract_strided_slice %263 {offsets = [0, 0], sizes = [8, 32], strides = [1, 1]} : vector<8x64xf32> to vector<8x32xf32>
    %265 = vector.extract_strided_slice %263 {offsets = [0, 32], sizes = [8, 32], strides = [1, 1]} : vector<8x64xf32> to vector<8x32xf32>
    %266 = arith.addf %264, %265 : vector<8x32xf32>
    %cst_148 = arith.constant 5.000000e-01 : f32
    %267 = vector.broadcast %cst_148 : f32 to vector<8x32xf32>
    %268 = arith.mulf %266, %267 : vector<8x32xf32>
    %269 = vector.extract_strided_slice %192 {offsets = [0, 0], sizes = [8, 32], strides = [1, 1]} : vector<8x64xf32> to vector<8x32xf32>
    %270 = vector.extract_strided_slice %192 {offsets = [0, 32], sizes = [8, 32], strides = [1, 1]} : vector<8x64xf32> to vector<8x32xf32>
    %271 = arith.addf %269, %270 : vector<8x32xf32>
    %cst_149 = arith.constant 5.000000e-01 : f32
    %272 = vector.broadcast %cst_149 : f32 to vector<8x32xf32>
    %273 = arith.mulf %271, %272 : vector<8x32xf32>
    %274 = arith.truncf %268 : vector<8x32xf32> to vector<8x32xbf16>
    %cst_150 = arith.constant dense<0.000000e+00> : vector<8x96xf32>
    %275 = tpu.matmul %274, %175, %cst_150 {dimension_numbers = #tpu.dot_dimension_numbers<[1], [0], [0], [1], [0, 0, 1, 1], [], []>} : vector<8x32xbf16>, vector<32x96xbf16>, vector<8x96xf32> -> vector<8x96xf32>
    %276 = vector.broadcast %184 : vector<1x96xf32> to vector<8x96xf32>
    %277 = arith.addf %275, %276 : vector<8x96xf32>
    %278 = arith.truncf %273 : vector<8x32xf32> to vector<8x32xbf16>
    %cst_151 = arith.constant dense<0.000000e+00> : vector<8x96xf32>
    %279 = tpu.matmul %278, %176, %cst_151 {dimension_numbers = #tpu.dot_dimension_numbers<[1], [0], [0], [1], [0, 0, 1, 1], [], []>} : vector<8x32xbf16>, vector<32x96xbf16>, vector<8x96xf32> -> vector<8x96xf32>
    %280 = vector.broadcast %185 : vector<1x96xf32> to vector<8x96xf32>
    %281 = arith.addf %279, %280 : vector<8x96xf32>
    %282 = vector.extract_strided_slice %277 {offsets = [0, 0], sizes = [8, 32], strides = [1, 1]} : vector<8x96xf32> to vector<8x32xf32>
    %283 = vector.extract_strided_slice %281 {offsets = [0, 0], sizes = [8, 32], strides = [1, 1]} : vector<8x96xf32> to vector<8x32xf32>
    %284 = arith.addf %282, %283 : vector<8x32xf32>
    %285 = arith.negf %284 : vector<8x32xf32>
    %286 = math.exp %285 : vector<8x32xf32>
    %cst_152 = arith.constant 1.000000e+00 : f32
    %287 = vector.broadcast %cst_152 : f32 to vector<8x32xf32>
    %288 = arith.addf %287, %286 : vector<8x32xf32>
    %289 = arith.divf %287, %288 : vector<8x32xf32>
    %290 = vector.extract_strided_slice %277 {offsets = [0, 32], sizes = [8, 32], strides = [1, 1]} : vector<8x96xf32> to vector<8x32xf32>
    %291 = vector.extract_strided_slice %281 {offsets = [0, 32], sizes = [8, 32], strides = [1, 1]} : vector<8x96xf32> to vector<8x32xf32>
    %292 = arith.addf %290, %291 : vector<8x32xf32>
    %293 = arith.negf %292 : vector<8x32xf32>
    %294 = math.exp %293 : vector<8x32xf32>
    %cst_153 = arith.constant 1.000000e+00 : f32
    %295 = vector.broadcast %cst_153 : f32 to vector<8x32xf32>
    %296 = arith.addf %295, %294 : vector<8x32xf32>
    %297 = arith.divf %295, %296 : vector<8x32xf32>
    %298 = vector.extract_strided_slice %277 {offsets = [0, 64], sizes = [8, 32], strides = [1, 1]} : vector<8x96xf32> to vector<8x32xf32>
    %299 = vector.extract_strided_slice %281 {offsets = [0, 64], sizes = [8, 32], strides = [1, 1]} : vector<8x96xf32> to vector<8x32xf32>
    %300 = arith.mulf %289, %299 : vector<8x32xf32>
    %301 = arith.addf %298, %300 : vector<8x32xf32>
    %302 = math.tanh %301 : vector<8x32xf32>
    %cst_154 = arith.constant 1.000000e+00 : f32
    %303 = vector.broadcast %cst_154 : f32 to vector<8x32xf32>
    %304 = arith.subf %303, %297 : vector<8x32xf32>
    %305 = arith.mulf %304, %302 : vector<8x32xf32>
    %306 = arith.mulf %297, %273 : vector<8x32xf32>
    %307 = arith.addf %305, %306 : vector<8x32xf32>
    %308 = arith.truncf %142 : vector<8x32xf32> to vector<8x32xbf16>
    %cst_155 = arith.constant dense<0.000000e+00> : vector<8x32xf32>
    %309 = tpu.matmul %308, %177, %cst_155 {dimension_numbers = #tpu.dot_dimension_numbers<[1], [0], [0], [1], [0, 0, 1, 1], [], []>} : vector<8x32xbf16>, vector<32x32xbf16>, vector<8x32xf32> -> vector<8x32xf32>
    %310 = vector.broadcast %186 : vector<1x32xf32> to vector<8x32xf32>
    %311 = arith.addf %309, %310 : vector<8x32xf32>
    %cst_156 = arith.constant 0.000000e+00 : f32
    %312 = vector.broadcast %cst_156 : f32 to vector<8x32xf32>
    %313 = arith.maximumf %311, %312 : vector<8x32xf32>
    %314 = arith.truncf %313 : vector<8x32xf32> to vector<8x32xbf16>
    %cst_157 = arith.constant dense<0.000000e+00> : vector<16x32xf32>
    %315 = tpu.matmul %0, %314, %cst_157 {dimension_numbers = #tpu.dot_dimension_numbers<[1], [0], [0], [1], [0, 0, 1, 1], [], []>} : vector<16x8xbf16>, vector<8x32xbf16>, vector<16x32xf32> -> vector<16x32xf32>
    %316 = arith.truncf %313 : vector<8x32xf32> to vector<8x32xbf16>
    %cst_158 = arith.constant dense<0.000000e+00> : vector<16x32xf32>
    %317 = tpu.matmul %1, %316, %cst_158 {dimension_numbers = #tpu.dot_dimension_numbers<[1], [0], [0], [1], [0, 0, 1, 1], [], []>} : vector<16x8xbf16>, vector<8x32xbf16>, vector<16x32xf32> -> vector<16x32xf32>
    %318 = arith.addf %315, %317 : vector<16x32xf32>
    %319 = arith.truncf %168 : vector<16x32xf32> to vector<16x32xbf16>
    %cst_159 = arith.constant dense<0.000000e+00> : vector<16x32xf32>
    %320 = tpu.matmul %319, %178, %cst_159 {dimension_numbers = #tpu.dot_dimension_numbers<[1], [0], [0], [1], [0, 0, 1, 1], [], []>} : vector<16x32xbf16>, vector<32x32xbf16>, vector<16x32xf32> -> vector<16x32xf32>
    %321 = vector.broadcast %187 : vector<1x32xf32> to vector<16x32xf32>
    %322 = arith.addf %320, %321 : vector<16x32xf32>
    %cst_160 = arith.constant 0.000000e+00 : f32
    %323 = vector.broadcast %cst_160 : f32 to vector<16x32xf32>
    %324 = arith.maximumf %322, %323 : vector<16x32xf32>
    %325 = arith.truncf %318 : vector<16x32xf32> to vector<16x32xbf16>
    %cst_161 = arith.constant dense<0.000000e+00> : vector<16x32xf32>
    %326 = tpu.matmul %325, %179, %cst_161 {dimension_numbers = #tpu.dot_dimension_numbers<[1], [0], [0], [1], [0, 0, 1, 1], [], []>} : vector<16x32xbf16>, vector<32x32xbf16>, vector<16x32xf32> -> vector<16x32xf32>
    %327 = arith.truncf %324 : vector<16x32xf32> to vector<16x32xbf16>
    %cst_162 = arith.constant dense<0.000000e+00> : vector<16x32xf32>
    %328 = tpu.matmul %327, %180, %cst_162 {dimension_numbers = #tpu.dot_dimension_numbers<[1], [0], [0], [1], [0, 0, 1, 1], [], []>} : vector<16x32xbf16>, vector<32x32xbf16>, vector<16x32xf32> -> vector<16x32xf32>
    %329 = arith.addf %326, %328 : vector<16x32xf32>
    %330 = vector.broadcast %188 : vector<1x32xf32> to vector<16x32xf32>
    %331 = arith.addf %329, %330 : vector<16x32xf32>
    %cst_163 = arith.constant 0.000000e+00 : f32
    %332 = vector.broadcast %cst_163 : f32 to vector<16x32xf32>
    %333 = arith.maximumf %331, %332 : vector<16x32xf32>
    %c0_164 = arith.constant 0 : index
    %c0_165 = arith.constant 0 : index
    %334 = vector.load %arg26[%c0_164, %c0_165] : memref<8x32xf32, #tpu.memory_space<vmem>>, vector<8x32xf32>
    tpu.vector_store %arg26[%c0_164, %c0_165], %307 {strides = array<i32>} : memref<8x32xf32, #tpu.memory_space<vmem>>, vector<8x32xf32>,
    %c0_166 = arith.constant 0 : index
    %c0_167 = arith.constant 0 : index
    %335 = vector.load %arg27[%c0_166, %c0_167] : memref<16x32xf32, #tpu.memory_space<vmem>>, vector<16x32xf32>
    tpu.vector_store %arg27[%c0_166, %c0_167], %333 {strides = array<i32>} : memref<16x32xf32, #tpu.memory_space<vmem>>, vector<16x32xf32>,
    return
  }
}

</mosaic_0001>

<llo_original>
// kernel: tpu_custom_call.1
$region0: #{tpu_custom_call.1}
  #allocation0 [shape = 'u32[]', space=smem, size = 0x4, offset = 0x4, fixed_abs, tag = 'smem constant byte address 0x4 - core index']
  #allocation1 [shape = 'u32[144,128]{1,0:T(1,128)}', space=vmem, size = 0x12000, scoped, tag = 'internal scratch']
  %s0 = inlined_call_operand.vmem [shape: f32[8,4], index: 0, kind: input, shape index: {}]
  %s1 = inlined_call_operand.vmem [shape: f32[16,4], index: 1, kind: input, shape index: {}]
  %s2 = inlined_call_operand.vmem [shape: bf16[16,8], index: 2, kind: input, shape index: {}]
  %s3 = inlined_call_operand.vmem [shape: bf16[16,8], index: 3, kind: input, shape index: {}]
  %s4 = inlined_call_operand.vmem [shape: bf16[4,64], index: 4, kind: input, shape index: {}]
  %s5 = inlined_call_operand.vmem [shape: bf16[4,64], index: 5, kind: input, shape index: {}]
  %s6 = inlined_call_operand.vmem [shape: bf16[128,64], index: 6, kind: input, shape index: {}]
  %s7 = inlined_call_operand.vmem [shape: bf16[128,64], index: 7, kind: input, shape index: {}]
  %s8 = inlined_call_operand.vmem [shape: bf16[64,96], index: 8, kind: input, shape index: {}]
  %s9 = inlined_call_operand.vmem [shape: bf16[4,32], index: 9, kind: input, shape index: {}]
  %s10 = inlined_call_operand.vmem [shape: bf16[4,32], index: 10, kind: input, shape index: {}]
  %s11 = inlined_call_operand.vmem [shape: bf16[64,32], index: 11, kind: input, shape index: {}]
  %s12 = inlined_call_operand.vmem [shape: f32[3,64], index: 12, kind: input, shape index: {}]
  %s13 = inlined_call_operand.vmem [shape: f32[2,96], index: 13, kind: input, shape index: {}]
  %s14 = inlined_call_operand.vmem [shape: f32[3,32], index: 14, kind: input, shape index: {}]
  %s15 = inlined_call_operand.vmem [shape: bf16[32,64], index: 15, kind: input, shape index: {}]
  %s16 = inlined_call_operand.vmem [shape: bf16[32,64], index: 16, kind: input, shape index: {}]
  %s17 = inlined_call_operand.vmem [shape: bf16[128,64], index: 17, kind: input, shape index: {}]
  %s18 = inlined_call_operand.vmem [shape: bf16[128,64], index: 18, kind: input, shape index: {}]
  %s19 = inlined_call_operand.vmem [shape: bf16[64,96], index: 19, kind: input, shape index: {}]
  %s20 = inlined_call_operand.vmem [shape: bf16[32,32], index: 20, kind: input, shape index: {}]
  %s21 = inlined_call_operand.vmem [shape: bf16[32,32], index: 21, kind: input, shape index: {}]
  %s22 = inlined_call_operand.vmem [shape: bf16[64,32], index: 22, kind: input, shape index: {}]
  %s23 = inlined_call_operand.vmem [shape: f32[3,64], index: 23, kind: input, shape index: {}]
  %s24 = inlined_call_operand.vmem [shape: f32[2,96], index: 24, kind: input, shape index: {}]
  %s25 = inlined_call_operand.vmem [shape: f32[3,32], index: 25, kind: input, shape index: {}]
  %s26 = inlined_call_operand.hbm [shape: f32[8,32], index: 26, kind: output, shape index: {0}]
  %s27 = inlined_call_operand.hbm [shape: f32[16,32], index: 27, kind: output, shape index: {1}]
  %28 = xla_tuple %s26, %s27
  %s29 = sld [smem:[#allocation0]]
  $region122: #{tpu_custom_call.1} parent=0
    _
  %s31 = ssub.s32 1, %s29
  %s32 = scalar_select 0, %s31, %s29
  $region1: #{tpu_custom_call.1} parent=0
    #allocation2 [shape = 'u8[4096]{0}', space=vmem, size = 0x1000, scoped, tag = 'output window, operand 0, single buffered']
    #allocation3 [shape = 's32[1]{0}', space=sflag, size = 0x4, scoped, tag = 'scoped memory for tpu_custom_call.1']
    #allocation4 [shape = 'u8[8192]{0}', space=vmem, size = 0x2000, scoped, tag = 'output window, operand 1, single buffered']
    #allocation5 [shape = 's32[1]{0}', space=sflag, size = 0x4, scoped, tag = 'scoped memory for tpu_custom_call.1']
    %33 = vsyncpa [#allocation3], 0
    %34 = vsyncpa [#allocation5], 0
    // Predicated region
    $region2: #{tpu_custom_call.1} parent=1 // pred_check
      _
    $region3: #{tpu_custom_call.1} parent=1 // pred_check_branch
      %36 = sbr.rel (0) target = $region5
    $region4: #{tpu_custom_call.1} parent=1 // pred_region
      _
    $region5: #{tpu_custom_call.1} parent=1 // pred_fallthru
      _
    // Predicated region
    $region6: #{tpu_custom_call.1} parent=1 // pred_check
      _
    $region7: #{tpu_custom_call.1} parent=1 // pred_check_branch
      %38 = sbr.rel (0) target = $region9
    $region8: #{tpu_custom_call.1} parent=1 // pred_region
      _
    $region9: #{tpu_custom_call.1} parent=1 // pred_fallthru
      _
    // Predicated region
    $region10: #{tpu_custom_call.1} parent=1 // pred_check
      _
    $region11: #{tpu_custom_call.1} parent=1 // pred_check_branch
      %40 = sbr.rel (0) target = $region13
    $region12: #{tpu_custom_call.1} parent=1 // pred_region
      _
    $region13: #{tpu_custom_call.1} parent=1 // pred_fallthru
      _
    // Predicated region
    $region14: #{tpu_custom_call.1} parent=1 // pred_check
      _
    $region15: #{tpu_custom_call.1} parent=1 // pred_check_branch
      %42 = sbr.rel (0) target = $region17
    $region16: #{tpu_custom_call.1} parent=1 // pred_region
      _
    $region17: #{tpu_custom_call.1} parent=1 // pred_fallthru
      _
    // Predicated region
    $region18: #{tpu_custom_call.1} parent=1 // pred_check
      _
    $region19: #{tpu_custom_call.1} parent=1 // pred_check_branch
      %44 = sbr.rel (0) target = $region21
    $region20: #{tpu_custom_call.1} parent=1 // pred_region
      _
    $region21: #{tpu_custom_call.1} parent=1 // pred_fallthru
      _
    // Predicated region
    $region22: #{tpu_custom_call.1} parent=1 // pred_check
      _
    $region23: #{tpu_custom_call.1} parent=1 // pred_check_branch
      %46 = sbr.rel (0) target = $region25
    $region24: #{tpu_custom_call.1} parent=1 // pred_region
      _
    $region25: #{tpu_custom_call.1} parent=1 // pred_fallthru
      _
    // Predicated region
    $region26: #{tpu_custom_call.1} parent=1 // pred_check
      _
    $region27: #{tpu_custom_call.1} parent=1 // pred_check_branch
      %48 = sbr.rel (0) target = $region29
    $region28: #{tpu_custom_call.1} parent=1 // pred_region
      _
    $region29: #{tpu_custom_call.1} parent=1 // pred_fallthru
      _
    // Predicated region
    $region30: #{tpu_custom_call.1} parent=1 // pred_check
      _
    $region31: #{tpu_custom_call.1} parent=1 // pred_check_branch
      %50 = sbr.rel (0) target = $region33
    $region32: #{tpu_custom_call.1} parent=1 // pred_region
      _
    $region33: #{tpu_custom_call.1} parent=1 // pred_fallthru
      _
    // Predicated region
    $region34: #{tpu_custom_call.1} parent=1 // pred_check
      _
    $region35: #{tpu_custom_call.1} parent=1 // pred_check_branch
      %52 = sbr.rel (0) target = $region37
    $region36: #{tpu_custom_call.1} parent=1 // pred_region
      _
    $region37: #{tpu_custom_call.1} parent=1 // pred_fallthru
      _
    // Predicated region
    $region38: #{tpu_custom_call.1} parent=1 // pred_check
      _
    $region39: #{tpu_custom_call.1} parent=1 // pred_check_branch
      %54 = sbr.rel (0) target = $region41
    $region40: #{tpu_custom_call.1} parent=1 // pred_region
      _
    $region41: #{tpu_custom_call.1} parent=1 // pred_fallthru
      _
    // Predicated region
    $region42: #{tpu_custom_call.1} parent=1 // pred_check
      _
    $region43: #{tpu_custom_call.1} parent=1 // pred_check_branch
      %56 = sbr.rel (0) target = $region45
    $region44: #{tpu_custom_call.1} parent=1 // pred_region
      _
    $region45: #{tpu_custom_call.1} parent=1 // pred_fallthru
      _
    // Predicated region
    $region46: #{tpu_custom_call.1} parent=1 // pred_check
      _
    $region47: #{tpu_custom_call.1} parent=1 // pred_check_branch
      %58 = sbr.rel (0) target = $region49
    $region48: #{tpu_custom_call.1} parent=1 // pred_region
      _
    $region49: #{tpu_custom_call.1} parent=1 // pred_fallthru
      _
    // Predicated region
    $region50: #{tpu_custom_call.1} parent=1 // pred_check
      _
    $region51: #{tpu_custom_call.1} parent=1 // pred_check_branch
      %60 = sbr.rel (0) target = $region53
    $region52: #{tpu_custom_call.1} parent=1 // pred_region
      _
    $region53: #{tpu_custom_call.1} parent=1 // pred_fallthru
      _
    // Predicated region
    $region54: #{tpu_custom_call.1} parent=1 // pred_check
      _
    $region55: #{tpu_custom_call.1} parent=1 // pred_check_branch
      %62 = sbr.rel (0) target = $region57
    $region56: #{tpu_custom_call.1} parent=1 // pred_region
      _
    $region57: #{tpu_custom_call.1} parent=1 // pred_fallthru
      _
    // Predicated region
    $region58: #{tpu_custom_call.1} parent=1 // pred_check
      _
    $region59: #{tpu_custom_call.1} parent=1 // pred_check_branch
      %64 = sbr.rel (0) target = $region61
    $region60: #{tpu_custom_call.1} parent=1 // pred_region
      _
    $region61: #{tpu_custom_call.1} parent=1 // pred_fallthru
      _
    // Predicated region
    $region62: #{tpu_custom_call.1} parent=1 // pred_check
      _
    $region63: #{tpu_custom_call.1} parent=1 // pred_check_branch
      %66 = sbr.rel (0) target = $region65
    $region64: #{tpu_custom_call.1} parent=1 // pred_region
      _
    $region65: #{tpu_custom_call.1} parent=1 // pred_fallthru
      _
    // Predicated region
    $region66: #{tpu_custom_call.1} parent=1 // pred_check
      _
    $region67: #{tpu_custom_call.1} parent=1 // pred_check_branch
      %68 = sbr.rel (0) target = $region69
    $region68: #{tpu_custom_call.1} parent=1 // pred_region
      _
    $region69: #{tpu_custom_call.1} parent=1 // pred_fallthru
      _
    // Predicated region
    $region70: #{tpu_custom_call.1} parent=1 // pred_check
      _
    $region71: #{tpu_custom_call.1} parent=1 // pred_check_branch
      %70 = sbr.rel (0) target = $region73
    $region72: #{tpu_custom_call.1} parent=1 // pred_region
      _
    $region73: #{tpu_custom_call.1} parent=1 // pred_fallthru
      _
    // Predicated region
    $region74: #{tpu_custom_call.1} parent=1 // pred_check
      _
    $region75: #{tpu_custom_call.1} parent=1 // pred_check_branch
      %72 = sbr.rel (0) target = $region77
    $region76: #{tpu_custom_call.1} parent=1 // pred_region
      _
    $region77: #{tpu_custom_call.1} parent=1 // pred_fallthru
      _
    // Predicated region
    $region78: #{tpu_custom_call.1} parent=1 // pred_check
      _
    $region79: #{tpu_custom_call.1} parent=1 // pred_check_branch
      %74 = sbr.rel (0) target = $region81
    $region80: #{tpu_custom_call.1} parent=1 // pred_region
      _
    $region81: #{tpu_custom_call.1} parent=1 // pred_fallthru
      _
    // Predicated region
    $region82: #{tpu_custom_call.1} parent=1 // pred_check
      _
    $region83: #{tpu_custom_call.1} parent=1 // pred_check_branch
      %76 = sbr.rel (0) target = $region85
    $region84: #{tpu_custom_call.1} parent=1 // pred_region
      _
    $region85: #{tpu_custom_call.1} parent=1 // pred_fallthru
      _
    // Predicated region
    $region86: #{tpu_custom_call.1} parent=1 // pred_check
      _
    $region87: #{tpu_custom_call.1} parent=1 // pred_check_branch
      %78 = sbr.rel (0) target = $region89
    $region88: #{tpu_custom_call.1} parent=1 // pred_region
      _
    $region89: #{tpu_custom_call.1} parent=1 // pred_fallthru
      _
    // Predicated region
    $region90: #{tpu_custom_call.1} parent=1 // pred_check
      _
    $region91: #{tpu_custom_call.1} parent=1 // pred_check_branch
      %80 = sbr.rel (0) target = $region93
    $region92: #{tpu_custom_call.1} parent=1 // pred_region
      _
    $region93: #{tpu_custom_call.1} parent=1 // pred_fallthru
      _
    // Predicated region
    $region94: #{tpu_custom_call.1} parent=1 // pred_check
      _
    $region95: #{tpu_custom_call.1} parent=1 // pred_check_branch
      %82 = sbr.rel (0) target = $region97
    $region96: #{tpu_custom_call.1} parent=1 // pred_region
      _
    $region97: #{tpu_custom_call.1} parent=1 // pred_fallthru
      _
    // Predicated region
    $region98: #{tpu_custom_call.1} parent=1 // pred_check
      _
    $region99: #{tpu_custom_call.1} parent=1 // pred_check_branch
      %84 = sbr.rel (0) target = $region101
    $region100: #{tpu_custom_call.1} parent=1 // pred_region
      _
    $region101: #{tpu_custom_call.1} parent=1 // pred_fallthru
      _
    // Predicated region
    $region102: #{tpu_custom_call.1} parent=1 // pred_check
      _
    $region103: #{tpu_custom_call.1} parent=1 // pred_check_branch
      %86 = sbr.rel (0) target = $region105
    $region104: #{tpu_custom_call.1} parent=1 // pred_region
      _
    $region105: #{tpu_custom_call.1} parent=1 // pred_fallthru
      _
    %v88 = vld [vmem:[%s2] sm:$0xf]
    %v89 = vld [vmem:[%s2 + $0x4] sm:$0xf]
    %v90 = vld [vmem:[%s3] sm:$0xf]
    %v91 = vld [vmem:[%s3 + $0x4] sm:$0xf]
    %v92 = vld [vmem:[%s0] sm:$0xff]
    %v93 = vld [vmem:[%s1] sm:$0xff]
    %v94 = vld [vmem:[%s1 + $0x8] sm:$0xff]
    %v95 = vld [vmem:[%s4] sm:$0x3]
    %v96 = vld [vmem:[%s5] sm:$0x3]
    %v97 = vld [vmem:[%s6] sm:$0xf]
    %v98 = vld [vmem:[%s6 + $0x4] sm:$0xf]
    %v99 = vld [vmem:[%s6 + $0x8] sm:$0xf]
    %v100 = vld [vmem:[%s6 + $0xc] sm:$0xf]
    %v101 = vld [vmem:[%s6 + $0x10] sm:$0xf]
    %v102 = vld [vmem:[%s6 + $0x14] sm:$0xf]
    %v103 = vld [vmem:[%s6 + $0x18] sm:$0xf]
    %v104 = vld [vmem:[%s6 + $0x1c] sm:$0xf]
    %v105 = vld [vmem:[%s6 + $0x20] sm:$0xf]
    %v106 = vld [vmem:[%s6 + $0x24] sm:$0xf]
    %v107 = vld [vmem:[%s6 + $0x28] sm:$0xf]
    %v108 = vld [vmem:[%s6 + $0x2c] sm:$0xf]
    %v109 = vld [vmem:[%s6 + $0x30] sm:$0xf]
    %v110 = vld [vmem:[%s6 + $0x34] sm:$0xf]
    %v111 = vld [vmem:[%s6 + $0x38] sm:$0xf]
    %v112 = vld [vmem:[%s6 + $0x3c] sm:$0xf]
    %v113 = vld [vmem:[%s7] sm:$0xf]
    %v114 = vld [vmem:[%s7 + $0x4] sm:$0xf]
    %v115 = vld [vmem:[%s7 + $0x8] sm:$0xf]
    %v116 = vld [vmem:[%s7 + $0xc] sm:$0xf]
    %v117 = vld [vmem:[%s7 + $0x10] sm:$0xf]
    %v118 = vld [vmem:[%s7 + $0x14] sm:$0xf]
    %v119 = vld [vmem:[%s7 + $0x18] sm:$0xf]
    %v120 = vld [vmem:[%s7 + $0x1c] sm:$0xf]
    %v121 = vld [vmem:[%s7 + $0x20] sm:$0xf]
    %v122 = vld [vmem:[%s7 + $0x24] sm:$0xf]
    %v123 = vld [vmem:[%s7 + $0x28] sm:$0xf]
    %v124 = vld [vmem:[%s7 + $0x2c] sm:$0xf]
    %v125 = vld [vmem:[%s7 + $0x30] sm:$0xf]
    %v126 = vld [vmem:[%s7 + $0x34] sm:$0xf]
    %v127 = vld [vmem:[%s7 + $0x38] sm:$0xf]
    %v128 = vld [vmem:[%s7 + $0x3c] sm:$0xf]
    %v129 = vld [vmem:[%s8] sm:$0xf]
    %v130 = vld [vmem:[%s8 + $0x4] sm:$0xf]
    %v131 = vld [vmem:[%s8 + $0x8] sm:$0xf]
    %v132 = vld [vmem:[%s8 + $0xc] sm:$0xf]
    %v133 = vld [vmem:[%s8 + $0x10] sm:$0xf]
    %v134 = vld [vmem:[%s8 + $0x14] sm:$0xf]
    %v135 = vld [vmem:[%s8 + $0x18] sm:$0xf]
    %v136 = vld [vmem:[%s8 + $0x1c] sm:$0xf]
    %v137 = vld [vmem:[%s9] sm:$0x3]
    %v138 = vld [vmem:[%s10] sm:$0x3]
    %v139 = vld [vmem:[%s11] sm:$0xf]
    %v140 = vld [vmem:[%s11 + $0x4] sm:$0xf]
    %v141 = vld [vmem:[%s11 + $0x8] sm:$0xf]
    %v142 = vld [vmem:[%s11 + $0xc] sm:$0xf]
    %v143 = vld [vmem:[%s11 + $0x10] sm:$0xf]
    %v144 = vld [vmem:[%s11 + $0x14] sm:$0xf]
    %v145 = vld [vmem:[%s11 + $0x18] sm:$0xf]
    %v146 = vld [vmem:[%s11 + $0x1c] sm:$0xf]
    %v147 = vld [vmem:[%s12] sm:$0x1]
    %v148 = vld [vmem:[%s12 + $0x1] sm:$0x1]
    %v149 = vld [vmem:[%s12 + $0x2] sm:$0x1]
    %v150 = vld [vmem:[%s13] sm:$0x1]
    %v151 = vld [vmem:[%s13 + $0x1] sm:$0x1]
    %v152 = vld [vmem:[%s14] sm:$0x1]
    %v153 = vld [vmem:[%s14 + $0x1] sm:$0x1]
    %v154 = vld [vmem:[%s14 + $0x2] sm:$0x1]
    %v155 = vpack.c.bf16 %v92, %v92
    %v156 = vlaneseq
    %v157 = vshrl.u32 %v156, 7
    %v158 = vsub.s32 0, %v157
    %v159 = vrot.slane %v147, %v158
    %vm160 = vcmask 31744
    %v162 = vsel %vm160, %v155, 0
    %vm164 = vcmask 1041408
    %v166 = vsel %vm164, %v95, 0
    %168 = vmatprep.subr.bf16.mxu0 0
    %169 = vmatpush1.bf16.msra.mxu0 0
    %170 = vmatprep.subr.bf16.mxu0 0
    %171 = vmatpush1.bf16.msra.mxu0 0
    %172 = vmatprep.subr.bf16.mxu0 0
    %173 = vmatpush1.bf16.msra.mxu0 0
    %174 = vmatprep.subr.bf16.mxu0 0
    %175 = vmatpush1.bf16.msra.mxu0 0
    %176 = vmatprep.subr.bf16.mxu0 0
    %177 = vmatpush1.bf16.msra.mxu0 0
    %178 = vmatprep.subr.bf16.mxu0 0
    %179 = vmatpush1.bf16.msra.mxu0 0
    %180 = vmatprep.subr.bf16.mxu0 0
    %181 = vmatpush1.bf16.msra.mxu0 0
    %182 = vmatprep.subr.bf16.mxu0 0
    %183 = vmatpush1.bf16.msra.mxu0 %v166
    %184 = vmatprep.subr.bf16.mxu0 0
    %185 = vmatpush2.bf16.msra.mxu0 0
    %186 = vmatprep.subr.bf16.mxu0 0
    %187 = vmatpush2.bf16.msra.mxu0 0
    %188 = vmatprep.subr.bf16.mxu0 0
    %189 = vmatpush2.bf16.msra.mxu0 0
    %190 = vmatprep.subr.bf16.mxu0 0
    %191 = vmatpush2.bf16.msra.mxu0 0
    %192 = vmatprep.subr.bf16.mxu0 0
    %193 = vmatpush2.bf16.msra.mxu0 0
    %194 = vmatprep.subr.bf16.mxu0 0
    %195 = vmatpush2.bf16.msra.mxu0 0
    %196 = vmatprep.subr.bf16.mxu0 0
    %197 = vmatpush2.bf16.msra.mxu0 0
    %198 = vmatprep.subr.bf16.mxu0 0
    %199 = vmatpush2.bf16.msra.mxu0 0
    %200 = vmatprep.mubr.bf16.mxu0 0
    %201 = vmatmul.mubr.bf16.gmra.mxu0 %v162
    %v202 = vpop.f32.mrf.mxu0
    %v203 = vadd.f32 %v159, %v202
    %v204 = vpop.f32.mrf.mxu0
    %v205 = vpop.f32.mrf.mxu0
    %v206 = vpop.f32.mrf.mxu0
    %207 = vdwg.mxu0
    %v208 = vpack.c.bf16 %v94, %v93
    %v209 = vlaneseq
    %v210 = vshrl.u32 %v209, 7
    %v211 = vsub.s32 0, %v210
    %v212 = vrot.slane %v148, %v211
    %v214 = vsel %vm160, %v208, 0
    %v217 = vsel %vm164, %v96, 0
    %219 = vmatprep.subr.bf16.mxu0 0
    %220 = vmatpush1.bf16.msra.mxu0 0
    %221 = vmatprep.subr.bf16.mxu0 0
    %222 = vmatpush1.bf16.msra.mxu0 0
    %223 = vmatprep.subr.bf16.mxu0 0
    %224 = vmatpush1.bf16.msra.mxu0 0
    %225 = vmatprep.subr.bf16.mxu0 0
    %226 = vmatpush1.bf16.msra.mxu0 0
    %227 = vmatprep.subr.bf16.mxu0 0
    %228 = vmatpush1.bf16.msra.mxu0 0
    %229 = vmatprep.subr.bf16.mxu0 0
    %230 = vmatpush1.bf16.msra.mxu0 0
    %231 = vmatprep.subr.bf16.mxu0 0
    %232 = vmatpush1.bf16.msra.mxu0 0
    %233 = vmatprep.subr.bf16.mxu0 0
    %234 = vmatpush1.bf16.msra.mxu0 %v217
    %235 = vmatprep.subr.bf16.mxu0 0
    %236 = vmatpush2.bf16.msra.mxu0 0
    %237 = vmatprep.subr.bf16.mxu0 0
    %238 = vmatpush2.bf16.msra.mxu0 0
    %239 = vmatprep.subr.bf16.mxu0 0
    %240 = vmatpush2.bf16.msra.mxu0 0
    %241 = vmatprep.subr.bf16.mxu0 0
    %242 = vmatpush2.bf16.msra.mxu0 0
    %243 = vmatprep.subr.bf16.mxu0 0
    %244 = vmatpush2.bf16.msra.mxu0 0
    %245 = vmatprep.subr.bf16.mxu0 0
    %246 = vmatpush2.bf16.msra.mxu0 0
    %247 = vmatprep.subr.bf16.mxu0 0
    %248 = vmatpush2.bf16.msra.mxu0 0
    %249 = vmatprep.subr.bf16.mxu0 0
    %250 = vmatpush2.bf16.msra.mxu0 0
    %251 = vmatprep.mubr.bf16.mxu0 0
    %252 = vmatmul.mubr.bf16.gmra.mxu0 %v214
    %v253 = vpop.f32.mrf.mxu0
    %v254 = vadd.f32 %v212, %v253
    %v255 = vpop.f32.mrf.mxu0
    %v256 = vpop.f32.mrf.mxu0
    %v257 = vadd.f32 %v212, %v256
    %v258 = vpop.f32.mrf.mxu0
    %259 = vdwg.mxu0
    %v260 = vpack.c.bf16 %v203, %v203
    %v263 = vunpack.c.l.b16 %v88
    %v264 = vunpack.c.l.b16 %v89
    %v265 = vpack.c.b16 %v264, %v263
    %vm266 = vcmask 64512
    %v268 = vsel %vm266, %v265, 0
    %vm270 = vcmask 1043456
    %v272 = vsel %vm270, %v260, 0
    %274 = vmatprep.subr.bf16.mxu0 0
    %275 = vmatpush1.bf16.msra.mxu0 0
    %276 = vmatprep.subr.bf16.mxu0 0
    %277 = vmatpush1.bf16.msra.mxu0 0
    %278 = vmatprep.subr.bf16.mxu0 0
    %279 = vmatpush1.bf16.msra.mxu0 0
    %280 = vmatprep.subr.bf16.mxu0 0
    %281 = vmatpush1.bf16.msra.mxu0 0
    %282 = vmatprep.subr.bf16.mxu0 0
    %283 = vmatpush1.bf16.msra.mxu0 0
    %284 = vmatprep.subr.bf16.mxu0 0
    %285 = vmatpush1.bf16.msra.mxu0 0
    %286 = vmatprep.subr.bf16.mxu0 0
    %287 = vmatpush1.bf16.msra.mxu0 0
    %288 = vmatprep.subr.bf16.mxu0 0
    %289 = vmatpush1.bf16.msra.mxu0 %v272
    %290 = vmatprep.subr.bf16.mxu0 0
    %291 = vmatpush2.bf16.msra.mxu0 0
    %292 = vmatprep.subr.bf16.mxu0 0
    %293 = vmatpush2.bf16.msra.mxu0 0
    %294 = vmatprep.subr.bf16.mxu0 0
    %295 = vmatpush2.bf16.msra.mxu0 0
    %296 = vmatprep.subr.bf16.mxu0 0
    %297 = vmatpush2.bf16.msra.mxu0 0
    %298 = vmatprep.subr.bf16.mxu0 0
    %299 = vmatpush2.bf16.msra.mxu0 0
    %300 = vmatprep.subr.bf16.mxu0 0
    %301 = vmatpush2.bf16.msra.mxu0 0
    %302 = vmatprep.subr.bf16.mxu0 0
    %303 = vmatpush2.bf16.msra.mxu0 0
    %304 = vmatprep.subr.bf16.mxu0 0
    %305 = vmatpush2.bf16.msra.mxu0 0
    %306 = vmatprep.mubr.bf16.mxu0 0
    %307 = vmatmul.mubr.bf16.gmra.mxu0 %v268
    %v308 = vpop.f32.mrf.mxu0
    %v309 = vadd.f32 0.0, %v308
    %v310 = vpop.f32.mrf.mxu0
    %v311 = vpop.f32.mrf.mxu0
    %v312 = vadd.f32 0.0, %v311
    %v313 = vpop.f32.mrf.mxu0
    %314 = vdwg.mxu0
    %v317 = vunpack.c.l.b16 %v90
    %v318 = vunpack.c.l.b16 %v91
    %v319 = vpack.c.b16 %v318, %v317
    %v321 = vsel %vm266, %v319, 0
    %323 = vmatprep.subr.bf16.mxu0 0
    %324 = vmatpush1.bf16.msra.mxu0 0
    %325 = vmatprep.subr.bf16.mxu0 0
    %326 = vmatpush1.bf16.msra.mxu0 0
    %327 = vmatprep.subr.bf16.mxu0 0
    %328 = vmatpush1.bf16.msra.mxu0 0
    %329 = vmatprep.subr.bf16.mxu0 0
    %330 = vmatpush1.bf16.msra.mxu0 0
    %331 = vmatprep.subr.bf16.mxu0 0
    %332 = vmatpush1.bf16.msra.mxu0 0
    %333 = vmatprep.subr.bf16.mxu0 0
    %334 = vmatpush1.bf16.msra.mxu0 0
    %335 = vmatprep.subr.bf16.mxu0 0
    %336 = vmatpush1.bf16.msra.mxu0 0
    %337 = vmatprep.subr.bf16.mxu0 0
    %338 = vmatpush1.bf16.msra.mxu0 %v272
    %339 = vmatprep.subr.bf16.mxu0 0
    %340 = vmatpush2.bf16.msra.mxu0 0
    %341 = vmatprep.subr.bf16.mxu0 0
    %342 = vmatpush2.bf16.msra.mxu0 0
    %343 = vmatprep.subr.bf16.mxu0 0
    %344 = vmatpush2.bf16.msra.mxu0 0
    %345 = vmatprep.subr.bf16.mxu0 0
    %346 = vmatpush2.bf16.msra.mxu0 0
    %347 = vmatprep.subr.bf16.mxu0 0
    %348 = vmatpush2.bf16.msra.mxu0 0
    %349 = vmatprep.subr.bf16.mxu0 0
    %350 = vmatpush2.bf16.msra.mxu0 0
    %351 = vmatprep.subr.bf16.mxu0 0
    %352 = vmatpush2.bf16.msra.mxu0 0
    %353 = vmatprep.subr.bf16.mxu0 0
    %354 = vmatpush2.bf16.msra.mxu0 0
    %355 = vmatprep.mubr.bf16.mxu0 0
    %356 = vmatmul.mubr.bf16.gmra.mxu0 %v321
    %v357 = vpop.f32.mrf.mxu0
    %v358 = vadd.f32 0.0, %v357
    %v359 = vpop.f32.mrf.mxu0
    %v360 = vpop.f32.mrf.mxu0
    %v361 = vadd.f32 0.0, %v360
    %v362 = vpop.f32.mrf.mxu0
    %363 = vdwg.mxu0
    %v364 = vadd.f32 %v309, %v358
    %v365 = vadd.f32 %v312, %v361
    %v366 = vpack.c.bf16 %v365, %v364
    %v375 = vunpack.c.l.b16 %v97
    %v376 = vunpack.c.l.b16 %v98
    %v377 = vunpack.c.l.b16 %v99
    %v378 = vunpack.c.l.b16 %v100
    %v379 = vunpack.c.l.b16 %v101
    %v380 = vunpack.c.l.b16 %v102
    %v381 = vunpack.c.l.b16 %v103
    %v382 = vunpack.c.l.b16 %v104
    %v383 = vpack.c.b16 %v376, %v375
    %v384 = vpack.c.b16 %v378, %v377
    %v385 = vpack.c.b16 %v380, %v379
    %v386 = vpack.c.b16 %v382, %v381
    %vm391 = vcmask 523264
    %v393 = vsel %vm391, %v366, 0
    %395 = vmatprep.subr.bf16.mxu0 0
    %396 = vmatpush1.bf16.msra.mxu0 0
    %397 = vmatprep.subr.bf16.mxu0 0
    %398 = vmatpush1.bf16.msra.mxu0 0
    %399 = vmatprep.subr.bf16.mxu0 0
    %400 = vmatpush1.bf16.msra.mxu0 0
    %401 = vmatprep.subr.bf16.mxu0 0
    %402 = vmatpush1.bf16.msra.mxu0 0
    %403 = vmatprep.subr.bf16.mxu0 0
    %404 = vmatpush1.bf16.msra.mxu0 %v386
    %405 = vmatprep.subr.bf16.mxu0 0
    %406 = vmatpush1.bf16.msra.mxu0 %v385
    %407 = vmatprep.subr.bf16.mxu0 0
    %408 = vmatpush1.bf16.msra.mxu0 %v384
    %409 = vmatprep.subr.bf16.mxu0 0
    %410 = vmatpush1.bf16.msra.mxu0 %v383
    %411 = vmatprep.subr.bf16.mxu0 0
    %412 = vmatpush2.bf16.msra.mxu0 0
    %413 = vmatprep.subr.bf16.mxu0 0
    %414 = vmatpush2.bf16.msra.mxu0 0
    %415 = vmatprep.subr.bf16.mxu0 0
    %416 = vmatpush2.bf16.msra.mxu0 0
    %417 = vmatprep.subr.bf16.mxu0 0
    %418 = vmatpush2.bf16.msra.mxu0 0
    %419 = vmatprep.subr.bf16.mxu0 0
    %420 = vmatpush2.bf16.msra.mxu0 0
    %421 = vmatprep.subr.bf16.mxu0 0
    %422 = vmatpush2.bf16.msra.mxu0 0
    %423 = vmatprep.subr.bf16.mxu0 0
    %424 = vmatpush2.bf16.msra.mxu0 0
    %425 = vmatprep.subr.bf16.mxu0 0
    %426 = vmatpush2.bf16.msra.mxu0 0
    %427 = vmatprep.mubr.bf16.mxu0 0
    %428 = vmatmul.mubr.bf16.gmra.mxu0 %v393
    %v429 = vpop.f32.mrf.mxu0
    %v430 = vadd.f32 0.0, %v429
    %v431 = vpop.f32.mrf.mxu0
    %v432 = vpop.f32.mrf.mxu0
    %v433 = vadd.f32 0.0, %v432
    %v434 = vpop.f32.mrf.mxu0
    %435 = vdwg.mxu0
    %vm436 = vcmp.ge.f32.partialorder %v430, 0.0
    %vm437 = vcmp.ge.f32.partialorder %v433, 0.0
    %v438 = vmul.f32 %v430, 0.2
    %v439 = vmul.f32 %v433, 0.2
    %v440 = vsel %vm436, %v430, %v438
    %v441 = vsel %vm437, %v433, %v439
    %v442 = vsel %vm391, %v440, -inf
    %v443 = vsel %vm391, %v441, -inf
    %v444 = vmax.f32 %v442, %v443
    %v445 = vrot.slane %v444, 4
    %v446 = vmax.f32 %v444, %v445
    %v447 = vrot.slane %v446, 2
    %v448 = vmax.f32 %v446, %v447
    %v449 = vrot.slane %v448, 1
    %v450 = vmax.f32 %v448, %v449
    %v451 = vsub.f32 %v440, %v450
    %v452 = vsub.f32 %v441, %v450
    %v453 = vmul.f32 %v451, 1.442695
    %v454 = vpow.pop %v453
    %v455 = vmul.f32 %v452, 1.442695
    %v456 = vpow.pop %v455
    %v457 = vpack.c.bf16 %v456, %v454
    %459 = vxpose.xlu0.c.b16.start [1/8] %v319, 128
    %460 = vxpose.xlu0.c.b16.cont [2/8] 0, 128
    %461 = vxpose.xlu0.c.b16.cont [3/8] 0, 128
    %462 = vxpose.xlu0.c.b16.cont [4/8] 0, 128
    %463 = vxpose.xlu0.c.b16.cont [5/8] 0, 128
    %464 = vxpose.xlu0.c.b16.cont [6/8] 0, 128
    %465 = vxpose.xlu0.c.b16.cont [7/8] 0, 128
    %466 = vxpose.xlu0.c.b16.end [8/8] 0, 128
    %v467 = vpop.trf.xlu0
    %v468 = vpop.trf.xlu0
    %v469 = vpop.trf.xlu0
    %v470 = vpop.trf.xlu0
    %v471 = vpop.trf.xlu0
    %v472 = vpop.trf.xlu0
    %v473 = vpop.trf.xlu0
    %v474 = vpop.trf.xlu0
    %vm475 = vcmask 130048
    %v477 = vsel %vm475, %v467, 0
    %479 = vmatprep.subr.bf16.mxu0 0
    %480 = vmatpush1.bf16.msra.mxu0 0
    %481 = vmatprep.subr.bf16.mxu0 0
    %482 = vmatpush1.bf16.msra.mxu0 0
    %483 = vmatprep.subr.bf16.mxu0 0
    %484 = vmatpush1.bf16.msra.mxu0 0
    %485 = vmatprep.subr.bf16.mxu0 0
    %486 = vmatpush1.bf16.msra.mxu0 0
    %487 = vmatprep.subr.bf16.mxu0 0
    %488 = vmatpush1.bf16.msra.mxu0 0
    %489 = vmatprep.subr.bf16.mxu0 0
    %490 = vmatpush1.bf16.msra.mxu0 0
    %491 = vmatprep.subr.bf16.mxu0 0
    %492 = vmatpush1.bf16.msra.mxu0 0
    %493 = vmatprep.subr.bf16.mxu0 0
    %494 = vmatpush1.bf16.msra.mxu0 %v457
    %495 = vmatprep.subr.bf16.mxu0 0
    %496 = vmatpush2.bf16.msra.mxu0 0
    %497 = vmatprep.subr.bf16.mxu0 0
    %498 = vmatpush2.bf16.msra.mxu0 0
    %499 = vmatprep.subr.bf16.mxu0 0
    %500 = vmatpush2.bf16.msra.mxu0 0
    %501 = vmatprep.subr.bf16.mxu0 0
    %502 = vmatpush2.bf16.msra.mxu0 0
    %503 = vmatprep.subr.bf16.mxu0 0
    %504 = vmatpush2.bf16.msra.mxu0 0
    %505 = vmatprep.subr.bf16.mxu0 0
    %506 = vmatpush2.bf16.msra.mxu0 0
    %507 = vmatprep.subr.bf16.mxu0 0
    %508 = vmatpush2.bf16.msra.mxu0 0
    %509 = vmatprep.subr.bf16.mxu0 0
    %510 = vmatpush2.bf16.msra.mxu0 0
    %511 = vmatprep.mubr.bf16.mxu0 0
    %512 = vmatmul.mubr.bf16.gmra.mxu0 %v477
    %v513 = vpop.f32.mrf.mxu0
    %v514 = vadd.f32 0.0, %v513
    %v515 = vpop.f32.mrf.mxu0
    %v516 = vpop.f32.mrf.mxu0
    %v517 = vpop.f32.mrf.mxu0
    %518 = vdwg.mxu0
    %v519 = vpack.c.bf16 %v514, %v514
    %v521 = vsel %vm270, %v519, 0
    %523 = vmatprep.subr.bf16.mxu0 0
    %524 = vmatpush1.bf16.msra.mxu0 0
    %525 = vmatprep.subr.bf16.mxu0 0
    %526 = vmatpush1.bf16.msra.mxu0 0
    %527 = vmatprep.subr.bf16.mxu0 0
    %528 = vmatpush1.bf16.msra.mxu0 0
    %529 = vmatprep.subr.bf16.mxu0 0
    %530 = vmatpush1.bf16.msra.mxu0 0
    %531 = vmatprep.subr.bf16.mxu0 0
    %532 = vmatpush1.bf16.msra.mxu0 0
    %533 = vmatprep.subr.bf16.mxu0 0
    %534 = vmatpush1.bf16.msra.mxu0 0
    %535 = vmatprep.subr.bf16.mxu0 0
    %536 = vmatpush1.bf16.msra.mxu0 0
    %537 = vmatprep.subr.bf16.mxu0 0
    %538 = vmatpush1.bf16.msra.mxu0 %v521
    %539 = vmatprep.subr.bf16.mxu0 0
    %540 = vmatpush2.bf16.msra.mxu0 0
    %541 = vmatprep.subr.bf16.mxu0 0
    %542 = vmatpush2.bf16.msra.mxu0 0
    %543 = vmatprep.subr.bf16.mxu0 0
    %544 = vmatpush2.bf16.msra.mxu0 0
    %545 = vmatprep.subr.bf16.mxu0 0
    %546 = vmatpush2.bf16.msra.mxu0 0
    %547 = vmatprep.subr.bf16.mxu0 0
    %548 = vmatpush2.bf16.msra.mxu0 0
    %549 = vmatprep.subr.bf16.mxu0 0
    %550 = vmatpush2.bf16.msra.mxu0 0
    %551 = vmatprep.subr.bf16.mxu0 0
    %552 = vmatpush2.bf16.msra.mxu0 0
    %553 = vmatprep.subr.bf16.mxu0 0
    %554 = vmatpush2.bf16.msra.mxu0 0
    %555 = vmatprep.mubr.bf16.mxu0 0
    %556 = vmatmul.mubr.bf16.gmra.mxu0 %v321
    %v557 = vpop.f32.mrf.mxu0
    %v558 = vadd.f32 0.0, %v557
    %v559 = vpop.f32.mrf.mxu0
    %v560 = vpop.f32.mrf.mxu0
    %v561 = vadd.f32 0.0, %v560
    %v562 = vpop.f32.mrf.mxu0
    %563 = vdwg.mxu0
    %v564 = vmax.f32 %v558, 1e-30
    %v565 = vmax.f32 %v561, 1e-30
    %v566 = vrcp.pop %v564
    %v567 = vrcp.pop %v565
    %v568 = vmul.f32 %v454, %v566
    %v569 = vmul.f32 %v456, %v567
    %v570 = vmul.f32 %v309, %v568
    %v571 = vmul.f32 %v312, %v569
    %v572 = vpack.c.bf16 %v571, %v570
    %v573 = vadd.f32 %v309, %v254
    %v574 = vadd.f32 %v312, %v257
    %v575 = vpack.c.bf16 %v574, %v573
    %v584 = vunpack.c.l.b16 %v105
    %v585 = vunpack.c.l.b16 %v106
    %v586 = vunpack.c.l.b16 %v107
    %v587 = vunpack.c.l.b16 %v108
    %v588 = vunpack.c.l.b16 %v109
    %v589 = vunpack.c.l.b16 %v110
    %v590 = vunpack.c.l.b16 %v111
    %v591 = vunpack.c.l.b16 %v112
    %v592 = vpack.c.b16 %v585, %v584
    %v593 = vpack.c.b16 %v587, %v586
    %v594 = vpack.c.b16 %v589, %v588
    %v595 = vpack.c.b16 %v591, %v590
    %v601 = vsel %vm391, %v575, 0
    %603 = vmatprep.subr.bf16.mxu0 0
    %604 = vmatpush1.bf16.msra.mxu0 0
    %605 = vmatprep.subr.bf16.mxu0 0
    %606 = vmatpush1.bf16.msra.mxu0 0
    %607 = vmatprep.subr.bf16.mxu0 0
    %608 = vmatpush1.bf16.msra.mxu0 0
    %609 = vmatprep.subr.bf16.mxu0 0
    %610 = vmatpush1.bf16.msra.mxu0 0
    %611 = vmatprep.subr.bf16.mxu0 0
    %612 = vmatpush1.bf16.msra.mxu0 %v595
    %613 = vmatprep.subr.bf16.mxu0 0
    %614 = vmatpush1.bf16.msra.mxu0 %v594
    %615 = vmatprep.subr.bf16.mxu0 0
    %616 = vmatpush1.bf16.msra.mxu0 %v593
    %617 = vmatprep.subr.bf16.mxu0 0
    %618 = vmatpush1.bf16.msra.mxu0 %v592
    %619 = vmatprep.subr.bf16.mxu0 0
    %620 = vmatpush2.bf16.msra.mxu0 0
    %621 = vmatprep.subr.bf16.mxu0 0
    %622 = vmatpush2.bf16.msra.mxu0 0
    %623 = vmatprep.subr.bf16.mxu0 0
    %624 = vmatpush2.bf16.msra.mxu0 0
    %625 = vmatprep.subr.bf16.mxu0 0
    %626 = vmatpush2.bf16.msra.mxu0 0
    %627 = vmatprep.subr.bf16.mxu0 0
    %628 = vmatpush2.bf16.msra.mxu0 0
    %629 = vmatprep.subr.bf16.mxu0 0
    %630 = vmatpush2.bf16.msra.mxu0 0
    %631 = vmatprep.subr.bf16.mxu0 0
    %632 = vmatpush2.bf16.msra.mxu0 0
    %633 = vmatprep.subr.bf16.mxu0 0
    %634 = vmatpush2.bf16.msra.mxu0 0
    %635 = vmatprep.mubr.bf16.mxu0 0
    %636 = vmatmul.mubr.bf16.gmra.mxu0 %v601
    %v637 = vpop.f32.mrf.mxu0
    %v638 = vadd.f32 0.0, %v637
    %v639 = vpop.f32.mrf.mxu0
    %v640 = vpop.f32.mrf.mxu0
    %v641 = vadd.f32 0.0, %v640
    %v642 = vpop.f32.mrf.mxu0
    %643 = vdwg.mxu0
    %vm644 = vcmp.ge.f32.partialorder %v638, 0.0
    %vm645 = vcmp.ge.f32.partialorder %v641, 0.0
    %v646 = vmul.f32 %v638, 0.2
    %v647 = vmul.f32 %v641, 0.2
    %v648 = vsel %vm644, %v638, %v646
    %v649 = vsel %vm645, %v641, %v647
    %v650 = vsel %vm391, %v648, -inf
    %v651 = vsel %vm391, %v649, -inf
    %v652 = vmax.f32 %v650, %v651
    %v653 = vrot.slane %v652, 4
    %v654 = vmax.f32 %v652, %v653
    %v655 = vrot.slane %v654, 2
    %v656 = vmax.f32 %v654, %v655
    %v657 = vrot.slane %v656, 1
    %v658 = vmax.f32 %v656, %v657
    %v659 = vsub.f32 %v648, %v658
    %v660 = vsub.f32 %v649, %v658
    %v661 = vmul.f32 %v659, 1.442695
    %v662 = vpow.pop %v661
    %v663 = vmul.f32 %v660, 1.442695
    %v664 = vpow.pop %v663
    %v665 = vpack.c.bf16 %v664, %v662
    %666 = vmatprep.subr.bf16.mxu0 0
    %667 = vmatpush1.bf16.msra.mxu0 0
    %668 = vmatprep.subr.bf16.mxu0 0
    %669 = vmatpush1.bf16.msra.mxu0 0
    %670 = vmatprep.subr.bf16.mxu0 0
    %671 = vmatpush1.bf16.msra.mxu0 0
    %672 = vmatprep.subr.bf16.mxu0 0
    %673 = vmatpush1.bf16.msra.mxu0 0
    %674 = vmatprep.subr.bf16.mxu0 0
    %675 = vmatpush1.bf16.msra.mxu0 0
    %676 = vmatprep.subr.bf16.mxu0 0
    %677 = vmatpush1.bf16.msra.mxu0 0
    %678 = vmatprep.subr.bf16.mxu0 0
    %679 = vmatpush1.bf16.msra.mxu0 0
    %680 = vmatprep.subr.bf16.mxu0 0
    %681 = vmatpush1.bf16.msra.mxu0 %v665
    %682 = vmatprep.subr.bf16.mxu0 0
    %683 = vmatpush2.bf16.msra.mxu0 0
    %684 = vmatprep.subr.bf16.mxu0 0
    %685 = vmatpush2.bf16.msra.mxu0 0
    %686 = vmatprep.subr.bf16.mxu0 0
    %687 = vmatpush2.bf16.msra.mxu0 0
    %688 = vmatprep.subr.bf16.mxu0 0
    %689 = vmatpush2.bf16.msra.mxu0 0
    %690 = vmatprep.subr.bf16.mxu0 0
    %691 = vmatpush2.bf16.msra.mxu0 0
    %692 = vmatprep.subr.bf16.mxu0 0
    %693 = vmatpush2.bf16.msra.mxu0 0
    %694 = vmatprep.subr.bf16.mxu0 0
    %695 = vmatpush2.bf16.msra.mxu0 0
    %696 = vmatprep.subr.bf16.mxu0 0
    %697 = vmatpush2.bf16.msra.mxu0 0
    %698 = vmatprep.mubr.bf16.mxu0 0
    %699 = vmatmul.mubr.bf16.gmra.mxu0 %v477
    %v700 = vpop.f32.mrf.mxu0
    %v701 = vadd.f32 0.0, %v700
    %v702 = vpop.f32.mrf.mxu0
    %v703 = vpop.f32.mrf.mxu0
    %v704 = vpop.f32.mrf.mxu0
    %705 = vdwg.mxu0
    %v706 = vpack.c.bf16 %v701, %v701
    %v708 = vsel %vm270, %v706, 0
    %710 = vmatprep.subr.bf16.mxu0 0
    %711 = vmatpush1.bf16.msra.mxu0 0
    %712 = vmatprep.subr.bf16.mxu0 0
    %713 = vmatpush1.bf16.msra.mxu0 0
    %714 = vmatprep.subr.bf16.mxu0 0
    %715 = vmatpush1.bf16.msra.mxu0 0
    %716 = vmatprep.subr.bf16.mxu0 0
    %717 = vmatpush1.bf16.msra.mxu0 0
    %718 = vmatprep.subr.bf16.mxu0 0
    %719 = vmatpush1.bf16.msra.mxu0 0
    %720 = vmatprep.subr.bf16.mxu0 0
    %721 = vmatpush1.bf16.msra.mxu0 0
    %722 = vmatprep.subr.bf16.mxu0 0
    %723 = vmatpush1.bf16.msra.mxu0 0
    %724 = vmatprep.subr.bf16.mxu0 0
    %725 = vmatpush1.bf16.msra.mxu0 %v708
    %726 = vmatprep.subr.bf16.mxu0 0
    %727 = vmatpush2.bf16.msra.mxu0 0
    %728 = vmatprep.subr.bf16.mxu0 0
    %729 = vmatpush2.bf16.msra.mxu0 0
    %730 = vmatprep.subr.bf16.mxu0 0
    %731 = vmatpush2.bf16.msra.mxu0 0
    %732 = vmatprep.subr.bf16.mxu0 0
    %733 = vmatpush2.bf16.msra.mxu0 0
    %734 = vmatprep.subr.bf16.mxu0 0
    %735 = vmatpush2.bf16.msra.mxu0 0
    %736 = vmatprep.subr.bf16.mxu0 0
    %737 = vmatpush2.bf16.msra.mxu0 0
    %738 = vmatprep.subr.bf16.mxu0 0
    %739 = vmatpush2.bf16.msra.mxu0 0
    %740 = vmatprep.subr.bf16.mxu0 0
    %741 = vmatpush2.bf16.msra.mxu0 0
    %742 = vmatprep.mubr.bf16.mxu0 0
    %743 = vmatmul.mubr.bf16.gmra.mxu0 %v321
    %v744 = vpop.f32.mrf.mxu0
    %v745 = vadd.f32 0.0, %v744
    %v746 = vpop.f32.mrf.mxu0
    %v747 = vpop.f32.mrf.mxu0
    %v748 = vadd.f32 0.0, %v747
    %v749 = vpop.f32.mrf.mxu0
    %750 = vdwg.mxu0
    %v751 = vmax.f32 %v745, 1e-30
    %v752 = vmax.f32 %v748, 1e-30
    %v753 = vrcp.pop %v751
    %v754 = vrcp.pop %v752
    %v755 = vmul.f32 %v662, %v753
    %v756 = vmul.f32 %v664, %v754
    %v757 = vmul.f32 %v254, %v755
    %v758 = vmul.f32 %v257, %v756
    %v759 = vpack.c.bf16 %v758, %v757
    %760 = vmatprep.subr.bf16.mxu0 0
    %761 = vmatpush1.bf16.msra.mxu0 0
    %762 = vmatprep.subr.bf16.mxu0 0
    %763 = vmatpush1.bf16.msra.mxu0 0
    %764 = vmatprep.subr.bf16.mxu0 0
    %765 = vmatpush1.bf16.msra.mxu0 0
    %766 = vmatprep.subr.bf16.mxu0 0
    %767 = vmatpush1.bf16.msra.mxu0 0
    %768 = vmatprep.subr.bf16.mxu0 0
    %769 = vmatpush1.bf16.msra.mxu0 0
    %770 = vmatprep.subr.bf16.mxu0 0
    %771 = vmatpush1.bf16.msra.mxu0 0
    %772 = vmatprep.subr.bf16.mxu0 0
    %773 = vmatpush1.bf16.msra.mxu0 0
    %774 = vmatprep.subr.bf16.mxu0 0
    %775 = vmatpush1.bf16.msra.mxu0 %v572
    %776 = vmatprep.subr.bf16.mxu0 0
    %777 = vmatpush2.bf16.msra.mxu0 0
    %778 = vmatprep.subr.bf16.mxu0 0
    %779 = vmatpush2.bf16.msra.mxu0 0
    %780 = vmatprep.subr.bf16.mxu0 0
    %781 = vmatpush2.bf16.msra.mxu0 0
    %782 = vmatprep.subr.bf16.mxu0 0
    %783 = vmatpush2.bf16.msra.mxu0 0
    %784 = vmatprep.subr.bf16.mxu0 0
    %785 = vmatpush2.bf16.msra.mxu0 0
    %786 = vmatprep.subr.bf16.mxu0 0
    %787 = vmatpush2.bf16.msra.mxu0 0
    %788 = vmatprep.subr.bf16.mxu0 0
    %789 = vmatpush2.bf16.msra.mxu0 0
    %790 = vmatprep.subr.bf16.mxu0 0
    %791 = vmatpush2.bf16.msra.mxu0 0
    %792 = vmatprep.mubr.bf16.mxu0 0
    %793 = vmatmul.mubr.bf16.gmra.mxu0 %v477
    %v794 = vpop.f32.mrf.mxu0
    %v795 = vadd.f32 %v203, %v794
    %v796 = vpop.f32.mrf.mxu0
    %v797 = vpop.f32.mrf.mxu0
    %v798 = vpop.f32.mrf.mxu0
    %799 = vdwg.mxu0
    %v800 = vmax.f32 %v795, 0.0
    %801 = vmatprep.subr.bf16.mxu0 0
    %802 = vmatpush1.bf16.msra.mxu0 0
    %803 = vmatprep.subr.bf16.mxu0 0
    %804 = vmatpush1.bf16.msra.mxu0 0
    %805 = vmatprep.subr.bf16.mxu0 0
    %806 = vmatpush1.bf16.msra.mxu0 0
    %807 = vmatprep.subr.bf16.mxu0 0
    %808 = vmatpush1.bf16.msra.mxu0 0
    %809 = vmatprep.subr.bf16.mxu0 0
    %810 = vmatpush1.bf16.msra.mxu0 0
    %811 = vmatprep.subr.bf16.mxu0 0
    %812 = vmatpush1.bf16.msra.mxu0 0
    %813 = vmatprep.subr.bf16.mxu0 0
    %814 = vmatpush1.bf16.msra.mxu0 0
    %815 = vmatprep.subr.bf16.mxu0 0
    %816 = vmatpush1.bf16.msra.mxu0 %v759
    %817 = vmatprep.subr.bf16.mxu0 0
    %818 = vmatpush2.bf16.msra.mxu0 0
    %819 = vmatprep.subr.bf16.mxu0 0
    %820 = vmatpush2.bf16.msra.mxu0 0
    %821 = vmatprep.subr.bf16.mxu0 0
    %822 = vmatpush2.bf16.msra.mxu0 0
    %823 = vmatprep.subr.bf16.mxu0 0
    %824 = vmatpush2.bf16.msra.mxu0 0
    %825 = vmatprep.subr.bf16.mxu0 0
    %826 = vmatpush2.bf16.msra.mxu0 0
    %827 = vmatprep.subr.bf16.mxu0 0
    %828 = vmatpush2.bf16.msra.mxu0 0
    %829 = vmatprep.subr.bf16.mxu0 0
    %830 = vmatpush2.bf16.msra.mxu0 0
    %831 = vmatprep.subr.bf16.mxu0 0
    %832 = vmatpush2.bf16.msra.mxu0 0
    %833 = vmatprep.mubr.bf16.mxu0 0
    %834 = vmatmul.mubr.bf16.gmra.mxu0 %v477
    %v835 = vpop.f32.mrf.mxu0
    %v836 = vadd.f32 %v203, %v835
    %v837 = vpop.f32.mrf.mxu0
    %v838 = vpop.f32.mrf.mxu0
    %v839 = vpop.f32.mrf.mxu0
    %840 = vdwg.mxu0
    %v841 = vmax.f32 %v836, 0.0
    %v842 = vpack.c.bf16 %v800, %v800
    %v843 = vpack.c.bf16 %v841, %v841
    %v852 = vunpack.c.l.b16 %v121
    %v853 = vunpack.c.l.b16 %v122
    %v854 = vunpack.c.l.b16 %v123
    %v855 = vunpack.c.l.b16 %v124
    %v856 = vunpack.c.l.b16 %v125
    %v857 = vunpack.c.l.b16 %v126
    %v858 = vunpack.c.l.b16 %v127
    %v859 = vunpack.c.l.b16 %v128
    %v860 = vpack.c.b16 %v853, %v852
    %v861 = vpack.c.b16 %v855, %v854
    %v862 = vpack.c.b16 %v857, %v856
    %v863 = vpack.c.b16 %v859, %v858
    %v869 = vsel %vm391, %v843, 0
    %871 = vmatprep.subr.bf16.mxu0 0
    %872 = vmatpush1.bf16.msra.mxu0 0
    %873 = vmatprep.subr.bf16.mxu0 0
    %874 = vmatpush1.bf16.msra.mxu0 0
    %875 = vmatprep.subr.bf16.mxu0 0
    %876 = vmatpush1.bf16.msra.mxu0 0
    %877 = vmatprep.subr.bf16.mxu0 0
    %878 = vmatpush1.bf16.msra.mxu0 0
    %879 = vmatprep.subr.bf16.mxu0 0
    %880 = vmatpush1.bf16.msra.mxu0 %v863
    %881 = vmatprep.subr.bf16.mxu0 0
    %882 = vmatpush1.bf16.msra.mxu0 %v862
    %883 = vmatprep.subr.bf16.mxu0 0
    %884 = vmatpush1.bf16.msra.mxu0 %v861
    %885 = vmatprep.subr.bf16.mxu0 0
    %886 = vmatpush1.bf16.msra.mxu0 %v860
    %887 = vmatprep.subr.bf16.mxu0 0
    %888 = vmatpush2.bf16.msra.mxu0 0
    %889 = vmatprep.subr.bf16.mxu0 0
    %890 = vmatpush2.bf16.msra.mxu0 0
    %891 = vmatprep.subr.bf16.mxu0 0
    %892 = vmatpush2.bf16.msra.mxu0 0
    %893 = vmatprep.subr.bf16.mxu0 0
    %894 = vmatpush2.bf16.msra.mxu0 0
    %895 = vmatprep.subr.bf16.mxu0 0
    %896 = vmatpush2.bf16.msra.mxu0 0
    %897 = vmatprep.subr.bf16.mxu0 0
    %898 = vmatpush2.bf16.msra.mxu0 0
    %899 = vmatprep.subr.bf16.mxu0 0
    %900 = vmatpush2.bf16.msra.mxu0 0
    %901 = vmatprep.subr.bf16.mxu0 0
    %902 = vmatpush2.bf16.msra.mxu0 0
    %903 = vmatprep.mubr.bf16.mxu0 0
    %904 = vmatmul.mubr.bf16.gmra.mxu0 %v869
    %v905 = vpop.f32.mrf.mxu0
    %v906 = vadd.f32 0.0, %v905
    %v907 = vpop.f32.mrf.mxu0
    %v908 = vpop.f32.mrf.mxu0
    %v909 = vpop.f32.mrf.mxu0
    %910 = vdwg.mxu0
    %v919 = vunpack.c.l.b16 %v113
    %v920 = vunpack.c.l.b16 %v114
    %v921 = vunpack.c.l.b16 %v115
    %v922 = vunpack.c.l.b16 %v116
    %v923 = vunpack.c.l.b16 %v117
    %v924 = vunpack.c.l.b16 %v118
    %v925 = vunpack.c.l.b16 %v119
    %v926 = vunpack.c.l.b16 %v120
    %v927 = vpack.c.b16 %v920, %v919
    %v928 = vpack.c.b16 %v922, %v921
    %v929 = vpack.c.b16 %v924, %v923
    %v930 = vpack.c.b16 %v926, %v925
    %v936 = vsel %vm391, %v842, 0
    %938 = vmatprep.subr.bf16.mxu0 0
    %939 = vmatpush1.bf16.msra.mxu0 0
    %940 = vmatprep.subr.bf16.mxu0 0
    %941 = vmatpush1.bf16.msra.mxu0 0
    %942 = vmatprep.subr.bf16.mxu0 0
    %943 = vmatpush1.bf16.msra.mxu0 0
    %944 = vmatprep.subr.bf16.mxu0 0
    %945 = vmatpush1.bf16.msra.mxu0 0
    %946 = vmatprep.subr.bf16.mxu0 0
    %947 = vmatpush1.bf16.msra.mxu0 %v930
    %948 = vmatprep.subr.bf16.mxu0 0
    %949 = vmatpush1.bf16.msra.mxu0 %v929
    %950 = vmatprep.subr.bf16.mxu0 0
    %951 = vmatpush1.bf16.msra.mxu0 %v928
    %952 = vmatprep.subr.bf16.mxu0 0
    %953 = vmatpush1.bf16.msra.mxu0 %v927
    %954 = vmatprep.subr.bf16.mxu0 0
    %955 = vmatpush2.bf16.msra.mxu0 0
    %956 = vmatprep.subr.bf16.mxu0 0
    %957 = vmatpush2.bf16.msra.mxu0 0
    %958 = vmatprep.subr.bf16.mxu0 0
    %959 = vmatpush2.bf16.msra.mxu0 0
    %960 = vmatprep.subr.bf16.mxu0 0
    %961 = vmatpush2.bf16.msra.mxu0 0
    %962 = vmatprep.subr.bf16.mxu0 0
    %963 = vmatpush2.bf16.msra.mxu0 0
    %964 = vmatprep.subr.bf16.mxu0 0
    %965 = vmatpush2.bf16.msra.mxu0 0
    %966 = vmatprep.subr.bf16.mxu0 0
    %967 = vmatpush2.bf16.msra.mxu0 0
    %968 = vmatprep.subr.bf16.mxu0 0
    %969 = vmatpush2.bf16.msra.mxu0 0
    %970 = vmatprep.mubr.bf16.mxu0 0
    %971 = vmatmul.mubr.bf16.gmra.mxu0 %v936
    %v972 = vpop.f32.mrf.mxu0
    %v973 = vadd.f32 %v906, %v972
    %v974 = vpop.f32.mrf.mxu0
    %v975 = vpop.f32.mrf.mxu0
    %v976 = vpop.f32.mrf.mxu0
    %977 = vdwg.mxu0
    %v978 = vlaneseq
    %v979 = vshrl.u32 %v978, 7
    %v980 = vsub.s32 0, %v979
    %v981 = vrot.slane %v149, %v980
    %v982 = vadd.f32 %v973, %v981
    %v983 = vmax.f32 %v982, 0.0
    %985 = vrot.lane.b32.xlu0 %v983, 96
    %v986 = vpop.permute.xlu0 %985
    %v988 = vadd.f32 %v983, %v986
    %v989 = vmul.f32 %v988, 0.5
    %991 = vrot.lane.b32.xlu0 %v203, 96
    %v992 = vpop.permute.xlu0 %991
    %v994 = vadd.f32 %v203, %v992
    %v995 = vmul.f32 %v994, 0.5
    %v996 = vpack.c.bf16 %v989, %v989
    %v997 = vlaneseq
    %v998 = vshrl.u32 %v997, 7
    %v999 = vsub.s32 0, %v998
    %v1000 = vrot.slane %v150, %v999
    %v1005 = vunpack.c.l.b16 %v129
    %v1006 = vunpack.c.l.b16 %v130
    %v1007 = vunpack.c.l.b16 %v131
    %v1008 = vunpack.c.l.b16 %v132
    %v1009 = vpack.c.b16 %v1006, %v1005
    %v1010 = vpack.c.b16 %v1008, %v1007
    %vm1013 = vcmask 261120
    %v1015 = vsel %vm1013, %v996, 0
    %1017 = vmatprep.subr.bf16.mxu0 0
    %1018 = vmatpush1.bf16.msra.mxu0 0
    %1019 = vmatprep.subr.bf16.mxu0 0
    %1020 = vmatpush1.bf16.msra.mxu0 0
    %1021 = vmatprep.subr.bf16.mxu0 0
    %1022 = vmatpush1.bf16.msra.mxu0 0
    %1023 = vmatprep.subr.bf16.mxu0 0
    %1024 = vmatpush1.bf16.msra.mxu0 0
    %1025 = vmatprep.subr.bf16.mxu0 0
    %1026 = vmatpush1.bf16.msra.mxu0 0
    %1027 = vmatprep.subr.bf16.mxu0 0
    %1028 = vmatpush1.bf16.msra.mxu0 0
    %1029 = vmatprep.subr.bf16.mxu0 0
    %1030 = vmatpush1.bf16.msra.mxu0 %v1010
    %1031 = vmatprep.subr.bf16.mxu0 0
    %1032 = vmatpush1.bf16.msra.mxu0 %v1009
    %1033 = vmatprep.subr.bf16.mxu0 0
    %1034 = vmatpush2.bf16.msra.mxu0 0
    %1035 = vmatprep.subr.bf16.mxu0 0
    %1036 = vmatpush2.bf16.msra.mxu0 0
    %1037 = vmatprep.subr.bf16.mxu0 0
    %1038 = vmatpush2.bf16.msra.mxu0 0
    %1039 = vmatprep.subr.bf16.mxu0 0
    %1040 = vmatpush2.bf16.msra.mxu0 0
    %1041 = vmatprep.subr.bf16.mxu0 0
    %1042 = vmatpush2.bf16.msra.mxu0 0
    %1043 = vmatprep.subr.bf16.mxu0 0
    %1044 = vmatpush2.bf16.msra.mxu0 0
    %1045 = vmatprep.subr.bf16.mxu0 0
    %1046 = vmatpush2.bf16.msra.mxu0 0
    %1047 = vmatprep.subr.bf16.mxu0 0
    %1048 = vmatpush2.bf16.msra.mxu0 0
    %1049 = vmatprep.mubr.bf16.mxu0 0
    %1050 = vmatmul.mubr.bf16.gmra.mxu0 %v1015
    %v1051 = vpop.f32.mrf.mxu0
    %v1052 = vadd.f32 %v1000, %v1051
    %v1053 = vpop.f32.mrf.mxu0
    %v1054 = vpop.f32.mrf.mxu0
    %v1055 = vpop.f32.mrf.mxu0
    %1056 = vdwg.mxu0
    %v1057 = vpack.c.bf16 %v995, %v995
    %v1058 = vlaneseq
    %v1059 = vshrl.u32 %v1058, 7
    %v1060 = vsub.s32 0, %v1059
    %v1061 = vrot.slane %v151, %v1060
    %v1066 = vunpack.c.l.b16 %v133
    %v1067 = vunpack.c.l.b16 %v134
    %v1068 = vunpack.c.l.b16 %v135
    %v1069 = vunpack.c.l.b16 %v136
    %v1070 = vpack.c.b16 %v1067, %v1066
    %v1071 = vpack.c.b16 %v1069, %v1068
    %v1075 = vsel %vm1013, %v1057, 0
    %1077 = vmatprep.subr.bf16.mxu0 0
    %1078 = vmatpush1.bf16.msra.mxu0 0
    %1079 = vmatprep.subr.bf16.mxu0 0
    %1080 = vmatpush1.bf16.msra.mxu0 0
    %1081 = vmatprep.subr.bf16.mxu0 0
    %1082 = vmatpush1.bf16.msra.mxu0 0
    %1083 = vmatprep.subr.bf16.mxu0 0
    %1084 = vmatpush1.bf16.msra.mxu0 0
    %1085 = vmatprep.subr.bf16.mxu0 0
    %1086 = vmatpush1.bf16.msra.mxu0 0
    %1087 = vmatprep.subr.bf16.mxu0 0
    %1088 = vmatpush1.bf16.msra.mxu0 0
    %1089 = vmatprep.subr.bf16.mxu0 0
    %1090 = vmatpush1.bf16.msra.mxu0 %v1071
    %1091 = vmatprep.subr.bf16.mxu0 0
    %1092 = vmatpush1.bf16.msra.mxu0 %v1070
    %1093 = vmatprep.subr.bf16.mxu0 0
    %1094 = vmatpush2.bf16.msra.mxu0 0
    %1095 = vmatprep.subr.bf16.mxu0 0
    %1096 = vmatpush2.bf16.msra.mxu0 0
    %1097 = vmatprep.subr.bf16.mxu0 0
    %1098 = vmatpush2.bf16.msra.mxu0 0
    %1099 = vmatprep.subr.bf16.mxu0 0
    %1100 = vmatpush2.bf16.msra.mxu0 0
    %1101 = vmatprep.subr.bf16.mxu0 0
    %1102 = vmatpush2.bf16.msra.mxu0 0
    %1103 = vmatprep.subr.bf16.mxu0 0
    %1104 = vmatpush2.bf16.msra.mxu0 0
    %1105 = vmatprep.subr.bf16.mxu0 0
    %1106 = vmatpush2.bf16.msra.mxu0 0
    %1107 = vmatprep.subr.bf16.mxu0 0
    %1108 = vmatpush2.bf16.msra.mxu0 0
    %1109 = vmatprep.mubr.bf16.mxu0 0
    %1110 = vmatmul.mubr.bf16.gmra.mxu0 %v1075
    %v1111 = vpop.f32.mrf.mxu0
    %v1112 = vadd.f32 %v1061, %v1111
    %v1113 = vpop.f32.mrf.mxu0
    %v1114 = vpop.f32.mrf.mxu0
    %v1115 = vpop.f32.mrf.mxu0
    %1116 = vdwg.mxu0
    %v1117 = vadd.f32 %v1052, %v1112
    %v1118 = vxor.u32 %v1117, 2147483648
    %v1119 = vmul.f32 %v1118, 1.442695
    %v1120 = vpow.pop %v1119
    %v1121 = vadd.f32 %v1120, 1.0
    %v1122 = vrcp.pop %v1121
    %v1123 = vmul.f32 1.0, %v1122
    %1125 = vrot.lane.b32.xlu0 %v1112, 64
    %v1126 = vpop.permute.xlu0 %1125
    %v1128 = vmul.f32 %v1123, %v1126
    %1130 = vrot.lane.b32.xlu0 %v1128, 64
    %v1131 = vpop.permute.xlu0 %1130
    %v1133 = vadd.f32 %v1052, %v1131
    %v1134 = vtanh.pop %v1133
    %v1135 = vsub.f32 1.0, %v1123
    %1137 = vrot.lane.b32.xlu0 %v1134, 96
    %v1138 = vpop.permute.xlu0 %1137
    %v1140 = vmul.f32 %v1135, %v1138
    %1142 = vrot.lane.b32.xlu0 %v995, 32
    %v1143 = vpop.permute.xlu0 %1142
    %v1145 = vmul.f32 %v1123, %v1143
    %v1146 = vadd.f32 %v1140, %v1145
    %v1147 = vlaneseq
    %v1148 = vshrl.u32 %v1147, 7
    %v1149 = vsub.s32 0, %v1148
    %v1150 = vrot.slane %v152, %v1149
    %v1152 = vsel %vm164, %v137, 0
    %1154 = vmatprep.subr.bf16.mxu0 0
    %1155 = vmatpush1.bf16.msra.mxu0 0
    %1156 = vmatprep.subr.bf16.mxu0 0
    %1157 = vmatpush1.bf16.msra.mxu0 0
    %1158 = vmatprep.subr.bf16.mxu0 0
    %1159 = vmatpush1.bf16.msra.mxu0 0
    %1160 = vmatprep.subr.bf16.mxu0 0
    %1161 = vmatpush1.bf16.msra.mxu0 0
    %1162 = vmatprep.subr.bf16.mxu0 0
    %1163 = vmatpush1.bf16.msra.mxu0 0
    %1164 = vmatprep.subr.bf16.mxu0 0
    %1165 = vmatpush1.bf16.msra.mxu0 0
    %1166 = vmatprep.subr.bf16.mxu0 0
    %1167 = vmatpush1.bf16.msra.mxu0 0
    %1168 = vmatprep.subr.bf16.mxu0 0
    %1169 = vmatpush1.bf16.msra.mxu0 %v1152
    %1170 = vmatprep.subr.bf16.mxu0 0
    %1171 = vmatpush2.bf16.msra.mxu0 0
    %1172 = vmatprep.subr.bf16.mxu0 0
    %1173 = vmatpush2.bf16.msra.mxu0 0
    %1174 = vmatprep.subr.bf16.mxu0 0
    %1175 = vmatpush2.bf16.msra.mxu0 0
    %1176 = vmatprep.subr.bf16.mxu0 0
    %1177 = vmatpush2.bf16.msra.mxu0 0
    %1178 = vmatprep.subr.bf16.mxu0 0
    %1179 = vmatpush2.bf16.msra.mxu0 0
    %1180 = vmatprep.subr.bf16.mxu0 0
    %1181 = vmatpush2.bf16.msra.mxu0 0
    %1182 = vmatprep.subr.bf16.mxu0 0
    %1183 = vmatpush2.bf16.msra.mxu0 0
    %1184 = vmatprep.subr.bf16.mxu0 0
    %1185 = vmatpush2.bf16.msra.mxu0 0
    %1186 = vmatprep.mubr.bf16.mxu0 0
    %1187 = vmatmul.mubr.bf16.gmra.mxu0 %v162
    %v1188 = vpop.f32.mrf.mxu0
    %v1189 = vadd.f32 %v1150, %v1188
    %v1190 = vpop.f32.mrf.mxu0
    %v1191 = vpop.f32.mrf.mxu0
    %v1192 = vpop.f32.mrf.mxu0
    %1193 = vdwg.mxu0
    %v1194 = vmax.f32 %v1189, 0.0
    %v1195 = vpack.c.bf16 %v1194, %v1194
    %v1197 = vsel %vm270, %v1195, 0
    %1199 = vmatprep.subr.bf16.mxu0 0
    %1200 = vmatpush1.bf16.msra.mxu0 0
    %1201 = vmatprep.subr.bf16.mxu0 0
    %1202 = vmatpush1.bf16.msra.mxu0 0
    %1203 = vmatprep.subr.bf16.mxu0 0
    %1204 = vmatpush1.bf16.msra.mxu0 0
    %1205 = vmatprep.subr.bf16.mxu0 0
    %1206 = vmatpush1.bf16.msra.mxu0 0
    %1207 = vmatprep.subr.bf16.mxu0 0
    %1208 = vmatpush1.bf16.msra.mxu0 0
    %1209 = vmatprep.subr.bf16.mxu0 0
    %1210 = vmatpush1.bf16.msra.mxu0 0
    %1211 = vmatprep.subr.bf16.mxu0 0
    %1212 = vmatpush1.bf16.msra.mxu0 0
    %1213 = vmatprep.subr.bf16.mxu0 0
    %1214 = vmatpush1.bf16.msra.mxu0 %v1197
    %1215 = vmatprep.subr.bf16.mxu0 0
    %1216 = vmatpush2.bf16.msra.mxu0 0
    %1217 = vmatprep.subr.bf16.mxu0 0
    %1218 = vmatpush2.bf16.msra.mxu0 0
    %1219 = vmatprep.subr.bf16.mxu0 0
    %1220 = vmatpush2.bf16.msra.mxu0 0
    %1221 = vmatprep.subr.bf16.mxu0 0
    %1222 = vmatpush2.bf16.msra.mxu0 0
    %1223 = vmatprep.subr.bf16.mxu0 0
    %1224 = vmatpush2.bf16.msra.mxu0 0
    %1225 = vmatprep.subr.bf16.mxu0 0
    %1226 = vmatpush2.bf16.msra.mxu0 0
    %1227 = vmatprep.subr.bf16.mxu0 0
    %1228 = vmatpush2.bf16.msra.mxu0 0
    %1229 = vmatprep.subr.bf16.mxu0 0
    %1230 = vmatpush2.bf16.msra.mxu0 0
    %1231 = vmatprep.mubr.bf16.mxu0 0
    %1232 = vmatmul.mubr.bf16.gmra.mxu0 %v321
    %v1233 = vpop.f32.mrf.mxu0
    %v1234 = vadd.f32 0.0, %v1233
    %v1235 = vpop.f32.mrf.mxu0
    %v1236 = vpop.f32.mrf.mxu0
    %v1237 = vadd.f32 0.0, %v1236
    %v1238 = vpop.f32.mrf.mxu0
    %1239 = vdwg.mxu0
    %1240 = vmatprep.subr.bf16.mxu0 0
    %1241 = vmatpush1.bf16.msra.mxu0 0
    %1242 = vmatprep.subr.bf16.mxu0 0
    %1243 = vmatpush1.bf16.msra.mxu0 0
    %1244 = vmatprep.subr.bf16.mxu0 0
    %1245 = vmatpush1.bf16.msra.mxu0 0
    %1246 = vmatprep.subr.bf16.mxu0 0
    %1247 = vmatpush1.bf16.msra.mxu0 0
    %1248 = vmatprep.subr.bf16.mxu0 0
    %1249 = vmatpush1.bf16.msra.mxu0 0
    %1250 = vmatprep.subr.bf16.mxu0 0
    %1251 = vmatpush1.bf16.msra.mxu0 0
    %1252 = vmatprep.subr.bf16.mxu0 0
    %1253 = vmatpush1.bf16.msra.mxu0 0
    %1254 = vmatprep.subr.bf16.mxu0 0
    %1255 = vmatpush1.bf16.msra.mxu0 %v1197
    %1256 = vmatprep.subr.bf16.mxu0 0
    %1257 = vmatpush2.bf16.msra.mxu0 0
    %1258 = vmatprep.subr.bf16.mxu0 0
    %1259 = vmatpush2.bf16.msra.mxu0 0
    %1260 = vmatprep.subr.bf16.mxu0 0
    %1261 = vmatpush2.bf16.msra.mxu0 0
    %1262 = vmatprep.subr.bf16.mxu0 0
    %1263 = vmatpush2.bf16.msra.mxu0 0
    %1264 = vmatprep.subr.bf16.mxu0 0
    %1265 = vmatpush2.bf16.msra.mxu0 0
    %1266 = vmatprep.subr.bf16.mxu0 0
    %1267 = vmatpush2.bf16.msra.mxu0 0
    %1268 = vmatprep.subr.bf16.mxu0 0
    %1269 = vmatpush2.bf16.msra.mxu0 0
    %1270 = vmatprep.subr.bf16.mxu0 0
    %1271 = vmatpush2.bf16.msra.mxu0 0
    %1272 = vmatprep.mubr.bf16.mxu0 0
    %1273 = vmatmul.mubr.bf16.gmra.mxu0 %v268
    %v1274 = vpop.f32.mrf.mxu0
    %v1275 = vadd.f32 %v1234, %v1274
    %v1276 = vpop.f32.mrf.mxu0
    %v1277 = vpop.f32.mrf.mxu0
    %v1278 = vadd.f32 %v1237, %v1277
    %v1279 = vpop.f32.mrf.mxu0
    %1280 = vdwg.mxu0
    %v1281 = vlaneseq
    %v1282 = vshrl.u32 %v1281, 7
    %v1283 = vsub.s32 0, %v1282
    %v1284 = vrot.slane %v153, %v1283
    %v1286 = vsel %vm164, %v138, 0
    %1288 = vmatprep.subr.bf16.mxu0 0
    %1289 = vmatpush1.bf16.msra.mxu0 0
    %1290 = vmatprep.subr.bf16.mxu0 0
    %1291 = vmatpush1.bf16.msra.mxu0 0
    %1292 = vmatprep.subr.bf16.mxu0 0
    %1293 = vmatpush1.bf16.msra.mxu0 0
    %1294 = vmatprep.subr.bf16.mxu0 0
    %1295 = vmatpush1.bf16.msra.mxu0 0
    %1296 = vmatprep.subr.bf16.mxu0 0
    %1297 = vmatpush1.bf16.msra.mxu0 0
    %1298 = vmatprep.subr.bf16.mxu0 0
    %1299 = vmatpush1.bf16.msra.mxu0 0
    %1300 = vmatprep.subr.bf16.mxu0 0
    %1301 = vmatpush1.bf16.msra.mxu0 0
    %1302 = vmatprep.subr.bf16.mxu0 0
    %1303 = vmatpush1.bf16.msra.mxu0 %v1286
    %1304 = vmatprep.subr.bf16.mxu0 0
    %1305 = vmatpush2.bf16.msra.mxu0 0
    %1306 = vmatprep.subr.bf16.mxu0 0
    %1307 = vmatpush2.bf16.msra.mxu0 0
    %1308 = vmatprep.subr.bf16.mxu0 0
    %1309 = vmatpush2.bf16.msra.mxu0 0
    %1310 = vmatprep.subr.bf16.mxu0 0
    %1311 = vmatpush2.bf16.msra.mxu0 0
    %1312 = vmatprep.subr.bf16.mxu0 0
    %1313 = vmatpush2.bf16.msra.mxu0 0
    %1314 = vmatprep.subr.bf16.mxu0 0
    %1315 = vmatpush2.bf16.msra.mxu0 0
    %1316 = vmatprep.subr.bf16.mxu0 0
    %1317 = vmatpush2.bf16.msra.mxu0 0
    %1318 = vmatprep.subr.bf16.mxu0 0
    %1319 = vmatpush2.bf16.msra.mxu0 0
    %1320 = vmatprep.mubr.bf16.mxu0 0
    %1321 = vmatmul.mubr.bf16.gmra.mxu0 %v214
    %v1322 = vpop.f32.mrf.mxu0
    %v1323 = vadd.f32 %v1284, %v1322
    %v1324 = vpop.f32.mrf.mxu0
    %v1325 = vpop.f32.mrf.mxu0
    %v1326 = vadd.f32 %v1284, %v1325
    %v1327 = vpop.f32.mrf.mxu0
    %1328 = vdwg.mxu0
    %v1329 = vmax.f32 %v1323, 0.0
    %v1330 = vmax.f32 %v1326, 0.0
    %v1331 = vpack.c.bf16 %v1278, %v1275
    %v1332 = vpack.c.bf16 %v1330, %v1329
    %v1337 = vunpack.c.l.b16 %v143
    %v1338 = vunpack.c.l.b16 %v144
    %v1339 = vunpack.c.l.b16 %v145
    %v1340 = vunpack.c.l.b16 %v146
    %v1341 = vpack.c.b16 %v1338, %v1337
    %v1342 = vpack.c.b16 %v1340, %v1339
    %v1346 = vsel %vm1013, %v1332, 0
    %1348 = vmatprep.subr.bf16.mxu0 0
    %1349 = vmatpush1.bf16.msra.mxu0 0
    %1350 = vmatprep.subr.bf16.mxu0 0
    %1351 = vmatpush1.bf16.msra.mxu0 0
    %1352 = vmatprep.subr.bf16.mxu0 0
    %1353 = vmatpush1.bf16.msra.mxu0 0
    %1354 = vmatprep.subr.bf16.mxu0 0
    %1355 = vmatpush1.bf16.msra.mxu0 0
    %1356 = vmatprep.subr.bf16.mxu0 0
    %1357 = vmatpush1.bf16.msra.mxu0 0
    %1358 = vmatprep.subr.bf16.mxu0 0
    %1359 = vmatpush1.bf16.msra.mxu0 0
    %1360 = vmatprep.subr.bf16.mxu0 0
    %1361 = vmatpush1.bf16.msra.mxu0 %v1342
    %1362 = vmatprep.subr.bf16.mxu0 0
    %1363 = vmatpush1.bf16.msra.mxu0 %v1341
    %1364 = vmatprep.subr.bf16.mxu0 0
    %1365 = vmatpush2.bf16.msra.mxu0 0
    %1366 = vmatprep.subr.bf16.mxu0 0
    %1367 = vmatpush2.bf16.msra.mxu0 0
    %1368 = vmatprep.subr.bf16.mxu0 0
    %1369 = vmatpush2.bf16.msra.mxu0 0
    %1370 = vmatprep.subr.bf16.mxu0 0
    %1371 = vmatpush2.bf16.msra.mxu0 0
    %1372 = vmatprep.subr.bf16.mxu0 0
    %1373 = vmatpush2.bf16.msra.mxu0 0
    %1374 = vmatprep.subr.bf16.mxu0 0
    %1375 = vmatpush2.bf16.msra.mxu0 0
    %1376 = vmatprep.subr.bf16.mxu0 0
    %1377 = vmatpush2.bf16.msra.mxu0 0
    %1378 = vmatprep.subr.bf16.mxu0 0
    %1379 = vmatpush2.bf16.msra.mxu0 0
    %1380 = vmatprep.mubr.bf16.mxu0 0
    %1381 = vmatmul.mubr.bf16.gmra.mxu0 %v1346
    %v1382 = vpop.f32.mrf.mxu0
    %v1383 = vadd.f32 0.0, %v1382
    %v1384 = vpop.f32.mrf.mxu0
    %v1385 = vpop.f32.mrf.mxu0
    %v1386 = vadd.f32 0.0, %v1385
    %v1387 = vpop.f32.mrf.mxu0
    %1388 = vdwg.mxu0
    %v1393 = vunpack.c.l.b16 %v139
    %v1394 = vunpack.c.l.b16 %v140
    %v1395 = vunpack.c.l.b16 %v141
    %v1396 = vunpack.c.l.b16 %v142
    %v1397 = vpack.c.b16 %v1394, %v1393
    %v1398 = vpack.c.b16 %v1396, %v1395
    %v1402 = vsel %vm1013, %v1331, 0
    %1404 = vmatprep.subr.bf16.mxu0 0
    %1405 = vmatpush1.bf16.msra.mxu0 0
    %1406 = vmatprep.subr.bf16.mxu0 0
    %1407 = vmatpush1.bf16.msra.mxu0 0
    %1408 = vmatprep.subr.bf16.mxu0 0
    %1409 = vmatpush1.bf16.msra.mxu0 0
    %1410 = vmatprep.subr.bf16.mxu0 0
    %1411 = vmatpush1.bf16.msra.mxu0 0
    %1412 = vmatprep.subr.bf16.mxu0 0
    %1413 = vmatpush1.bf16.msra.mxu0 0
    %1414 = vmatprep.subr.bf16.mxu0 0
    %1415 = vmatpush1.bf16.msra.mxu0 0
    %1416 = vmatprep.subr.bf16.mxu0 0
    %1417 = vmatpush1.bf16.msra.mxu0 %v1398
    %1418 = vmatprep.subr.bf16.mxu0 0
    %1419 = vmatpush1.bf16.msra.mxu0 %v1397
    %1420 = vmatprep.subr.bf16.mxu0 0
    %1421 = vmatpush2.bf16.msra.mxu0 0
    %1422 = vmatprep.subr.bf16.mxu0 0
    %1423 = vmatpush2.bf16.msra.mxu0 0
    %1424 = vmatprep.subr.bf16.mxu0 0
    %1425 = vmatpush2.bf16.msra.mxu0 0
    %1426 = vmatprep.subr.bf16.mxu0 0
    %1427 = vmatpush2.bf16.msra.mxu0 0
    %1428 = vmatprep.subr.bf16.mxu0 0
    %1429 = vmatpush2.bf16.msra.mxu0 0
    %1430 = vmatprep.subr.bf16.mxu0 0
    %1431 = vmatpush2.bf16.msra.mxu0 0
    %1432 = vmatprep.subr.bf16.mxu0 0
    %1433 = vmatpush2.bf16.msra.mxu0 0
    %1434 = vmatprep.subr.bf16.mxu0 0
    %1435 = vmatpush2.bf16.msra.mxu0 0
    %1436 = vmatprep.mubr.bf16.mxu0 0
    %1437 = vmatmul.mubr.bf16.gmra.mxu0 %v1402
    %v1438 = vpop.f32.mrf.mxu0
    %v1439 = vadd.f32 %v1383, %v1438
    %v1440 = vpop.f32.mrf.mxu0
    %v1441 = vpop.f32.mrf.mxu0
    %v1442 = vadd.f32 %v1386, %v1441
    %v1443 = vpop.f32.mrf.mxu0
    %1444 = vdwg.mxu0
    %v1445 = vlaneseq
    %v1446 = vshrl.u32 %v1445, 7
    %v1447 = vsub.s32 0, %v1446
    %v1448 = vrot.slane %v154, %v1447
    %v1449 = vadd.f32 %v1439, %v1448
    %v1450 = vadd.f32 %v1442, %v1448
    %v1451 = vmax.f32 %v1449, 0.0
    %v1452 = vmax.f32 %v1450, 0.0
    %v1453 = vld [vmem:[%s15] sm:$0xf]
    %v1454 = vld [vmem:[%s15 + $0x4] sm:$0xf]
    %v1455 = vld [vmem:[%s15 + $0x8] sm:$0xf]
    %v1456 = vld [vmem:[%s15 + $0xc] sm:$0xf]
    %v1457 = vld [vmem:[%s16] sm:$0xf]
    %v1458 = vld [vmem:[%s16 + $0x4] sm:$0xf]
    %v1459 = vld [vmem:[%s16 + $0x8] sm:$0xf]
    %v1460 = vld [vmem:[%s16 + $0xc] sm:$0xf]
    %v1461 = vld [vmem:[%s17] sm:$0xf]
    %v1462 = vld [vmem:[%s17 + $0x4] sm:$0xf]
    %v1463 = vld [vmem:[%s17 + $0x8] sm:$0xf]
    %v1464 = vld [vmem:[%s17 + $0xc] sm:$0xf]
    %v1465 = vld [vmem:[%s17 + $0x10] sm:$0xf]
    %v1466 = vld [vmem:[%s17 + $0x14] sm:$0xf]
    %v1467 = vld [vmem:[%s17 + $0x18] sm:$0xf]
    %v1468 = vld [vmem:[%s17 + $0x1c] sm:$0xf]
    %v1469 = vld [vmem:[%s17 + $0x20] sm:$0xf]
    %v1470 = vld [vmem:[%s17 + $0x24] sm:$0xf]
    %v1471 = vld [vmem:[%s17 + $0x28] sm:$0xf]
    %v1472 = vld [vmem:[%s17 + $0x2c] sm:$0xf]
    %v1473 = vld [vmem:[%s17 + $0x30] sm:$0xf]
    %v1474 = vld [vmem:[%s17 + $0x34] sm:$0xf]
    %v1475 = vld [vmem:[%s17 + $0x38] sm:$0xf]
    %v1476 = vld [vmem:[%s17 + $0x3c] sm:$0xf]
    %v1477 = vld [vmem:[%s18] sm:$0xf]
    %v1478 = vld [vmem:[%s18 + $0x4] sm:$0xf]
    %v1479 = vld [vmem:[%s18 + $0x8] sm:$0xf]
    %v1480 = vld [vmem:[%s18 + $0xc] sm:$0xf]
    %v1481 = vld [vmem:[%s18 + $0x10] sm:$0xf]
    %v1482 = vld [vmem:[%s18 + $0x14] sm:$0xf]
    %v1483 = vld [vmem:[%s18 + $0x18] sm:$0xf]
    %v1484 = vld [vmem:[%s18 + $0x1c] sm:$0xf]
    %v1485 = vld [vmem:[%s18 + $0x20] sm:$0xf]
    %v1486 = vld [vmem:[%s18 + $0x24] sm:$0xf]
    %v1487 = vld [vmem:[%s18 + $0x28] sm:$0xf]
    %v1488 = vld [vmem:[%s18 + $0x2c] sm:$0xf]
    %v1489 = vld [vmem:[%s18 + $0x30] sm:$0xf]
    %v1490 = vld [vmem:[%s18 + $0x34] sm:$0xf]
    %v1491 = vld [vmem:[%s18 + $0x38] sm:$0xf]
    %v1492 = vld [vmem:[%s18 + $0x3c] sm:$0xf]
    %v1493 = vld [vmem:[%s19] sm:$0xf]
    %v1494 = vld [vmem:[%s19 + $0x4] sm:$0xf]
    %v1495 = vld [vmem:[%s19 + $0x8] sm:$0xf]
    %v1496 = vld [vmem:[%s19 + $0xc] sm:$0xf]
    %v1497 = vld [vmem:[%s19 + $0x10] sm:$0xf]
    %v1498 = vld [vmem:[%s19 + $0x14] sm:$0xf]
    %v1499 = vld [vmem:[%s19 + $0x18] sm:$0xf]
    %v1500 = vld [vmem:[%s19 + $0x1c] sm:$0xf]
    %v1501 = vld [vmem:[%s20] sm:$0xf]
    %v1502 = vld [vmem:[%s20 + $0x4] sm:$0xf]
    %v1503 = vld [vmem:[%s20 + $0x8] sm:$0xf]
    %v1504 = vld [vmem:[%s20 + $0xc] sm:$0xf]
    %v1505 = vld [vmem:[%s21] sm:$0xf]
    %v1506 = vld [vmem:[%s21 + $0x4] sm:$0xf]
    %v1507 = vld [vmem:[%s21 + $0x8] sm:$0xf]
    %v1508 = vld [vmem:[%s21 + $0xc] sm:$0xf]
    %v1509 = vld [vmem:[%s22] sm:$0xf]
    %v1510 = vld [vmem:[%s22 + $0x4] sm:$0xf]
    %v1511 = vld [vmem:[%s22 + $0x8] sm:$0xf]
    %v1512 = vld [vmem:[%s22 + $0xc] sm:$0xf]
    %v1513 = vld [vmem:[%s22 + $0x10] sm:$0xf]
    %v1514 = vld [vmem:[%s22 + $0x14] sm:$0xf]
    %v1515 = vld [vmem:[%s22 + $0x18] sm:$0xf]
    %v1516 = vld [vmem:[%s22 + $0x1c] sm:$0xf]
    %v1517 = vld [vmem:[%s23] sm:$0x1]
    %v1518 = vld [vmem:[%s23 + $0x1] sm:$0x1]
    %v1519 = vld [vmem:[%s23 + $0x2] sm:$0x1]
    %v1520 = vld [vmem:[%s24] sm:$0x1]
    %v1521 = vld [vmem:[%s24 + $0x1] sm:$0x1]
    %v1522 = vld [vmem:[%s25] sm:$0x1]
    %v1523 = vld [vmem:[%s25 + $0x1] sm:$0x1]
    %v1524 = vld [vmem:[%s25 + $0x2] sm:$0x1]
    %v1525 = vpack.c.bf16 %v1146, %v1146
    %v1526 = vlaneseq
    %v1527 = vshrl.u32 %v1526, 7
    %v1528 = vsub.s32 0, %v1527
    %v1529 = vrot.slane %v1517, %v1528
    %1531 = vrot.lane.b32.xlu0 %v1525, 96
    %v1532 = vpop.permute.xlu0 %1531
    %v1537 = vunpack.c.l.b16 %v1453
    %v1538 = vunpack.c.l.b16 %v1454
    %v1539 = vunpack.c.l.b16 %v1455
    %v1540 = vunpack.c.l.b16 %v1456
    %v1541 = vpack.c.b16 %v1538, %v1537
    %v1542 = vpack.c.b16 %v1540, %v1539
    %v1546 = vsel %vm1013, %v1532, 0
    %1548 = vmatprep.subr.bf16.mxu0 0
    %1549 = vmatpush1.bf16.msra.mxu0 0
    %1550 = vmatprep.subr.bf16.mxu0 0
    %1551 = vmatpush1.bf16.msra.mxu0 0
    %1552 = vmatprep.subr.bf16.mxu0 0
    %1553 = vmatpush1.bf16.msra.mxu0 0
    %1554 = vmatprep.subr.bf16.mxu0 0
    %1555 = vmatpush1.bf16.msra.mxu0 0
    %1556 = vmatprep.subr.bf16.mxu0 0
    %1557 = vmatpush1.bf16.msra.mxu0 0
    %1558 = vmatprep.subr.bf16.mxu0 0
    %1559 = vmatpush1.bf16.msra.mxu0 0
    %1560 = vmatprep.subr.bf16.mxu0 0
    %1561 = vmatpush1.bf16.msra.mxu0 %v1542
    %1562 = vmatprep.subr.bf16.mxu0 0
    %1563 = vmatpush1.bf16.msra.mxu0 %v1541
    %1564 = vmatprep.subr.bf16.mxu0 0
    %1565 = vmatpush2.bf16.msra.mxu0 0
    %1566 = vmatprep.subr.bf16.mxu0 0
    %1567 = vmatpush2.bf16.msra.mxu0 0
    %1568 = vmatprep.subr.bf16.mxu0 0
    %1569 = vmatpush2.bf16.msra.mxu0 0
    %1570 = vmatprep.subr.bf16.mxu0 0
    %1571 = vmatpush2.bf16.msra.mxu0 0
    %1572 = vmatprep.subr.bf16.mxu0 0
    %1573 = vmatpush2.bf16.msra.mxu0 0
    %1574 = vmatprep.subr.bf16.mxu0 0
    %1575 = vmatpush2.bf16.msra.mxu0 0
    %1576 = vmatprep.subr.bf16.mxu0 0
    %1577 = vmatpush2.bf16.msra.mxu0 0
    %1578 = vmatprep.subr.bf16.mxu0 0
    %1579 = vmatpush2.bf16.msra.mxu0 0
    %1580 = vmatprep.mubr.bf16.mxu0 0
    %1581 = vmatmul.mubr.bf16.gmra.mxu0 %v1546
    %v1582 = vpop.f32.mrf.mxu0
    %v1583 = vadd.f32 %v1529, %v1582
    %v1584 = vpop.f32.mrf.mxu0
    %v1585 = vpop.f32.mrf.mxu0
    %v1586 = vpop.f32.mrf.mxu0
    %1587 = vdwg.mxu0
    %v1588 = vpack.c.bf16 %v1452, %v1451
    %v1589 = vlaneseq
    %v1590 = vshrl.u32 %v1589, 7
    %v1591 = vsub.s32 0, %v1590
    %v1592 = vrot.slane %v1518, %v1591
    %v1597 = vunpack.c.l.b16 %v1457
    %v1598 = vunpack.c.l.b16 %v1458
    %v1599 = vunpack.c.l.b16 %v1459
    %v1600 = vunpack.c.l.b16 %v1460
    %v1601 = vpack.c.b16 %v1598, %v1597
    %v1602 = vpack.c.b16 %v1600, %v1599
    %v1606 = vsel %vm1013, %v1588, 0
    %1608 = vmatprep.subr.bf16.mxu0 0
    %1609 = vmatpush1.bf16.msra.mxu0 0
    %1610 = vmatprep.subr.bf16.mxu0 0
    %1611 = vmatpush1.bf16.msra.mxu0 0
    %1612 = vmatprep.subr.bf16.mxu0 0
    %1613 = vmatpush1.bf16.msra.mxu0 0
    %1614 = vmatprep.subr.bf16.mxu0 0
    %1615 = vmatpush1.bf16.msra.mxu0 0
    %1616 = vmatprep.subr.bf16.mxu0 0
    %1617 = vmatpush1.bf16.msra.mxu0 0
    %1618 = vmatprep.subr.bf16.mxu0 0
    %1619 = vmatpush1.bf16.msra.mxu0 0
    %1620 = vmatprep.subr.bf16.mxu0 0
    %1621 = vmatpush1.bf16.msra.mxu0 %v1602
    %1622 = vmatprep.subr.bf16.mxu0 0
    %1623 = vmatpush1.bf16.msra.mxu0 %v1601
    %1624 = vmatprep.subr.bf16.mxu0 0
    %1625 = vmatpush2.bf16.msra.mxu0 0
    %1626 = vmatprep.subr.bf16.mxu0 0
    %1627 = vmatpush2.bf16.msra.mxu0 0
    %1628 = vmatprep.subr.bf16.mxu0 0
    %1629 = vmatpush2.bf16.msra.mxu0 0
    %1630 = vmatprep.subr.bf16.mxu0 0
    %1631 = vmatpush2.bf16.msra.mxu0 0
    %1632 = vmatprep.subr.bf16.mxu0 0
    %1633 = vmatpush2.bf16.msra.mxu0 0
    %1634 = vmatprep.subr.bf16.mxu0 0
    %1635 = vmatpush2.bf16.msra.mxu0 0
    %1636 = vmatprep.subr.bf16.mxu0 0
    %1637 = vmatpush2.bf16.msra.mxu0 0
    %1638 = vmatprep.subr.bf16.mxu0 0
    %1639 = vmatpush2.bf16.msra.mxu0 0
    %1640 = vmatprep.mubr.bf16.mxu0 0
    %1641 = vmatmul.mubr.bf16.gmra.mxu0 %v1606
    %v1642 = vpop.f32.mrf.mxu0
    %v1643 = vadd.f32 %v1592, %v1642
    %v1644 = vpop.f32.mrf.mxu0
    %v1645 = vpop.f32.mrf.mxu0
    %v1646 = vadd.f32 %v1592, %v1645
    %v1647 = vpop.f32.mrf.mxu0
    %1648 = vdwg.mxu0
    %v1649 = vpack.c.bf16 %v1583, %v1583
    %v1651 = vsel %vm270, %v1649, 0
    %1653 = vmatprep.subr.bf16.mxu0 0
    %1654 = vmatpush1.bf16.msra.mxu0 0
    %1655 = vmatprep.subr.bf16.mxu0 0
    %1656 = vmatpush1.bf16.msra.mxu0 0
    %1657 = vmatprep.subr.bf16.mxu0 0
    %1658 = vmatpush1.bf16.msra.mxu0 0
    %1659 = vmatprep.subr.bf16.mxu0 0
    %1660 = vmatpush1.bf16.msra.mxu0 0
    %1661 = vmatprep.subr.bf16.mxu0 0
    %1662 = vmatpush1.bf16.msra.mxu0 0
    %1663 = vmatprep.subr.bf16.mxu0 0
    %1664 = vmatpush1.bf16.msra.mxu0 0
    %1665 = vmatprep.subr.bf16.mxu0 0
    %1666 = vmatpush1.bf16.msra.mxu0 0
    %1667 = vmatprep.subr.bf16.mxu0 0
    %1668 = vmatpush1.bf16.msra.mxu0 %v1651
    %1669 = vmatprep.subr.bf16.mxu0 0
    %1670 = vmatpush2.bf16.msra.mxu0 0
    %1671 = vmatprep.subr.bf16.mxu0 0
    %1672 = vmatpush2.bf16.msra.mxu0 0
    %1673 = vmatprep.subr.bf16.mxu0 0
    %1674 = vmatpush2.bf16.msra.mxu0 0
    %1675 = vmatprep.subr.bf16.mxu0 0
    %1676 = vmatpush2.bf16.msra.mxu0 0
    %1677 = vmatprep.subr.bf16.mxu0 0
    %1678 = vmatpush2.bf16.msra.mxu0 0
    %1679 = vmatprep.subr.bf16.mxu0 0
    %1680 = vmatpush2.bf16.msra.mxu0 0
    %1681 = vmatprep.subr.bf16.mxu0 0
    %1682 = vmatpush2.bf16.msra.mxu0 0
    %1683 = vmatprep.subr.bf16.mxu0 0
    %1684 = vmatpush2.bf16.msra.mxu0 0
    %1685 = vmatprep.mubr.bf16.mxu0 0
    %1686 = vmatmul.mubr.bf16.gmra.mxu0 %v268
    %v1687 = vpop.f32.mrf.mxu0
    %v1688 = vadd.f32 0.0, %v1687
    %v1689 = vpop.f32.mrf.mxu0
    %v1690 = vpop.f32.mrf.mxu0
    %v1691 = vadd.f32 0.0, %v1690
    %v1692 = vpop.f32.mrf.mxu0
    %1693 = vdwg.mxu0
    %1694 = vmatprep.subr.bf16.mxu0 0
    %1695 = vmatpush1.bf16.msra.mxu0 0
    %1696 = vmatprep.subr.bf16.mxu0 0
    %1697 = vmatpush1.bf16.msra.mxu0 0
    %1698 = vmatprep.subr.bf16.mxu0 0
    %1699 = vmatpush1.bf16.msra.mxu0 0
    %1700 = vmatprep.subr.bf16.mxu0 0
    %1701 = vmatpush1.bf16.msra.mxu0 0
    %1702 = vmatprep.subr.bf16.mxu0 0
    %1703 = vmatpush1.bf16.msra.mxu0 0
    %1704 = vmatprep.subr.bf16.mxu0 0
    %1705 = vmatpush1.bf16.msra.mxu0 0
    %1706 = vmatprep.subr.bf16.mxu0 0
    %1707 = vmatpush1.bf16.msra.mxu0 0
    %1708 = vmatprep.subr.bf16.mxu0 0
    %1709 = vmatpush1.bf16.msra.mxu0 %v1651
    %1710 = vmatprep.subr.bf16.mxu0 0
    %1711 = vmatpush2.bf16.msra.mxu0 0
    %1712 = vmatprep.subr.bf16.mxu0 0
    %1713 = vmatpush2.bf16.msra.mxu0 0
    %1714 = vmatprep.subr.bf16.mxu0 0
    %1715 = vmatpush2.bf16.msra.mxu0 0
    %1716 = vmatprep.subr.bf16.mxu0 0
    %1717 = vmatpush2.bf16.msra.mxu0 0
    %1718 = vmatprep.subr.bf16.mxu0 0
    %1719 = vmatpush2.bf16.msra.mxu0 0
    %1720 = vmatprep.subr.bf16.mxu0 0
    %1721 = vmatpush2.bf16.msra.mxu0 0
    %1722 = vmatprep.subr.bf16.mxu0 0
    %1723 = vmatpush2.bf16.msra.mxu0 0
    %1724 = vmatprep.subr.bf16.mxu0 0
    %1725 = vmatpush2.bf16.msra.mxu0 0
    %1726 = vmatprep.mubr.bf16.mxu0 0
    %1727 = vmatmul.mubr.bf16.gmra.mxu0 %v321
    %v1728 = vpop.f32.mrf.mxu0
    %v1729 = vadd.f32 0.0, %v1728
    %v1730 = vpop.f32.mrf.mxu0
    %v1731 = vpop.f32.mrf.mxu0
    %v1732 = vadd.f32 0.0, %v1731
    %v1733 = vpop.f32.mrf.mxu0
    %1734 = vdwg.mxu0
    %v1735 = vadd.f32 %v1688, %v1729
    %v1736 = vadd.f32 %v1691, %v1732
    %v1737 = vpack.c.bf16 %v1736, %v1735
    %v1746 = vunpack.c.l.b16 %v1461
    %v1747 = vunpack.c.l.b16 %v1462
    %v1748 = vunpack.c.l.b16 %v1463
    %v1749 = vunpack.c.l.b16 %v1464
    %v1750 = vunpack.c.l.b16 %v1465
    %v1751 = vunpack.c.l.b16 %v1466
    %v1752 = vunpack.c.l.b16 %v1467
    %v1753 = vunpack.c.l.b16 %v1468
    %v1754 = vpack.c.b16 %v1747, %v1746
    %v1755 = vpack.c.b16 %v1749, %v1748
    %v1756 = vpack.c.b16 %v1751, %v1750
    %v1757 = vpack.c.b16 %v1753, %v1752
    %v1763 = vsel %vm391, %v1737, 0
    %1765 = vmatprep.subr.bf16.mxu0 0
    %1766 = vmatpush1.bf16.msra.mxu0 0
    %1767 = vmatprep.subr.bf16.mxu0 0
    %1768 = vmatpush1.bf16.msra.mxu0 0
    %1769 = vmatprep.subr.bf16.mxu0 0
    %1770 = vmatpush1.bf16.msra.mxu0 0
    %1771 = vmatprep.subr.bf16.mxu0 0
    %1772 = vmatpush1.bf16.msra.mxu0 0
    %1773 = vmatprep.subr.bf16.mxu0 0
    %1774 = vmatpush1.bf16.msra.mxu0 %v1757
    %1775 = vmatprep.subr.bf16.mxu0 0
    %1776 = vmatpush1.bf16.msra.mxu0 %v1756
    %1777 = vmatprep.subr.bf16.mxu0 0
    %1778 = vmatpush1.bf16.msra.mxu0 %v1755
    %1779 = vmatprep.subr.bf16.mxu0 0
    %1780 = vmatpush1.bf16.msra.mxu0 %v1754
    %1781 = vmatprep.subr.bf16.mxu0 0
    %1782 = vmatpush2.bf16.msra.mxu0 0
    %1783 = vmatprep.subr.bf16.mxu0 0
    %1784 = vmatpush2.bf16.msra.mxu0 0
    %1785 = vmatprep.subr.bf16.mxu0 0
    %1786 = vmatpush2.bf16.msra.mxu0 0
    %1787 = vmatprep.subr.bf16.mxu0 0
    %1788 = vmatpush2.bf16.msra.mxu0 0
    %1789 = vmatprep.subr.bf16.mxu0 0
    %1790 = vmatpush2.bf16.msra.mxu0 0
    %1791 = vmatprep.subr.bf16.mxu0 0
    %1792 = vmatpush2.bf16.msra.mxu0 0
    %1793 = vmatprep.subr.bf16.mxu0 0
    %1794 = vmatpush2.bf16.msra.mxu0 0
    %1795 = vmatprep.subr.bf16.mxu0 0
    %1796 = vmatpush2.bf16.msra.mxu0 0
    %1797 = vmatprep.mubr.bf16.mxu0 0
    %1798 = vmatmul.mubr.bf16.gmra.mxu0 %v1763
    %v1799 = vpop.f32.mrf.mxu0
    %v1800 = vadd.f32 0.0, %v1799
    %v1801 = vpop.f32.mrf.mxu0
    %v1802 = vpop.f32.mrf.mxu0
    %v1803 = vadd.f32 0.0, %v1802
    %v1804 = vpop.f32.mrf.mxu0
    %1805 = vdwg.mxu0
    %vm1806 = vcmp.ge.f32.partialorder %v1800, 0.0
    %vm1807 = vcmp.ge.f32.partialorder %v1803, 0.0
    %v1808 = vmul.f32 %v1800, 0.2
    %v1809 = vmul.f32 %v1803, 0.2
    %v1810 = vsel %vm1806, %v1800, %v1808
    %v1811 = vsel %vm1807, %v1803, %v1809
    %v1812 = vsel %vm391, %v1810, -inf
    %v1813 = vsel %vm391, %v1811, -inf
    %v1814 = vmax.f32 %v1812, %v1813
    %v1815 = vrot.slane %v1814, 4
    %v1816 = vmax.f32 %v1814, %v1815
    %v1817 = vrot.slane %v1816, 2
    %v1818 = vmax.f32 %v1816, %v1817
    %v1819 = vrot.slane %v1818, 1
    %v1820 = vmax.f32 %v1818, %v1819
    %v1821 = vsub.f32 %v1810, %v1820
    %v1822 = vsub.f32 %v1811, %v1820
    %v1823 = vmul.f32 %v1821, 1.442695
    %v1824 = vpow.pop %v1823
    %v1825 = vmul.f32 %v1822, 1.442695
    %v1826 = vpow.pop %v1825
    %v1827 = vpack.c.bf16 %v1826, %v1824
    %1828 = vmatprep.subr.bf16.mxu0 0
    %1829 = vmatpush1.bf16.msra.mxu0 0
    %1830 = vmatprep.subr.bf16.mxu0 0
    %1831 = vmatpush1.bf16.msra.mxu0 0
    %1832 = vmatprep.subr.bf16.mxu0 0
    %1833 = vmatpush1.bf16.msra.mxu0 0
    %1834 = vmatprep.subr.bf16.mxu0 0
    %1835 = vmatpush1.bf16.msra.mxu0 0
    %1836 = vmatprep.subr.bf16.mxu0 0
    %1837 = vmatpush1.bf16.msra.mxu0 0
    %1838 = vmatprep.subr.bf16.mxu0 0
    %1839 = vmatpush1.bf16.msra.mxu0 0
    %1840 = vmatprep.subr.bf16.mxu0 0
    %1841 = vmatpush1.bf16.msra.mxu0 0
    %1842 = vmatprep.subr.bf16.mxu0 0
    %1843 = vmatpush1.bf16.msra.mxu0 %v1827
    %1844 = vmatprep.subr.bf16.mxu0 0
    %1845 = vmatpush2.bf16.msra.mxu0 0
    %1846 = vmatprep.subr.bf16.mxu0 0
    %1847 = vmatpush2.bf16.msra.mxu0 0
    %1848 = vmatprep.subr.bf16.mxu0 0
    %1849 = vmatpush2.bf16.msra.mxu0 0
    %1850 = vmatprep.subr.bf16.mxu0 0
    %1851 = vmatpush2.bf16.msra.mxu0 0
    %1852 = vmatprep.subr.bf16.mxu0 0
    %1853 = vmatpush2.bf16.msra.mxu0 0
    %1854 = vmatprep.subr.bf16.mxu0 0
    %1855 = vmatpush2.bf16.msra.mxu0 0
    %1856 = vmatprep.subr.bf16.mxu0 0
    %1857 = vmatpush2.bf16.msra.mxu0 0
    %1858 = vmatprep.subr.bf16.mxu0 0
    %1859 = vmatpush2.bf16.msra.mxu0 0
    %1860 = vmatprep.mubr.bf16.mxu0 0
    %1861 = vmatmul.mubr.bf16.gmra.mxu0 %v477
    %v1862 = vpop.f32.mrf.mxu0
    %v1863 = vadd.f32 0.0, %v1862
    %v1864 = vpop.f32.mrf.mxu0
    %v1865 = vpop.f32.mrf.mxu0
    %v1866 = vpop.f32.mrf.mxu0
    %1867 = vdwg.mxu0
    %v1868 = vpack.c.bf16 %v1863, %v1863
    %v1870 = vsel %vm270, %v1868, 0
    %1872 = vmatprep.subr.bf16.mxu0 0
    %1873 = vmatpush1.bf16.msra.mxu0 0
    %1874 = vmatprep.subr.bf16.mxu0 0
    %1875 = vmatpush1.bf16.msra.mxu0 0
    %1876 = vmatprep.subr.bf16.mxu0 0
    %1877 = vmatpush1.bf16.msra.mxu0 0
    %1878 = vmatprep.subr.bf16.mxu0 0
    %1879 = vmatpush1.bf16.msra.mxu0 0
    %1880 = vmatprep.subr.bf16.mxu0 0
    %1881 = vmatpush1.bf16.msra.mxu0 0
    %1882 = vmatprep.subr.bf16.mxu0 0
    %1883 = vmatpush1.bf16.msra.mxu0 0
    %1884 = vmatprep.subr.bf16.mxu0 0
    %1885 = vmatpush1.bf16.msra.mxu0 0
    %1886 = vmatprep.subr.bf16.mxu0 0
    %1887 = vmatpush1.bf16.msra.mxu0 %v1870
    %1888 = vmatprep.subr.bf16.mxu0 0
    %1889 = vmatpush2.bf16.msra.mxu0 0
    %1890 = vmatprep.subr.bf16.mxu0 0
    %1891 = vmatpush2.bf16.msra.mxu0 0
    %1892 = vmatprep.subr.bf16.mxu0 0
    %1893 = vmatpush2.bf16.msra.mxu0 0
    %1894 = vmatprep.subr.bf16.mxu0 0
    %1895 = vmatpush2.bf16.msra.mxu0 0
    %1896 = vmatprep.subr.bf16.mxu0 0
    %1897 = vmatpush2.bf16.msra.mxu0 0
    %1898 = vmatprep.subr.bf16.mxu0 0
    %1899 = vmatpush2.bf16.msra.mxu0 0
    %1900 = vmatprep.subr.bf16.mxu0 0
    %1901 = vmatpush2.bf16.msra.mxu0 0
    %1902 = vmatprep.subr.bf16.mxu0 0
    %1903 = vmatpush2.bf16.msra.mxu0 0
    %1904 = vmatprep.mubr.bf16.mxu0 0
    %1905 = vmatmul.mubr.bf16.gmra.mxu0 %v321
    %v1906 = vpop.f32.mrf.mxu0
    %v1907 = vadd.f32 0.0, %v1906
    %v1908 = vpop.f32.mrf.mxu0
    %v1909 = vpop.f32.mrf.mxu0
    %v1910 = vadd.f32 0.0, %v1909
    %v1911 = vpop.f32.mrf.mxu0
    %1912 = vdwg.mxu0
    %v1913 = vmax.f32 %v1907, 1e-30
    %v1914 = vmax.f32 %v1910, 1e-30
    %v1915 = vrcp.pop %v1913
    %v1916 = vrcp.pop %v1914
    %v1917 = vmul.f32 %v1824, %v1915
    %v1918 = vmul.f32 %v1826, %v1916
    %v1919 = vmul.f32 %v1688, %v1917
    %v1920 = vmul.f32 %v1691, %v1918
    %v1921 = vpack.c.bf16 %v1920, %v1919
    %v1922 = vadd.f32 %v1688, %v1643
    %v1923 = vadd.f32 %v1691, %v1646
    %v1924 = vpack.c.bf16 %v1923, %v1922
    %v1933 = vunpack.c.l.b16 %v1469
    %v1934 = vunpack.c.l.b16 %v1470
    %v1935 = vunpack.c.l.b16 %v1471
    %v1936 = vunpack.c.l.b16 %v1472
    %v1937 = vunpack.c.l.b16 %v1473
    %v1938 = vunpack.c.l.b16 %v1474
    %v1939 = vunpack.c.l.b16 %v1475
    %v1940 = vunpack.c.l.b16 %v1476
    %v1941 = vpack.c.b16 %v1934, %v1933
    %v1942 = vpack.c.b16 %v1936, %v1935
    %v1943 = vpack.c.b16 %v1938, %v1937
    %v1944 = vpack.c.b16 %v1940, %v1939
    %v1950 = vsel %vm391, %v1924, 0
    %1952 = vmatprep.subr.bf16.mxu0 0
    %1953 = vmatpush1.bf16.msra.mxu0 0
    %1954 = vmatprep.subr.bf16.mxu0 0
    %1955 = vmatpush1.bf16.msra.mxu0 0
    %1956 = vmatprep.subr.bf16.mxu0 0
    %1957 = vmatpush1.bf16.msra.mxu0 0
    %1958 = vmatprep.subr.bf16.mxu0 0
    %1959 = vmatpush1.bf16.msra.mxu0 0
    %1960 = vmatprep.subr.bf16.mxu0 0
    %1961 = vmatpush1.bf16.msra.mxu0 %v1944
    %1962 = vmatprep.subr.bf16.mxu0 0
    %1963 = vmatpush1.bf16.msra.mxu0 %v1943
    %1964 = vmatprep.subr.bf16.mxu0 0
    %1965 = vmatpush1.bf16.msra.mxu0 %v1942
    %1966 = vmatprep.subr.bf16.mxu0 0
    %1967 = vmatpush1.bf16.msra.mxu0 %v1941
    %1968 = vmatprep.subr.bf16.mxu0 0
    %1969 = vmatpush2.bf16.msra.mxu0 0
    %1970 = vmatprep.subr.bf16.mxu0 0
    %1971 = vmatpush2.bf16.msra.mxu0 0
    %1972 = vmatprep.subr.bf16.mxu0 0
    %1973 = vmatpush2.bf16.msra.mxu0 0
    %1974 = vmatprep.subr.bf16.mxu0 0
    %1975 = vmatpush2.bf16.msra.mxu0 0
    %1976 = vmatprep.subr.bf16.mxu0 0
    %1977 = vmatpush2.bf16.msra.mxu0 0
    %1978 = vmatprep.subr.bf16.mxu0 0
    %1979 = vmatpush2.bf16.msra.mxu0 0
    %1980 = vmatprep.subr.bf16.mxu0 0
    %1981 = vmatpush2.bf16.msra.mxu0 0
    %1982 = vmatprep.subr.bf16.mxu0 0
    %1983 = vmatpush2.bf16.msra.mxu0 0
    %1984 = vmatprep.mubr.bf16.mxu0 0
    %1985 = vmatmul.mubr.bf16.gmra.mxu0 %v1950
    %v1986 = vpop.f32.mrf.mxu0
    %v1987 = vadd.f32 0.0, %v1986
    %v1988 = vpop.f32.mrf.mxu0
    %v1989 = vpop.f32.mrf.mxu0
    %v1990 = vadd.f32 0.0, %v1989
    %v1991 = vpop.f32.mrf.mxu0
    %1992 = vdwg.mxu0
    %vm1993 = vcmp.ge.f32.partialorder %v1987, 0.0
    %vm1994 = vcmp.ge.f32.partialorder %v1990, 0.0
    %v1995 = vmul.f32 %v1987, 0.2
    %v1996 = vmul.f32 %v1990, 0.2
    %v1997 = vsel %vm1993, %v1987, %v1995
    %v1998 = vsel %vm1994, %v1990, %v1996
    %v1999 = vsel %vm391, %v1997, -inf
    %v2000 = vsel %vm391, %v1998, -inf
    %v2001 = vmax.f32 %v1999, %v2000
    %v2002 = vrot.slane %v2001, 4
    %v2003 = vmax.f32 %v2001, %v2002
    %v2004 = vrot.slane %v2003, 2
    %v2005 = vmax.f32 %v2003, %v2004
    %v2006 = vrot.slane %v2005, 1
    %v2007 = vmax.f32 %v2005, %v2006
    %v2008 = vsub.f32 %v1997, %v2007
    %v2009 = vsub.f32 %v1998, %v2007
    %v2010 = vmul.f32 %v2008, 1.442695
    %v2011 = vpow.pop %v2010
    %v2012 = vmul.f32 %v2009, 1.442695
    %v2013 = vpow.pop %v2012
    %v2014 = vpack.c.bf16 %v2013, %v2011
    %2015 = vmatprep.subr.bf16.mxu0 0
    %2016 = vmatpush1.bf16.msra.mxu0 0
    %2017 = vmatprep.subr.bf16.mxu0 0
    %2018 = vmatpush1.bf16.msra.mxu0 0
    %2019 = vmatprep.subr.bf16.mxu0 0
    %2020 = vmatpush1.bf16.msra.mxu0 0
    %2021 = vmatprep.subr.bf16.mxu0 0
    %2022 = vmatpush1.bf16.msra.mxu0 0
    %2023 = vmatprep.subr.bf16.mxu0 0
    %2024 = vmatpush1.bf16.msra.mxu0 0
    %2025 = vmatprep.subr.bf16.mxu0 0
    %2026 = vmatpush1.bf16.msra.mxu0 0
    %2027 = vmatprep.subr.bf16.mxu0 0
    %2028 = vmatpush1.bf16.msra.mxu0 0
    %2029 = vmatprep.subr.bf16.mxu0 0
    %2030 = vmatpush1.bf16.msra.mxu0 %v2014
    %2031 = vmatprep.subr.bf16.mxu0 0
    %2032 = vmatpush2.bf16.msra.mxu0 0
    %2033 = vmatprep.subr.bf16.mxu0 0
    %2034 = vmatpush2.bf16.msra.mxu0 0
    %2035 = vmatprep.subr.bf16.mxu0 0
    %2036 = vmatpush2.bf16.msra.mxu0 0
    %2037 = vmatprep.subr.bf16.mxu0 0
    %2038 = vmatpush2.bf16.msra.mxu0 0
    %2039 = vmatprep.subr.bf16.mxu0 0
    %2040 = vmatpush2.bf16.msra.mxu0 0
    %2041 = vmatprep.subr.bf16.mxu0 0
    %2042 = vmatpush2.bf16.msra.mxu0 0
    %2043 = vmatprep.subr.bf16.mxu0 0
    %2044 = vmatpush2.bf16.msra.mxu0 0
    %2045 = vmatprep.subr.bf16.mxu0 0
    %2046 = vmatpush2.bf16.msra.mxu0 0
    %2047 = vmatprep.mubr.bf16.mxu0 0
    %2048 = vmatmul.mubr.bf16.gmra.mxu0 %v477
    %v2049 = vpop.f32.mrf.mxu0
    %v2050 = vadd.f32 0.0, %v2049
    %v2051 = vpop.f32.mrf.mxu0
    %v2052 = vpop.f32.mrf.mxu0
    %v2053 = vpop.f32.mrf.mxu0
    %2054 = vdwg.mxu0
    %v2055 = vpack.c.bf16 %v2050, %v2050
    %v2057 = vsel %vm270, %v2055, 0
    %2059 = vmatprep.subr.bf16.mxu0 0
    %2060 = vmatpush1.bf16.msra.mxu0 0
    %2061 = vmatprep.subr.bf16.mxu0 0
    %2062 = vmatpush1.bf16.msra.mxu0 0
    %2063 = vmatprep.subr.bf16.mxu0 0
    %2064 = vmatpush1.bf16.msra.mxu0 0
    %2065 = vmatprep.subr.bf16.mxu0 0
    %2066 = vmatpush1.bf16.msra.mxu0 0
    %2067 = vmatprep.subr.bf16.mxu0 0
    %2068 = vmatpush1.bf16.msra.mxu0 0
    %2069 = vmatprep.subr.bf16.mxu0 0
    %2070 = vmatpush1.bf16.msra.mxu0 0
    %2071 = vmatprep.subr.bf16.mxu0 0
    %2072 = vmatpush1.bf16.msra.mxu0 0
    %2073 = vmatprep.subr.bf16.mxu0 0
    %2074 = vmatpush1.bf16.msra.mxu0 %v2057
    %2075 = vmatprep.subr.bf16.mxu0 0
    %2076 = vmatpush2.bf16.msra.mxu0 0
    %2077 = vmatprep.subr.bf16.mxu0 0
    %2078 = vmatpush2.bf16.msra.mxu0 0
    %2079 = vmatprep.subr.bf16.mxu0 0
    %2080 = vmatpush2.bf16.msra.mxu0 0
    %2081 = vmatprep.subr.bf16.mxu0 0
    %2082 = vmatpush2.bf16.msra.mxu0 0
    %2083 = vmatprep.subr.bf16.mxu0 0
    %2084 = vmatpush2.bf16.msra.mxu0 0
    %2085 = vmatprep.subr.bf16.mxu0 0
    %2086 = vmatpush2.bf16.msra.mxu0 0
    %2087 = vmatprep.subr.bf16.mxu0 0
    %2088 = vmatpush2.bf16.msra.mxu0 0
    %2089 = vmatprep.subr.bf16.mxu0 0
    %2090 = vmatpush2.bf16.msra.mxu0 0
    %2091 = vmatprep.mubr.bf16.mxu0 0
    %2092 = vmatmul.mubr.bf16.gmra.mxu0 %v321
    %v2093 = vpop.f32.mrf.mxu0
    %v2094 = vadd.f32 0.0, %v2093
    %v2095 = vpop.f32.mrf.mxu0
    %v2096 = vpop.f32.mrf.mxu0
    %v2097 = vadd.f32 0.0, %v2096
    %v2098 = vpop.f32.mrf.mxu0
    %2099 = vdwg.mxu0
    %v2100 = vmax.f32 %v2094, 1e-30
    %v2101 = vmax.f32 %v2097, 1e-30
    %v2102 = vrcp.pop %v2100
    %v2103 = vrcp.pop %v2101
    %v2104 = vmul.f32 %v2011, %v2102
    %v2105 = vmul.f32 %v2013, %v2103
    %v2106 = vmul.f32 %v1643, %v2104
    %v2107 = vmul.f32 %v1646, %v2105
    %v2108 = vpack.c.bf16 %v2107, %v2106
    %2109 = vmatprep.subr.bf16.mxu0 0
    %2110 = vmatpush1.bf16.msra.mxu0 0
    %2111 = vmatprep.subr.bf16.mxu0 0
    %2112 = vmatpush1.bf16.msra.mxu0 0
    %2113 = vmatprep.subr.bf16.mxu0 0
    %2114 = vmatpush1.bf16.msra.mxu0 0
    %2115 = vmatprep.subr.bf16.mxu0 0
    %2116 = vmatpush1.bf16.msra.mxu0 0
    %2117 = vmatprep.subr.bf16.mxu0 0
    %2118 = vmatpush1.bf16.msra.mxu0 0
    %2119 = vmatprep.subr.bf16.mxu0 0
    %2120 = vmatpush1.bf16.msra.mxu0 0
    %2121 = vmatprep.subr.bf16.mxu0 0
    %2122 = vmatpush1.bf16.msra.mxu0 0
    %2123 = vmatprep.subr.bf16.mxu0 0
    %2124 = vmatpush1.bf16.msra.mxu0 %v1921
    %2125 = vmatprep.subr.bf16.mxu0 0
    %2126 = vmatpush2.bf16.msra.mxu0 0
    %2127 = vmatprep.subr.bf16.mxu0 0
    %2128 = vmatpush2.bf16.msra.mxu0 0
    %2129 = vmatprep.subr.bf16.mxu0 0
    %2130 = vmatpush2.bf16.msra.mxu0 0
    %2131 = vmatprep.subr.bf16.mxu0 0
    %2132 = vmatpush2.bf16.msra.mxu0 0
    %2133 = vmatprep.subr.bf16.mxu0 0
    %2134 = vmatpush2.bf16.msra.mxu0 0
    %2135 = vmatprep.subr.bf16.mxu0 0
    %2136 = vmatpush2.bf16.msra.mxu0 0
    %2137 = vmatprep.subr.bf16.mxu0 0
    %2138 = vmatpush2.bf16.msra.mxu0 0
    %2139 = vmatprep.subr.bf16.mxu0 0
    %2140 = vmatpush2.bf16.msra.mxu0 0
    %2141 = vmatprep.mubr.bf16.mxu0 0
    %2142 = vmatmul.mubr.bf16.gmra.mxu0 %v477
    %v2143 = vpop.f32.mrf.mxu0
    %v2144 = vadd.f32 %v1583, %v2143
    %v2145 = vpop.f32.mrf.mxu0
    %v2146 = vpop.f32.mrf.mxu0
    %v2147 = vpop.f32.mrf.mxu0
    %2148 = vdwg.mxu0
    %v2149 = vmax.f32 %v2144, 0.0
    %2150 = vmatprep.subr.bf16.mxu0 0
    %2151 = vmatpush1.bf16.msra.mxu0 0
    %2152 = vmatprep.subr.bf16.mxu0 0
    %2153 = vmatpush1.bf16.msra.mxu0 0
    %2154 = vmatprep.subr.bf16.mxu0 0
    %2155 = vmatpush1.bf16.msra.mxu0 0
    %2156 = vmatprep.subr.bf16.mxu0 0
    %2157 = vmatpush1.bf16.msra.mxu0 0
    %2158 = vmatprep.subr.bf16.mxu0 0
    %2159 = vmatpush1.bf16.msra.mxu0 0
    %2160 = vmatprep.subr.bf16.mxu0 0
    %2161 = vmatpush1.bf16.msra.mxu0 0
    %2162 = vmatprep.subr.bf16.mxu0 0
    %2163 = vmatpush1.bf16.msra.mxu0 0
    %2164 = vmatprep.subr.bf16.mxu0 0
    %2165 = vmatpush1.bf16.msra.mxu0 %v2108
    %2166 = vmatprep.subr.bf16.mxu0 0
    %2167 = vmatpush2.bf16.msra.mxu0 0
    %2168 = vmatprep.subr.bf16.mxu0 0
    %2169 = vmatpush2.bf16.msra.mxu0 0
    %2170 = vmatprep.subr.bf16.mxu0 0
    %2171 = vmatpush2.bf16.msra.mxu0 0
    %2172 = vmatprep.subr.bf16.mxu0 0
    %2173 = vmatpush2.bf16.msra.mxu0 0
    %2174 = vmatprep.subr.bf16.mxu0 0
    %2175 = vmatpush2.bf16.msra.mxu0 0
    %2176 = vmatprep.subr.bf16.mxu0 0
    %2177 = vmatpush2.bf16.msra.mxu0 0
    %2178 = vmatprep.subr.bf16.mxu0 0
    %2179 = vmatpush2.bf16.msra.mxu0 0
    %2180 = vmatprep.subr.bf16.mxu0 0
    %2181 = vmatpush2.bf16.msra.mxu0 0
    %2182 = vmatprep.mubr.bf16.mxu0 0
    %2183 = vmatmul.mubr.bf16.gmra.mxu0 %v477
    %v2184 = vpop.f32.mrf.mxu0
    %v2185 = vadd.f32 %v1583, %v2184
    %v2186 = vpop.f32.mrf.mxu0
    %v2187 = vpop.f32.mrf.mxu0
    %v2188 = vpop.f32.mrf.mxu0
    %2189 = vdwg.mxu0
    %v2190 = vmax.f32 %v2185, 0.0
    %v2191 = vpack.c.bf16 %v2149, %v2149
    %v2192 = vpack.c.bf16 %v2190, %v2190
    %v2201 = vunpack.c.l.b16 %v1485
    %v2202 = vunpack.c.l.b16 %v1486
    %v2203 = vunpack.c.l.b16 %v1487
    %v2204 = vunpack.c.l.b16 %v1488
    %v2205 = vunpack.c.l.b16 %v1489
    %v2206 = vunpack.c.l.b16 %v1490
    %v2207 = vunpack.c.l.b16 %v1491
    %v2208 = vunpack.c.l.b16 %v1492
    %v2209 = vpack.c.b16 %v2202, %v2201
    %v2210 = vpack.c.b16 %v2204, %v2203
    %v2211 = vpack.c.b16 %v2206, %v2205
    %v2212 = vpack.c.b16 %v2208, %v2207
    %v2218 = vsel %vm391, %v2192, 0
    %2220 = vmatprep.subr.bf16.mxu0 0
    %2221 = vmatpush1.bf16.msra.mxu0 0
    %2222 = vmatprep.subr.bf16.mxu0 0
    %2223 = vmatpush1.bf16.msra.mxu0 0
    %2224 = vmatprep.subr.bf16.mxu0 0
    %2225 = vmatpush1.bf16.msra.mxu0 0
    %2226 = vmatprep.subr.bf16.mxu0 0
    %2227 = vmatpush1.bf16.msra.mxu0 0
    %2228 = vmatprep.subr.bf16.mxu0 0
    %2229 = vmatpush1.bf16.msra.mxu0 %v2212
    %2230 = vmatprep.subr.bf16.mxu0 0
    %2231 = vmatpush1.bf16.msra.mxu0 %v2211
    %2232 = vmatprep.subr.bf16.mxu0 0
    %2233 = vmatpush1.bf16.msra.mxu0 %v2210
    %2234 = vmatprep.subr.bf16.mxu0 0
    %2235 = vmatpush1.bf16.msra.mxu0 %v2209
    %2236 = vmatprep.subr.bf16.mxu0 0
    %2237 = vmatpush2.bf16.msra.mxu0 0
    %2238 = vmatprep.subr.bf16.mxu0 0
    %2239 = vmatpush2.bf16.msra.mxu0 0
    %2240 = vmatprep.subr.bf16.mxu0 0
    %2241 = vmatpush2.bf16.msra.mxu0 0
    %2242 = vmatprep.subr.bf16.mxu0 0
    %2243 = vmatpush2.bf16.msra.mxu0 0
    %2244 = vmatprep.subr.bf16.mxu0 0
    %2245 = vmatpush2.bf16.msra.mxu0 0
    %2246 = vmatprep.subr.bf16.mxu0 0
    %2247 = vmatpush2.bf16.msra.mxu0 0
    %2248 = vmatprep.subr.bf16.mxu0 0
    %2249 = vmatpush2.bf16.msra.mxu0 0
    %2250 = vmatprep.subr.bf16.mxu0 0
    %2251 = vmatpush2.bf16.msra.mxu0 0
    %2252 = vmatprep.mubr.bf16.mxu0 0
    %2253 = vmatmul.mubr.bf16.gmra.mxu0 %v2218
    %v2254 = vpop.f32.mrf.mxu0
    %v2255 = vadd.f32 0.0, %v2254
    %v2256 = vpop.f32.mrf.mxu0
    %v2257 = vpop.f32.mrf.mxu0
    %v2258 = vpop.f32.mrf.mxu0
    %2259 = vdwg.mxu0
    %v2268 = vunpack.c.l.b16 %v1477
    %v2269 = vunpack.c.l.b16 %v1478
    %v2270 = vunpack.c.l.b16 %v1479
    %v2271 = vunpack.c.l.b16 %v1480
    %v2272 = vunpack.c.l.b16 %v1481
    %v2273 = vunpack.c.l.b16 %v1482
    %v2274 = vunpack.c.l.b16 %v1483
    %v2275 = vunpack.c.l.b16 %v1484
    %v2276 = vpack.c.b16 %v2269, %v2268
    %v2277 = vpack.c.b16 %v2271, %v2270
    %v2278 = vpack.c.b16 %v2273, %v2272
    %v2279 = vpack.c.b16 %v2275, %v2274
    %v2285 = vsel %vm391, %v2191, 0
    %2287 = vmatprep.subr.bf16.mxu0 0
    %2288 = vmatpush1.bf16.msra.mxu0 0
    %2289 = vmatprep.subr.bf16.mxu0 0
    %2290 = vmatpush1.bf16.msra.mxu0 0
    %2291 = vmatprep.subr.bf16.mxu0 0
    %2292 = vmatpush1.bf16.msra.mxu0 0
    %2293 = vmatprep.subr.bf16.mxu0 0
    %2294 = vmatpush1.bf16.msra.mxu0 0
    %2295 = vmatprep.subr.bf16.mxu0 0
    %2296 = vmatpush1.bf16.msra.mxu0 %v2279
    %2297 = vmatprep.subr.bf16.mxu0 0
    %2298 = vmatpush1.bf16.msra.mxu0 %v2278
    %2299 = vmatprep.subr.bf16.mxu0 0
    %2300 = vmatpush1.bf16.msra.mxu0 %v2277
    %2301 = vmatprep.subr.bf16.mxu0 0
    %2302 = vmatpush1.bf16.msra.mxu0 %v2276
    %2303 = vmatprep.subr.bf16.mxu0 0
    %2304 = vmatpush2.bf16.msra.mxu0 0
    %2305 = vmatprep.subr.bf16.mxu0 0
    %2306 = vmatpush2.bf16.msra.mxu0 0
    %2307 = vmatprep.subr.bf16.mxu0 0
    %2308 = vmatpush2.bf16.msra.mxu0 0
    %2309 = vmatprep.subr.bf16.mxu0 0
    %2310 = vmatpush2.bf16.msra.mxu0 0
    %2311 = vmatprep.subr.bf16.mxu0 0
    %2312 = vmatpush2.bf16.msra.mxu0 0
    %2313 = vmatprep.subr.bf16.mxu0 0
    %2314 = vmatpush2.bf16.msra.mxu0 0
    %2315 = vmatprep.subr.bf16.mxu0 0
    %2316 = vmatpush2.bf16.msra.mxu0 0
    %2317 = vmatprep.subr.bf16.mxu0 0
    %2318 = vmatpush2.bf16.msra.mxu0 0
    %2319 = vmatprep.mubr.bf16.mxu0 0
    %2320 = vmatmul.mubr.bf16.gmra.mxu0 %v2285
    %v2321 = vpop.f32.mrf.mxu0
    %v2322 = vadd.f32 %v2255, %v2321
    %v2323 = vpop.f32.mrf.mxu0
    %v2324 = vpop.f32.mrf.mxu0
    %v2325 = vpop.f32.mrf.mxu0
    %2326 = vdwg.mxu0
    %v2327 = vlaneseq
    %v2328 = vshrl.u32 %v2327, 7
    %v2329 = vsub.s32 0, %v2328
    %v2330 = vrot.slane %v1519, %v2329
    %v2331 = vadd.f32 %v2322, %v2330
    %v2332 = vmax.f32 %v2331, 0.0
    %2334 = vrot.lane.b32.xlu0 %v2332, 96
    %v2335 = vpop.permute.xlu0 %2334
    %v2337 = vadd.f32 %v2332, %v2335
    %v2338 = vmul.f32 %v2337, 0.5
    %2340 = vrot.lane.b32.xlu0 %v1583, 96
    %v2341 = vpop.permute.xlu0 %2340
    %v2343 = vadd.f32 %v1583, %v2341
    %v2344 = vmul.f32 %v2343, 0.5
    %v2345 = vpack.c.bf16 %v2338, %v2338
    %v2346 = vlaneseq
    %v2347 = vshrl.u32 %v2346, 7
    %v2348 = vsub.s32 0, %v2347
    %v2349 = vrot.slane %v1520, %v2348
    %v2354 = vunpack.c.l.b16 %v1493
    %v2355 = vunpack.c.l.b16 %v1494
    %v2356 = vunpack.c.l.b16 %v1495
    %v2357 = vunpack.c.l.b16 %v1496
    %v2358 = vpack.c.b16 %v2355, %v2354
    %v2359 = vpack.c.b16 %v2357, %v2356
    %v2363 = vsel %vm1013, %v2345, 0
    %2365 = vmatprep.subr.bf16.mxu0 0
    %2366 = vmatpush1.bf16.msra.mxu0 0
    %2367 = vmatprep.subr.bf16.mxu0 0
    %2368 = vmatpush1.bf16.msra.mxu0 0
    %2369 = vmatprep.subr.bf16.mxu0 0
    %2370 = vmatpush1.bf16.msra.mxu0 0
    %2371 = vmatprep.subr.bf16.mxu0 0
    %2372 = vmatpush1.bf16.msra.mxu0 0
    %2373 = vmatprep.subr.bf16.mxu0 0
    %2374 = vmatpush1.bf16.msra.mxu0 0
    %2375 = vmatprep.subr.bf16.mxu0 0
    %2376 = vmatpush1.bf16.msra.mxu0 0
    %2377 = vmatprep.subr.bf16.mxu0 0
    %2378 = vmatpush1.bf16.msra.mxu0 %v2359
    %2379 = vmatprep.subr.bf16.mxu0 0
    %2380 = vmatpush1.bf16.msra.mxu0 %v2358
    %2381 = vmatprep.subr.bf16.mxu0 0
    %2382 = vmatpush2.bf16.msra.mxu0 0
    %2383 = vmatprep.subr.bf16.mxu0 0
    %2384 = vmatpush2.bf16.msra.mxu0 0
    %2385 = vmatprep.subr.bf16.mxu0 0
    %2386 = vmatpush2.bf16.msra.mxu0 0
    %2387 = vmatprep.subr.bf16.mxu0 0
    %2388 = vmatpush2.bf16.msra.mxu0 0
    %2389 = vmatprep.subr.bf16.mxu0 0
    %2390 = vmatpush2.bf16.msra.mxu0 0
    %2391 = vmatprep.subr.bf16.mxu0 0
    %2392 = vmatpush2.bf16.msra.mxu0 0
    %2393 = vmatprep.subr.bf16.mxu0 0
    %2394 = vmatpush2.bf16.msra.mxu0 0
    %2395 = vmatprep.subr.bf16.mxu0 0
    %2396 = vmatpush2.bf16.msra.mxu0 0
    %2397 = vmatprep.mubr.bf16.mxu0 0
    %2398 = vmatmul.mubr.bf16.gmra.mxu0 %v2363
    %v2399 = vpop.f32.mrf.mxu0
    %v2400 = vadd.f32 %v2349, %v2399
    %v2401 = vpop.f32.mrf.mxu0
    %v2402 = vpop.f32.mrf.mxu0
    %v2403 = vpop.f32.mrf.mxu0
    %2404 = vdwg.mxu0
    %v2405 = vpack.c.bf16 %v2344, %v2344
    %v2406 = vlaneseq
    %v2407 = vshrl.u32 %v2406, 7
    %v2408 = vsub.s32 0, %v2407
    %v2409 = vrot.slane %v1521, %v2408
    %v2414 = vunpack.c.l.b16 %v1497
    %v2415 = vunpack.c.l.b16 %v1498
    %v2416 = vunpack.c.l.b16 %v1499
    %v2417 = vunpack.c.l.b16 %v1500
    %v2418 = vpack.c.b16 %v2415, %v2414
    %v2419 = vpack.c.b16 %v2417, %v2416
    %v2423 = vsel %vm1013, %v2405, 0
    %2425 = vmatprep.subr.bf16.mxu0 0
    %2426 = vmatpush1.bf16.msra.mxu0 0
    %2427 = vmatprep.subr.bf16.mxu0 0
    %2428 = vmatpush1.bf16.msra.mxu0 0
    %2429 = vmatprep.subr.bf16.mxu0 0
    %2430 = vmatpush1.bf16.msra.mxu0 0
    %2431 = vmatprep.subr.bf16.mxu0 0
    %2432 = vmatpush1.bf16.msra.mxu0 0
    %2433 = vmatprep.subr.bf16.mxu0 0
    %2434 = vmatpush1.bf16.msra.mxu0 0
    %2435 = vmatprep.subr.bf16.mxu0 0
    %2436 = vmatpush1.bf16.msra.mxu0 0
    %2437 = vmatprep.subr.bf16.mxu0 0
    %2438 = vmatpush1.bf16.msra.mxu0 %v2419
    %2439 = vmatprep.subr.bf16.mxu0 0
    %2440 = vmatpush1.bf16.msra.mxu0 %v2418
    %2441 = vmatprep.subr.bf16.mxu0 0
    %2442 = vmatpush2.bf16.msra.mxu0 0
    %2443 = vmatprep.subr.bf16.mxu0 0
    %2444 = vmatpush2.bf16.msra.mxu0 0
    %2445 = vmatprep.subr.bf16.mxu0 0
    %2446 = vmatpush2.bf16.msra.mxu0 0
    %2447 = vmatprep.subr.bf16.mxu0 0
    %2448 = vmatpush2.bf16.msra.mxu0 0
    %2449 = vmatprep.subr.bf16.mxu0 0
    %2450 = vmatpush2.bf16.msra.mxu0 0
    %2451 = vmatprep.subr.bf16.mxu0 0
    %2452 = vmatpush2.bf16.msra.mxu0 0
    %2453 = vmatprep.subr.bf16.mxu0 0
    %2454 = vmatpush2.bf16.msra.mxu0 0
    %2455 = vmatprep.subr.bf16.mxu0 0
    %2456 = vmatpush2.bf16.msra.mxu0 0
    %2457 = vmatprep.mubr.bf16.mxu0 0
    %2458 = vmatmul.mubr.bf16.gmra.mxu0 %v2423
    %v2459 = vpop.f32.mrf.mxu0
    %v2460 = vadd.f32 %v2409, %v2459
    %v2461 = vpop.f32.mrf.mxu0
    %v2462 = vpop.f32.mrf.mxu0
    %v2463 = vpop.f32.mrf.mxu0
    %2464 = vdwg.mxu0
    %v2465 = vadd.f32 %v2400, %v2460
    %v2466 = vxor.u32 %v2465, 2147483648
    %v2467 = vmul.f32 %v2466, 1.442695
    %v2468 = vpow.pop %v2467
    %v2469 = vadd.f32 %v2468, 1.0
    %v2470 = vrcp.pop %v2469
    %v2471 = vmul.f32 1.0, %v2470
    %2473 = vrot.lane.b32.xlu0 %v2460, 64
    %v2474 = vpop.permute.xlu0 %2473
    %v2476 = vmul.f32 %v2471, %v2474
    %2478 = vrot.lane.b32.xlu0 %v2476, 64
    %v2479 = vpop.permute.xlu0 %2478
    %v2481 = vadd.f32 %v2400, %v2479
    %v2482 = vtanh.pop %v2481
    %v2483 = vsub.f32 1.0, %v2471
    %2485 = vrot.lane.b32.xlu0 %v2482, 96
    %v2486 = vpop.permute.xlu0 %2485
    %v2488 = vmul.f32 %v2483, %v2486
    %2490 = vrot.lane.b32.xlu0 %v2344, 32
    %v2491 = vpop.permute.xlu0 %2490
    %v2493 = vmul.f32 %v2471, %v2491
    %v2494 = vadd.f32 %v2488, %v2493
    %v2495 = vlaneseq
    %v2496 = vshrl.u32 %v2495, 7
    %v2497 = vsub.s32 0, %v2496
    %v2498 = vrot.slane %v1522, %v2497
    %v2503 = vunpack.c.l.b16 %v1501
    %v2504 = vunpack.c.l.b16 %v1502
    %v2505 = vunpack.c.l.b16 %v1503
    %v2506 = vunpack.c.l.b16 %v1504
    %v2507 = vpack.c.b16 %v2504, %v2503
    %v2508 = vpack.c.b16 %v2506, %v2505
    %2511 = vmatprep.subr.bf16.mxu0 0
    %2512 = vmatpush1.bf16.msra.mxu0 0
    %2513 = vmatprep.subr.bf16.mxu0 0
    %2514 = vmatpush1.bf16.msra.mxu0 0
    %2515 = vmatprep.subr.bf16.mxu0 0
    %2516 = vmatpush1.bf16.msra.mxu0 0
    %2517 = vmatprep.subr.bf16.mxu0 0
    %2518 = vmatpush1.bf16.msra.mxu0 0
    %2519 = vmatprep.subr.bf16.mxu0 0
    %2520 = vmatpush1.bf16.msra.mxu0 0
    %2521 = vmatprep.subr.bf16.mxu0 0
    %2522 = vmatpush1.bf16.msra.mxu0 0
    %2523 = vmatprep.subr.bf16.mxu0 0
    %2524 = vmatpush1.bf16.msra.mxu0 %v2508
    %2525 = vmatprep.subr.bf16.mxu0 0
    %2526 = vmatpush1.bf16.msra.mxu0 %v2507
    %2527 = vmatprep.subr.bf16.mxu0 0
    %2528 = vmatpush2.bf16.msra.mxu0 0
    %2529 = vmatprep.subr.bf16.mxu0 0
    %2530 = vmatpush2.bf16.msra.mxu0 0
    %2531 = vmatprep.subr.bf16.mxu0 0
    %2532 = vmatpush2.bf16.msra.mxu0 0
    %2533 = vmatprep.subr.bf16.mxu0 0
    %2534 = vmatpush2.bf16.msra.mxu0 0
    %2535 = vmatprep.subr.bf16.mxu0 0
    %2536 = vmatpush2.bf16.msra.mxu0 0
    %2537 = vmatprep.subr.bf16.mxu0 0
    %2538 = vmatpush2.bf16.msra.mxu0 0
    %2539 = vmatprep.subr.bf16.mxu0 0
    %2540 = vmatpush2.bf16.msra.mxu0 0
    %2541 = vmatprep.subr.bf16.mxu0 0
    %2542 = vmatpush2.bf16.msra.mxu0 0
    %2543 = vmatprep.mubr.bf16.mxu0 0
    %2544 = vmatmul.mubr.bf16.gmra.mxu0 %v1546
    %v2545 = vpop.f32.mrf.mxu0
    %v2546 = vadd.f32 %v2498, %v2545
    %v2547 = vpop.f32.mrf.mxu0
    %v2548 = vpop.f32.mrf.mxu0
    %v2549 = vpop.f32.mrf.mxu0
    %2550 = vdwg.mxu0
    %v2551 = vmax.f32 %v2546, 0.0
    %v2552 = vpack.c.bf16 %v2551, %v2551
    %v2554 = vsel %vm270, %v2552, 0
    %2556 = vmatprep.subr.bf16.mxu0 0
    %2557 = vmatpush1.bf16.msra.mxu0 0
    %2558 = vmatprep.subr.bf16.mxu0 0
    %2559 = vmatpush1.bf16.msra.mxu0 0
    %2560 = vmatprep.subr.bf16.mxu0 0
    %2561 = vmatpush1.bf16.msra.mxu0 0
    %2562 = vmatprep.subr.bf16.mxu0 0
    %2563 = vmatpush1.bf16.msra.mxu0 0
    %2564 = vmatprep.subr.bf16.mxu0 0
    %2565 = vmatpush1.bf16.msra.mxu0 0
    %2566 = vmatprep.subr.bf16.mxu0 0
    %2567 = vmatpush1.bf16.msra.mxu0 0
    %2568 = vmatprep.subr.bf16.mxu0 0
    %2569 = vmatpush1.bf16.msra.mxu0 0
    %2570 = vmatprep.subr.bf16.mxu0 0
    %2571 = vmatpush1.bf16.msra.mxu0 %v2554
    %2572 = vmatprep.subr.bf16.mxu0 0
    %2573 = vmatpush2.bf16.msra.mxu0 0
    %2574 = vmatprep.subr.bf16.mxu0 0
    %2575 = vmatpush2.bf16.msra.mxu0 0
    %2576 = vmatprep.subr.bf16.mxu0 0
    %2577 = vmatpush2.bf16.msra.mxu0 0
    %2578 = vmatprep.subr.bf16.mxu0 0
    %2579 = vmatpush2.bf16.msra.mxu0 0
    %2580 = vmatprep.subr.bf16.mxu0 0
    %2581 = vmatpush2.bf16.msra.mxu0 0
    %2582 = vmatprep.subr.bf16.mxu0 0
    %2583 = vmatpush2.bf16.msra.mxu0 0
    %2584 = vmatprep.subr.bf16.mxu0 0
    %2585 = vmatpush2.bf16.msra.mxu0 0
    %2586 = vmatprep.subr.bf16.mxu0 0
    %2587 = vmatpush2.bf16.msra.mxu0 0
    %2588 = vmatprep.mubr.bf16.mxu0 0
    %2589 = vmatmul.mubr.bf16.gmra.mxu0 %v321
    %v2590 = vpop.f32.mrf.mxu0
    %v2591 = vadd.f32 0.0, %v2590
    %v2592 = vpop.f32.mrf.mxu0
    %v2593 = vpop.f32.mrf.mxu0
    %v2594 = vadd.f32 0.0, %v2593
    %v2595 = vpop.f32.mrf.mxu0
    %2596 = vdwg.mxu0
    %2597 = vmatprep.subr.bf16.mxu0 0
    %2598 = vmatpush1.bf16.msra.mxu0 0
    %2599 = vmatprep.subr.bf16.mxu0 0
    %2600 = vmatpush1.bf16.msra.mxu0 0
    %2601 = vmatprep.subr.bf16.mxu0 0
    %2602 = vmatpush1.bf16.msra.mxu0 0
    %2603 = vmatprep.subr.bf16.mxu0 0
    %2604 = vmatpush1.bf16.msra.mxu0 0
    %2605 = vmatprep.subr.bf16.mxu0 0
    %2606 = vmatpush1.bf16.msra.mxu0 0
    %2607 = vmatprep.subr.bf16.mxu0 0
    %2608 = vmatpush1.bf16.msra.mxu0 0
    %2609 = vmatprep.subr.bf16.mxu0 0
    %2610 = vmatpush1.bf16.msra.mxu0 0
    %2611 = vmatprep.subr.bf16.mxu0 0
    %2612 = vmatpush1.bf16.msra.mxu0 %v2554
    %2613 = vmatprep.subr.bf16.mxu0 0
    %2614 = vmatpush2.bf16.msra.mxu0 0
    %2615 = vmatprep.subr.bf16.mxu0 0
    %2616 = vmatpush2.bf16.msra.mxu0 0
    %2617 = vmatprep.subr.bf16.mxu0 0
    %2618 = vmatpush2.bf16.msra.mxu0 0
    %2619 = vmatprep.subr.bf16.mxu0 0
    %2620 = vmatpush2.bf16.msra.mxu0 0
    %2621 = vmatprep.subr.bf16.mxu0 0
    %2622 = vmatpush2.bf16.msra.mxu0 0
    %2623 = vmatprep.subr.bf16.mxu0 0
    %2624 = vmatpush2.bf16.msra.mxu0 0
    %2625 = vmatprep.subr.bf16.mxu0 0
    %2626 = vmatpush2.bf16.msra.mxu0 0
    %2627 = vmatprep.subr.bf16.mxu0 0
    %2628 = vmatpush2.bf16.msra.mxu0 0
    %2629 = vmatprep.mubr.bf16.mxu0 0
    %2630 = vmatmul.mubr.bf16.gmra.mxu0 %v268
    %v2631 = vpop.f32.mrf.mxu0
    %v2632 = vadd.f32 %v2591, %v2631
    %v2633 = vpop.f32.mrf.mxu0
    %v2634 = vpop.f32.mrf.mxu0
    %v2635 = vadd.f32 %v2594, %v2634
    %v2636 = vpop.f32.mrf.mxu0
    %2637 = vdwg.mxu0
    %v2638 = vlaneseq
    %v2639 = vshrl.u32 %v2638, 7
    %v2640 = vsub.s32 0, %v2639
    %v2641 = vrot.slane %v1523, %v2640
    %v2646 = vunpack.c.l.b16 %v1505
    %v2647 = vunpack.c.l.b16 %v1506
    %v2648 = vunpack.c.l.b16 %v1507
    %v2649 = vunpack.c.l.b16 %v1508
    %v2650 = vpack.c.b16 %v2647, %v2646
    %v2651 = vpack.c.b16 %v2649, %v2648
    %2654 = vmatprep.subr.bf16.mxu0 0
    %2655 = vmatpush1.bf16.msra.mxu0 0
    %2656 = vmatprep.subr.bf16.mxu0 0
    %2657 = vmatpush1.bf16.msra.mxu0 0
    %2658 = vmatprep.subr.bf16.mxu0 0
    %2659 = vmatpush1.bf16.msra.mxu0 0
    %2660 = vmatprep.subr.bf16.mxu0 0
    %2661 = vmatpush1.bf16.msra.mxu0 0
    %2662 = vmatprep.subr.bf16.mxu0 0
    %2663 = vmatpush1.bf16.msra.mxu0 0
    %2664 = vmatprep.subr.bf16.mxu0 0
    %2665 = vmatpush1.bf16.msra.mxu0 0
    %2666 = vmatprep.subr.bf16.mxu0 0
    %2667 = vmatpush1.bf16.msra.mxu0 %v2651
    %2668 = vmatprep.subr.bf16.mxu0 0
    %2669 = vmatpush1.bf16.msra.mxu0 %v2650
    %2670 = vmatprep.subr.bf16.mxu0 0
    %2671 = vmatpush2.bf16.msra.mxu0 0
    %2672 = vmatprep.subr.bf16.mxu0 0
    %2673 = vmatpush2.bf16.msra.mxu0 0
    %2674 = vmatprep.subr.bf16.mxu0 0
    %2675 = vmatpush2.bf16.msra.mxu0 0
    %2676 = vmatprep.subr.bf16.mxu0 0
    %2677 = vmatpush2.bf16.msra.mxu0 0
    %2678 = vmatprep.subr.bf16.mxu0 0
    %2679 = vmatpush2.bf16.msra.mxu0 0
    %2680 = vmatprep.subr.bf16.mxu0 0
    %2681 = vmatpush2.bf16.msra.mxu0 0
    %2682 = vmatprep.subr.bf16.mxu0 0
    %2683 = vmatpush2.bf16.msra.mxu0 0
    %2684 = vmatprep.subr.bf16.mxu0 0
    %2685 = vmatpush2.bf16.msra.mxu0 0
    %2686 = vmatprep.mubr.bf16.mxu0 0
    %2687 = vmatmul.mubr.bf16.gmra.mxu0 %v1606
    %v2688 = vpop.f32.mrf.mxu0
    %v2689 = vadd.f32 %v2641, %v2688
    %v2690 = vpop.f32.mrf.mxu0
    %v2691 = vpop.f32.mrf.mxu0
    %v2692 = vadd.f32 %v2641, %v2691
    %v2693 = vpop.f32.mrf.mxu0
    %2694 = vdwg.mxu0
    %v2695 = vmax.f32 %v2689, 0.0
    %v2696 = vmax.f32 %v2692, 0.0
    %v2697 = vpack.c.bf16 %v2635, %v2632
    %v2698 = vpack.c.bf16 %v2696, %v2695
    %v2703 = vunpack.c.l.b16 %v1513
    %v2704 = vunpack.c.l.b16 %v1514
    %v2705 = vunpack.c.l.b16 %v1515
    %v2706 = vunpack.c.l.b16 %v1516
    %v2707 = vpack.c.b16 %v2704, %v2703
    %v2708 = vpack.c.b16 %v2706, %v2705
    %v2712 = vsel %vm1013, %v2698, 0
    %2714 = vmatprep.subr.bf16.mxu0 0
    %2715 = vmatpush1.bf16.msra.mxu0 0
    %2716 = vmatprep.subr.bf16.mxu0 0
    %2717 = vmatpush1.bf16.msra.mxu0 0
    %2718 = vmatprep.subr.bf16.mxu0 0
    %2719 = vmatpush1.bf16.msra.mxu0 0
    %2720 = vmatprep.subr.bf16.mxu0 0
    %2721 = vmatpush1.bf16.msra.mxu0 0
    %2722 = vmatprep.subr.bf16.mxu0 0
    %2723 = vmatpush1.bf16.msra.mxu0 0
    %2724 = vmatprep.subr.bf16.mxu0 0
    %2725 = vmatpush1.bf16.msra.mxu0 0
    %2726 = vmatprep.subr.bf16.mxu0 0
    %2727 = vmatpush1.bf16.msra.mxu0 %v2708
    %2728 = vmatprep.subr.bf16.mxu0 0
    %2729 = vmatpush1.bf16.msra.mxu0 %v2707
    %2730 = vmatprep.subr.bf16.mxu0 0
    %2731 = vmatpush2.bf16.msra.mxu0 0
    %2732 = vmatprep.subr.bf16.mxu0 0
    %2733 = vmatpush2.bf16.msra.mxu0 0
    %2734 = vmatprep.subr.bf16.mxu0 0
    %2735 = vmatpush2.bf16.msra.mxu0 0
    %2736 = vmatprep.subr.bf16.mxu0 0
    %2737 = vmatpush2.bf16.msra.mxu0 0
    %2738 = vmatprep.subr.bf16.mxu0 0
    %2739 = vmatpush2.bf16.msra.mxu0 0
    %2740 = vmatprep.subr.bf16.mxu0 0
    %2741 = vmatpush2.bf16.msra.mxu0 0
    %2742 = vmatprep.subr.bf16.mxu0 0
    %2743 = vmatpush2.bf16.msra.mxu0 0
    %2744 = vmatprep.subr.bf16.mxu0 0
    %2745 = vmatpush2.bf16.msra.mxu0 0
    %2746 = vmatprep.mubr.bf16.mxu0 0
    %2747 = vmatmul.mubr.bf16.gmra.mxu0 %v2712
    %v2748 = vpop.f32.mrf.mxu0
    %v2749 = vadd.f32 0.0, %v2748
    %v2750 = vpop.f32.mrf.mxu0
    %v2751 = vpop.f32.mrf.mxu0
    %v2752 = vadd.f32 0.0, %v2751
    %v2753 = vpop.f32.mrf.mxu0
    %2754 = vdwg.mxu0
    %v2759 = vunpack.c.l.b16 %v1509
    %v2760 = vunpack.c.l.b16 %v1510
    %v2761 = vunpack.c.l.b16 %v1511
    %v2762 = vunpack.c.l.b16 %v1512
    %v2763 = vpack.c.b16 %v2760, %v2759
    %v2764 = vpack.c.b16 %v2762, %v2761
    %v2768 = vsel %vm1013, %v2697, 0
    %2770 = vmatprep.subr.bf16.mxu0 0
    %2771 = vmatpush1.bf16.msra.mxu0 0
    %2772 = vmatprep.subr.bf16.mxu0 0
    %2773 = vmatpush1.bf16.msra.mxu0 0
    %2774 = vmatprep.subr.bf16.mxu0 0
    %2775 = vmatpush1.bf16.msra.mxu0 0
    %2776 = vmatprep.subr.bf16.mxu0 0
    %2777 = vmatpush1.bf16.msra.mxu0 0
    %2778 = vmatprep.subr.bf16.mxu0 0
    %2779 = vmatpush1.bf16.msra.mxu0 0
    %2780 = vmatprep.subr.bf16.mxu0 0
    %2781 = vmatpush1.bf16.msra.mxu0 0
    %2782 = vmatprep.subr.bf16.mxu0 0
    %2783 = vmatpush1.bf16.msra.mxu0 %v2764
    %2784 = vmatprep.subr.bf16.mxu0 0
    %2785 = vmatpush1.bf16.msra.mxu0 %v2763
    %2786 = vmatprep.subr.bf16.mxu0 0
    %2787 = vmatpush2.bf16.msra.mxu0 0
    %2788 = vmatprep.subr.bf16.mxu0 0
    %2789 = vmatpush2.bf16.msra.mxu0 0
    %2790 = vmatprep.subr.bf16.mxu0 0
    %2791 = vmatpush2.bf16.msra.mxu0 0
    %2792 = vmatprep.subr.bf16.mxu0 0
    %2793 = vmatpush2.bf16.msra.mxu0 0
    %2794 = vmatprep.subr.bf16.mxu0 0
    %2795 = vmatpush2.bf16.msra.mxu0 0
    %2796 = vmatprep.subr.bf16.mxu0 0
    %2797 = vmatpush2.bf16.msra.mxu0 0
    %2798 = vmatprep.subr.bf16.mxu0 0
    %2799 = vmatpush2.bf16.msra.mxu0 0
    %2800 = vmatprep.subr.bf16.mxu0 0
    %2801 = vmatpush2.bf16.msra.mxu0 0
    %2802 = vmatprep.mubr.bf16.mxu0 0
    %2803 = vmatmul.mubr.bf16.gmra.mxu0 %v2768
    %v2804 = vpop.f32.mrf.mxu0
    %v2805 = vadd.f32 %v2749, %v2804
    %v2806 = vpop.f32.mrf.mxu0
    %v2807 = vpop.f32.mrf.mxu0
    %v2808 = vadd.f32 %v2752, %v2807
    %v2809 = vpop.f32.mrf.mxu0
    %2810 = vdwg.mxu0
    %v2811 = vlaneseq
    %v2812 = vshrl.u32 %v2811, 7
    %v2813 = vsub.s32 0, %v2812
    %v2814 = vrot.slane %v1524, %v2813
    %v2815 = vadd.f32 %v2805, %v2814
    %v2816 = vadd.f32 %v2808, %v2814
    %v2817 = vmax.f32 %v2815, 0.0
    %v2818 = vmax.f32 %v2816, 0.0
    %2820 = vrot.lane.b32.xlu0 %v2494, 96
    %v2821 = vpop.permute.xlu0 %2820
    %2823 = vst.msk [vmem:[#allocation2] sm:$0xff] %vm1013, %v2821
    %2824 = vst.msk [vmem:[#allocation4] sm:$0xff] %vm1013, %v2817
    %2825 = vst.msk [vmem:[#allocation4 + $0x8] sm:$0xff] %vm1013, %v2818
    // Predicated region
    $region106: #{tpu_custom_call.1} parent=1 // pred_check
      _
    $region107: #{tpu_custom_call.1} parent=1 // pred_check_branch
      %2827 = sbr.rel (0) target = $region109
    $region108: #{tpu_custom_call.1} parent=1 // pred_region
      %s2829 = ssub.s32 128, 128
      %2830 = vsyncadd [#allocation3], %s2829
      %s2832 = sshll.u32 [#allocation2], 4
      %s2833 = int_to_ptr.vmem [resolvable:$true] %s2832
      %2835 = dma.vmem_to_hbm [thread:$0]  %s2833, 128, %s26, [#allocation3]
    $region109: #{tpu_custom_call.1} parent=1 // pred_fallthru
      _
    // Predicated region
    $region110: #{tpu_custom_call.1} parent=1 // pred_check
      _
    $region111: #{tpu_custom_call.1} parent=1 // pred_check_branch
      %2837 = sbr.rel (0) target = $region113
    $region112: #{tpu_custom_call.1} parent=1 // pred_region
      %s2839 = ssub.s32 256, 256
      %2840 = vsyncadd [#allocation5], %s2839
      %s2841 = sshll.u32 [#allocation4], 4
      %s2842 = int_to_ptr.vmem [resolvable:$true] %s2841
      %2847 = dma.vmem_to_hbm [thread:$0]  %s2842, 256, %s27, [#allocation5], 128, 128, 8
    $region113: #{tpu_custom_call.1} parent=1 // pred_fallthru
      _
    // Predicated region
    $region114: #{tpu_custom_call.1} parent=1 // pred_check
      _
    $region115: #{tpu_custom_call.1} parent=1 // pred_check_branch
      %2849 = sbr.rel (0) target = $region117
    $region116: #{tpu_custom_call.1} parent=1 // pred_region
      %2850 = dma.done [#allocation3], 128
    $region117: #{tpu_custom_call.1} parent=1 // pred_fallthru
      _
    // Predicated region
    $region118: #{tpu_custom_call.1} parent=1 // pred_check
      _
    $region119: #{tpu_custom_call.1} parent=1 // pred_check_branch
      %2852 = sbr.rel (0) target = $region121
    $region120: #{tpu_custom_call.1} parent=1 // pred_region
      %2853 = dma.done [#allocation5], 256
    $region121: #{tpu_custom_call.1} parent=1 // pred_fallthru
      _
    %2854 = vsyncpa [#allocation3], 1
    %2855 = vsyncpa [#allocation5], 1

</llo_original>
